<compile_context>
chip_gen: v7x
topology: tpu7x:2x2x1
jax: 0.10.0
libtpu: 0.0.40
codegen_flags: <defaults>
</compile_context>

<pallas_src>
import functools

import jax
import jax.numpy as jnp
from jax.experimental import pallas as pl
from jax.experimental.pallas import tpu as pltpu


def _mlp_kernel(x_ref, wg_ref, wu_ref, wd_ref, o_ref, acc_ref):
    # x_ref : (tile_n, H)       row tile of tokens (resident across j)
    # wg_ref: (H, tile_i)       gate weight slice
    # wu_ref: (H, tile_i)       up weight slice
    # wd_ref: (tile_i, H)       down weight slice
    # o_ref : (tile_n, H)       output row tile (written on last j)
    # acc_ref: (tile_n, H) f32  VMEM accumulator
    j = pl.program_id(1)

    @pl.when(j == 0)
    def _():
        acc_ref[...] = jnp.zeros_like(acc_ref)

    x = x_ref[...]
    gate = jnp.dot(x, wg_ref[...], preferred_element_type=jnp.float32)
    up = jnp.dot(x, wu_ref[...], preferred_element_type=jnp.float32)
    # SiluAndMul: silu(gate) * up, in fp32 (exp/recip go to the EUP slot).
    act = (gate * (1.0 / (1.0 + jnp.exp(-gate)))) * up
    acc_ref[...] += jnp.dot(act.astype(wd_ref.dtype), wd_ref[...],
                            preferred_element_type=jnp.float32)

    @pl.when(j == pl.num_programs(1) - 1)
    def _():
        o_ref[...] = acc_ref[...].astype(o_ref.dtype)


@functools.partial(jax.jit, static_argnames=("tile_n", "tile_i"))
def qwen2_5_vl_mlp(x, w_gate, w_up, w_down, *, tile_n=256, tile_i=512):
    """x: (N, H).  w_gate/w_up: (H, I).  w_down: (I, H).  Returns (N, H)."""
    N, H = x.shape
    Hg, I = w_gate.shape
    assert Hg == H and w_up.shape == (H, I) and w_down.shape == (I, H)
    assert N % tile_n == 0 and I % tile_i == 0

    grid = (N // tile_n, I // tile_i)
    return pl.pallas_call(
        _mlp_kernel,
        out_shape=jax.ShapeDtypeStruct((N, H), w_down.dtype),
        grid_spec=pltpu.PrefetchScalarGridSpec(
            num_scalar_prefetch=0,
            grid=grid,
            in_specs=[
                # Row tile of tokens, resident across the j (reduction) axis.
                pl.BlockSpec((tile_n, H), lambda i, j: (i, 0)),
                # Weight slices stream along j (double-buffered by Pallas).
                pl.BlockSpec((H, tile_i), lambda i, j: (0, j)),
                pl.BlockSpec((H, tile_i), lambda i, j: (0, j)),
                pl.BlockSpec((tile_i, H), lambda i, j: (j, 0)),
            ],
            out_specs=pl.BlockSpec((tile_n, H), lambda i, j: (i, 0)),
            scratch_shapes=[pltpu.VMEM((tile_n, H), jnp.float32)],
        ),
        compiler_params=pltpu.CompilerParams(
            dimension_semantics=("parallel", "arbitrary"),
        ),
    )(x, w_gate, w_up, w_down)


def _pick_row_tile(n, preferred=256):
    """Largest row tile that divides n (avoids padding the whole activation)."""
    for t in (preferred, 128, 64, 32, 16, 8):
        if t <= n and n % t == 0:
            return t, 0
    # Fallback for ragged token counts: pad only the tail to a multiple of 8.
    return 8, (-n) % 8


def _pick_inner_tile(i, preferred=512):
    """Largest intermediate tile (multiple of 128) dividing I, else full I."""
    for t in (preferred, 256, 128):
        if t <= i and i % t == 0:
            return t
    return i  # full-extent block is always legal


class Qwen25VLMLPPallas:
    """JAX/Pallas re-implementation of Qwen2_5_VLMLP (SwiGLU MLP, bias=False)."""

    def __init__(self, hidden_size, intermediate_size, dtype=jnp.float32, key=None):
        self.hidden_size = hidden_size
        self.intermediate_size = intermediate_size
        self.dtype = dtype
        if key is None:
            key = jax.random.PRNGKey(0)
        kg, ku, kd = jax.random.split(key, 3)
        bound_in = 1.0 / (hidden_size ** 0.5)
        bound_mid = 1.0 / (intermediate_size ** 0.5)
        # Weights stored pre-transposed, lane-dense (in_features, out_features),
        # so the forward pass never reshapes/transposes them.
        self.w_gate = jax.random.uniform(
            kg, (hidden_size, intermediate_size), jnp.float32,
            minval=-bound_in, maxval=bound_in).astype(dtype)
        self.w_up = jax.random.uniform(
            ku, (hidden_size, intermediate_size), jnp.float32,
            minval=-bound_in, maxval=bound_in).astype(dtype)
        self.w_down = jax.random.uniform(
            kd, (intermediate_size, hidden_size), jnp.float32,
            minval=-bound_mid, maxval=bound_mid).astype(dtype)
        # TODO(synk): tensor-parallel sharding and quantization_config from the
        # original build_*_linear helpers are not modeled (dense single-device).

    def __call__(self, x):
        H = self.hidden_size
        lead = x.shape[:-1]
        # Pre-cast to the weight dtype (mirrors module dtype) BEFORE the kernel
        # so the kernel DMAs the narrow dtype from HBM.
        x2 = x.reshape(-1, H).astype(self.w_gate.dtype)
        N = x2.shape[0]
        tile_n, pad = _pick_row_tile(N)
        tile_i = _pick_inner_tile(self.intermediate_size)
        if pad:
            x2 = jnp.pad(x2, ((0, pad), (0, 0)))
        out = qwen2_5_vl_mlp(x2, self.w_gate, self.w_up, self.w_down,
                             tile_n=tile_n, tile_i=tile_i)
        if pad:
            out = out[:N]
        return out.reshape(*lead, H)


if __name__ == "__main__":
    key = jax.random.PRNGKey(0)
    k_w, k_x = jax.random.split(key)

    # Small, module-consistent shapes (all lane/sublane friendly).
    hidden_size = 256
    intermediate_size = 512
    batch, seq = 2, 256          # 512 tokens -> tile_n=256, grid=(2, 1..2)

    module = Qwen25VLMLPPallas(
        hidden_size=hidden_size,
        intermediate_size=intermediate_size,
        dtype=jnp.float32,
        key=k_w,
    )

    x = jax.random.normal(k_x, (batch, seq, hidden_size), dtype=jnp.float32)

    out = module(x)
    out = jax.block_until_ready(out)
    assert out.shape == (batch, seq, hidden_size), out.shape

    # Plain-JAX reference (identical SwiGLU semantics).
    x2 = x.reshape(-1, hidden_size)
    gate = x2 @ module.w_gate
    up = x2 @ module.w_up
    act = gate * jax.nn.sigmoid(gate) * up
    ref = (act @ module.w_down).reshape(batch, seq, hidden_size)

    assert jnp.allclose(out, ref, atol=1e-2, rtol=1e-2), float(
        jnp.max(jnp.abs(out - ref)))

    print("KERNEL_OK")
</pallas_src>

<mosaic_0001>
module attributes {stable_mosaic.version = 11 : i64} {
  func.func @_mlp_kernel(%arg0: i32, %arg1: i32, %arg2: memref<256x256xf32, #tpu.memory_space<vmem>>, %arg3: memref<256x512xf32, #tpu.memory_space<vmem>>, %arg4: memref<256x512xf32, #tpu.memory_space<vmem>>, %arg5: memref<512x256xf32, #tpu.memory_space<vmem>>, %arg6: memref<256x256xf32, #tpu.memory_space<vmem>>, %arg7: memref<256x256xf32, #tpu.memory_space<vmem>>) attributes {dimension_semantics = [#tpu.dimension_semantics<parallel>, #tpu.dimension_semantics<arbitrary>], iteration_bounds = array<i64: 2, 1>, scalar_prefetch = 0 : i64, scratch_operands = 1 : i64, tpu.core_type = #tpu.core_type<tc>, window_params = [{transform_indices = @transform_0, window_bounds = array<i64: 256, 256>}, {transform_indices = @transform_1, window_bounds = array<i64: 256, 512>}, {transform_indices = @transform_2, window_bounds = array<i64: 256, 512>}, {transform_indices = @transform_3, window_bounds = array<i64: 512, 256>}, {transform_indices = @transform_4, window_bounds = array<i64: 256, 256>}]} {
    %c0_i32 = arith.constant 0 : i32
    %0 = arith.cmpi eq, %arg1, %c0_i32 : i32
    %1 = arith.extui %0 : i1 to i32
    %c0_i32_0 = arith.constant 0 : i32
    %2 = arith.cmpi ne, %1, %c0_i32_0 : i32
    scf.if %2 {
      %cst_19 = arith.constant 0.000000e+00 : f32
      %25 = vector.broadcast %cst_19 : f32 to vector<256x256xf32>
      %c0_20 = arith.constant 0 : index
      %c0_21 = arith.constant 0 : index
      %26 = vector.load %arg7[%c0_20, %c0_21] : memref<256x256xf32, #tpu.memory_space<vmem>>, vector<256x256xf32>
      tpu.vector_store %arg7[%c0_20, %c0_21], %25 {strides = array<i32>} : memref<256x256xf32, #tpu.memory_space<vmem>>, vector<256x256xf32>,
    } else {
    }
    %c0 = arith.constant 0 : index
    %c0_1 = arith.constant 0 : index
    %3 = vector.load %arg2[%c0, %c0_1] : memref<256x256xf32, #tpu.memory_space<vmem>>, vector<256x256xf32>
    %c0_2 = arith.constant 0 : index
    %c0_3 = arith.constant 0 : index
    %4 = vector.load %arg3[%c0_2, %c0_3] : memref<256x512xf32, #tpu.memory_space<vmem>>, vector<256x512xf32>
    %cst = arith.constant dense<0.000000e+00> : vector<256x512xf32>
    %5 = tpu.matmul %3, %4, %cst {dimension_numbers = #tpu.dot_dimension_numbers<[1], [0], [0], [1], [0, 0, 1, 1], [], []>} : vector<256x256xf32>, vector<256x512xf32>, vector<256x512xf32> -> vector<256x512xf32>
    %c0_4 = arith.constant 0 : index
    %c0_5 = arith.constant 0 : index
    %6 = vector.load %arg4[%c0_4, %c0_5] : memref<256x512xf32, #tpu.memory_space<vmem>>, vector<256x512xf32>
    %cst_6 = arith.constant dense<0.000000e+00> : vector<256x512xf32>
    %7 = tpu.matmul %3, %6, %cst_6 {dimension_numbers = #tpu.dot_dimension_numbers<[1], [0], [0], [1], [0, 0, 1, 1], [], []>} : vector<256x256xf32>, vector<256x512xf32>, vector<256x512xf32> -> vector<256x512xf32>
    %cst_7 = arith.constant 0.000000e+00 : f32
    %8 = vector.broadcast %cst_7 : f32 to vector<256x512xf32>
    %9 = arith.subf %8, %5 : vector<256x512xf32>
    %10 = math.exp %9 : vector<256x512xf32>
    %cst_8 = arith.constant 1.000000e+00 : f32
    %11 = vector.broadcast %cst_8 : f32 to vector<256x512xf32>
    %12 = arith.addf %11, %10 : vector<256x512xf32>
    %cst_9 = arith.constant 1.000000e+00 : f32
    %13 = vector.broadcast %cst_9 : f32 to vector<256x512xf32>
    %14 = arith.divf %13, %12 : vector<256x512xf32>
    %15 = arith.mulf %5, %14 : vector<256x512xf32>
    %16 = arith.mulf %15, %7 : vector<256x512xf32>
    %c0_10 = arith.constant 0 : index
    %c0_11 = arith.constant 0 : index
    %17 = vector.load %arg7[%c0_10, %c0_11] : memref<256x256xf32, #tpu.memory_space<vmem>>, vector<256x256xf32>
    %c0_12 = arith.constant 0 : index
    %c0_13 = arith.constant 0 : index
    %18 = vector.load %arg5[%c0_12, %c0_13] : memref<512x256xf32, #tpu.memory_space<vmem>>, vector<512x256xf32>
    %cst_14 = arith.constant dense<0.000000e+00> : vector<256x256xf32>
    %19 = tpu.matmul %16, %18, %cst_14 {dimension_numbers = #tpu.dot_dimension_numbers<[1], [0], [0], [1], [0, 0, 1, 1], [], []>} : vector<256x512xf32>, vector<512x256xf32>, vector<256x256xf32> -> vector<256x256xf32>
    %20 = arith.addf %17, %19 : vector<256x256xf32>
    %c0_15 = arith.constant 0 : index
    %c0_16 = arith.constant 0 : index
    %21 = vector.load %arg7[%c0_15, %c0_16] : memref<256x256xf32, #tpu.memory_space<vmem>>, vector<256x256xf32>
    tpu.vector_store %arg7[%c0_15, %c0_16], %20 {strides = array<i32>} : memref<256x256xf32, #tpu.memory_space<vmem>>, vector<256x256xf32>,
    %c0_i32_17 = arith.constant 0 : i32
    %22 = arith.cmpi eq, %arg1, %c0_i32_17 : i32
    %23 = arith.extui %22 : i1 to i32
    %c0_i32_18 = arith.constant 0 : i32
    %24 = arith.cmpi ne, %23, %c0_i32_18 : i32
    scf.if %24 {
      %c0_19 = arith.constant 0 : index
      %c0_20 = arith.constant 0 : index
      %25 = vector.load %arg7[%c0_19, %c0_20] : memref<256x256xf32, #tpu.memory_space<vmem>>, vector<256x256xf32>
      %c0_21 = arith.constant 0 : index
      %c0_22 = arith.constant 0 : index
      %26 = vector.load %arg6[%c0_21, %c0_22] : memref<256x256xf32, #tpu.memory_space<vmem>>, vector<256x256xf32>
      tpu.vector_store %arg6[%c0_21, %c0_22], %25 {strides = array<i32>} : memref<256x256xf32, #tpu.memory_space<vmem>>, vector<256x256xf32>,
    } else {
    }
    return
  }
  func.func @transform_0(%arg0: i32, %arg1: i32) -> (i32, i32) {
    %c0_i32 = arith.constant 0 : i32
    %c0_i32_0 = arith.constant 0 : i32
    return %arg0, %c0_i32 : i32, i32
  }
  func.func @transform_1(%arg0: i32, %arg1: i32) -> (i32, i32) {
    %c0_i32 = arith.constant 0 : i32
    %c0_i32_0 = arith.constant 0 : i32
    return %c0_i32, %arg1 : i32, i32
  }
  func.func @transform_2(%arg0: i32, %arg1: i32) -> (i32, i32) {
    %c0_i32 = arith.constant 0 : i32
    %c0_i32_0 = arith.constant 0 : i32
    return %c0_i32, %arg1 : i32, i32
  }
  func.func @transform_3(%arg0: i32, %arg1: i32) -> (i32, i32) {
    %c0_i32 = arith.constant 0 : i32
    %c0_i32_0 = arith.constant 0 : i32
    return %arg1, %c0_i32 : i32, i32
  }
  func.func @transform_4(%arg0: i32, %arg1: i32) -> (i32, i32) {
    %c0_i32 = arith.constant 0 : i32
    %c0_i32_0 = arith.constant 0 : i32
    return %arg0, %c0_i32 : i32, i32
  }
}

</mosaic_0001>

<llo_original>
// kernel: qwen2_5_vl_mlp.1
$region0: #{qwen2_5_vl_mlp.1}
  #allocation0 [shape = 'u32[]', space=smem, size = 0x4, offset = 0x4, fixed_abs, tag = 'smem constant byte address 0x4 - core index']
  #allocation1 [shape = 'u32[144,128]{1,0:T(1,128)}', space=vmem, size = 0x12000, scoped, tag = 'internal scratch']
  #allocation2 [shape = 'f32[256,256]{1,0:T(8,128)}', space=vmem, size = 0x40000, scoped, tag = 'scratch operand']
  %s0 = inlined_call_operand.hbm [shape: f32[512,256], index: 0, kind: input, shape index: {}]
  %s1 = inlined_call_operand.hbm [shape: f32[256,512], index: 1, kind: input, shape index: {}]
  %s2 = inlined_call_operand.hbm [shape: f32[256,512], index: 2, kind: input, shape index: {}]
  %s3 = inlined_call_operand.hbm [shape: f32[512,256], index: 3, kind: input, shape index: {}]
  %s4 = inlined_call_operand.hbm [shape: f32[512,256], index: 4, kind: output, shape index: {}]
  %s5 = sld [smem:[#allocation0]]
  $region73: #{qwen2_5_vl_mlp.1} parent=0
    _
  %s7 = ssub.s32 1, %s5
  %s8 = scalar_select 0, %s7, %s5
  $region1: #{qwen2_5_vl_mlp.1} parent=0
    #allocation3 [shape = 'u8[524288]{0}', space=vmem, size = 0x80000, scoped, tag = 'input window, operand 0']
    #allocation4 [shape = 's32[2]{0}', space=sflag, size = 0x8, scoped, tag = 'scoped memory for qwen2_5_vl_mlp.1']
    #allocation5 [shape = 's32[2]{0}', space=sflag, size = 0x8, scoped, tag = 'scoped memory for qwen2_5_vl_mlp.1']
    #allocation6 [shape = 'u8[524288]{0}', space=vmem, size = 0x80000, scoped, tag = 'input window, operand 1, single buffered']
    #allocation7 [shape = 's32[1]{0}', space=sflag, size = 0x4, scoped, tag = 'scoped memory for qwen2_5_vl_mlp.1']
    #allocation8 [shape = 'u8[524288]{0}', space=vmem, size = 0x80000, scoped, tag = 'input window, operand 2, single buffered']
    #allocation9 [shape = 'u8[524288]{0}', space=vmem, size = 0x80000, scoped, tag = 'input window, operand 3, single buffered']
    #allocation10 [shape = 's32[1]{0}', space=sflag, size = 0x4, scoped, tag = 'scoped memory for qwen2_5_vl_mlp.1']
    #allocation11 [shape = 'u8[524288]{0}', space=vmem, size = 0x80000, scoped, tag = 'output window, operand 0']
    %9 = vsyncpa [#allocation4], 0
    %s10 = scalar_lea.sflag [#allocation4], 1
    %11 = vsyncpa %s10, 0
    %12 = vsyncpa [#allocation7], 0
    %13 = vsyncpa [#allocation10], 0
    %14 = vsyncpa [#allocation5], 0
    %s15 = scalar_lea.sflag [#allocation5], 1
    %16 = vsyncpa %s15, 0
    loop: start=0, step=1, limit=4
    $region2: #{qwen2_5_vl_mlp.1} parent=1 // loop_pre_header
      _
    $region3: #{qwen2_5_vl_mlp.1} parent=1 // loop_header
      %s18 = sphi 0, %s22
      %p19 = scmp.ge.s32.totalorder %s18, 4
      %s25 = sphi 0, %s37
      %s26 = sphi 0, %s33
      %s27 = sphi 0, %s25
      %s28 = sphi 0, %s26
      %s29 = sphi 0, %s27
      %s30 = sphi 0, %s28
      %s40 = sphi 0, %s42
      %s43 = sphi 0, %s40
      %s44 = sphi 0, %s43
      %s60 = sphi 0, %s44
      %s66 = sphi 0, %s68
      %s69 = sphi 0, %s66
      %s70 = sphi 0, %s69
      %s86 = sphi 0, %s70
      %s92 = sphi 0, %s94
      %s95 = sphi 0, %s92
      %s96 = sphi 0, %s95
      %s112 = sphi 0, %s96
      %s118 = sphi 0, %s120
      %s121 = sphi 0, %s118
      %s122 = sphi 0, %s121
      %s138 = sphi 0, %s122
      %s144 = sphi 0, %s146
      %s147 = sphi 0, %s144
      %s148 = sphi 0, %s147
      %s164 = sphi 0, %s148
    $region4: #{qwen2_5_vl_mlp.1} parent=1 // loop_header_branch
      %21 = sbr.rel (%p19) target = $region8
    $region5: #{qwen2_5_vl_mlp.1} parent=1 // loop_body
      %s23 = ssub.s32 %s18, 1
      %s24 = ssub.s32 %s18, 2
      %s31 = sadd.s32 1, %s26
      %p32 = scmp.ge.s32.totalorder %s31, 1
      %s33 = scalar_select %p32, 0, %s31
      %s34 = sadd.s32 1, %s25
      %s35 = scalar_select %p32, %s34, %s25
      %p36 = scmp.ge.s32.totalorder %s35, 2
      %s37 = scalar_select %p36, 0, %s35
      %s38 = ssub.s32 %s25, %s37
      %p39 = scmp.eq.s32.totalorder %s38, 0
      %s41 = sadd.s32 %s40, 1
      %s42 = scalar_select %p39, %s40, %s41
      %p45 = pneg %p39
      %p46 = scmp.eq.s32.totalorder %s18, 1
      %p47 = por %p45, %p46
      %p48 = scmp.ne.s32.totalorder %s40, %s43
      %p49 = scmp.eq.s32.totalorder %s18, 0
      %p50 = por %p48, %p49
      %p51 = scmp.ne.s32.totalorder %s40, %s43
      %p52 = scmp.eq.s32.totalorder %s23, 1
      %p53 = por %p51, %p52
      %p54 = scmp.ne.s32.totalorder %s43, %s44
      %p55 = scmp.eq.s32.totalorder %s23, 0
      %p56 = por %p54, %p55
      %p57 = scmp.ne.s32.totalorder %s43, %s44
      %p58 = scmp.eq.s32.totalorder %s24, 1
      %p59 = por %p57, %p58
      %p61 = scmp.ne.s32.totalorder %s44, %s60
      %p62 = scmp.eq.s32.totalorder %s24, 0
      %p63 = por %p61, %p62
      %s64 = ssub.s32 %s26, %s33
      %p65 = scmp.eq.s32.totalorder %s64, 0
      %s67 = sadd.s32 %s66, 1
      %s68 = scalar_select %p65, %s66, %s67
      %p71 = pneg %p65
      %p72 = scmp.eq.s32.totalorder %s18, 1
      %p73 = por %p71, %p72
      %p74 = scmp.ne.s32.totalorder %s66, %s69
      %p75 = scmp.eq.s32.totalorder %s18, 0
      %p76 = por %p74, %p75
      %p77 = scmp.ne.s32.totalorder %s66, %s69
      %p78 = scmp.eq.s32.totalorder %s23, 1
      %p79 = por %p77, %p78
      %p80 = scmp.ne.s32.totalorder %s69, %s70
      %p81 = scmp.eq.s32.totalorder %s23, 0
      %p82 = por %p80, %p81
      %p83 = scmp.ne.s32.totalorder %s69, %s70
      %p84 = scmp.eq.s32.totalorder %s24, 1
      %p85 = por %p83, %p84
      %p87 = scmp.ne.s32.totalorder %s70, %s86
      %p88 = scmp.eq.s32.totalorder %s24, 0
      %p89 = por %p87, %p88
      %s90 = ssub.s32 %s26, %s33
      %p91 = scmp.eq.s32.totalorder %s90, 0
      %s93 = sadd.s32 %s92, 1
      %s94 = scalar_select %p91, %s92, %s93
      %p97 = pneg %p91
      %p98 = scmp.eq.s32.totalorder %s18, 1
      %p99 = por %p97, %p98
      %p100 = scmp.ne.s32.totalorder %s92, %s95
      %p101 = scmp.eq.s32.totalorder %s18, 0
      %p102 = por %p100, %p101
      %p103 = scmp.ne.s32.totalorder %s92, %s95
      %p104 = scmp.eq.s32.totalorder %s23, 1
      %p105 = por %p103, %p104
      %p106 = scmp.ne.s32.totalorder %s95, %s96
      %p107 = scmp.eq.s32.totalorder %s23, 0
      %p108 = por %p106, %p107
      %p109 = scmp.ne.s32.totalorder %s95, %s96
      %p110 = scmp.eq.s32.totalorder %s24, 1
      %p111 = por %p109, %p110
      %p113 = scmp.ne.s32.totalorder %s96, %s112
      %p114 = scmp.eq.s32.totalorder %s24, 0
      %p115 = por %p113, %p114
      %s116 = ssub.s32 %s26, %s33
      %p117 = scmp.eq.s32.totalorder %s116, 0
      %s119 = sadd.s32 %s118, 1
      %s120 = scalar_select %p117, %s118, %s119
      %p123 = pneg %p117
      %p124 = scmp.eq.s32.totalorder %s18, 1
      %p125 = por %p123, %p124
      %p126 = scmp.ne.s32.totalorder %s118, %s121
      %p127 = scmp.eq.s32.totalorder %s18, 0
      %p128 = por %p126, %p127
      %p129 = scmp.ne.s32.totalorder %s118, %s121
      %p130 = scmp.eq.s32.totalorder %s23, 1
      %p131 = por %p129, %p130
      %p132 = scmp.ne.s32.totalorder %s121, %s122
      %p133 = scmp.eq.s32.totalorder %s23, 0
      %p134 = por %p132, %p133
      %p135 = scmp.ne.s32.totalorder %s121, %s122
      %p136 = scmp.eq.s32.totalorder %s24, 1
      %p137 = por %p135, %p136
      %p139 = scmp.ne.s32.totalorder %s122, %s138
      %p140 = scmp.eq.s32.totalorder %s24, 0
      %p141 = por %p139, %p140
      %s142 = ssub.s32 %s25, %s37
      %p143 = scmp.eq.s32.totalorder %s142, 0
      %s145 = sadd.s32 %s144, 1
      %s146 = scalar_select %p143, %s144, %s145
      %p149 = pneg %p143
      %p150 = scmp.eq.s32.totalorder %s18, 1
      %p151 = por %p149, %p150
      %p152 = scmp.ne.s32.totalorder %s144, %s147
      %p153 = scmp.eq.s32.totalorder %s18, 0
      %p154 = por %p152, %p153
      %p155 = scmp.ne.s32.totalorder %s144, %s147
      %p156 = scmp.eq.s32.totalorder %s23, 1
      %p157 = por %p155, %p156
      %p158 = scmp.ne.s32.totalorder %s147, %s148
      %p159 = scmp.eq.s32.totalorder %s23, 0
      %p160 = por %p158, %p159
      %p161 = scmp.ne.s32.totalorder %s147, %s148
      %p162 = scmp.eq.s32.totalorder %s24, 1
      %p163 = por %p161, %p162
      %p165 = scmp.ne.s32.totalorder %s148, %s164
      %p166 = scmp.eq.s32.totalorder %s24, 0
      %p167 = por %p165, %p166
      %p168 = scmp.le.s32.totalorder 1, %s18
      %p169 = scmp.lt.s32.totalorder %s18, 3
      %p170 = pnand %p168, %p169
      %p171 = pneg %p170
      // Predicated region
      $region9: #{qwen2_5_vl_mlp.1} parent=5 // pred_check
        _
      $region10: #{qwen2_5_vl_mlp.1} parent=5 // pred_check_branch
        %173 = sbr.rel (%p170) target = $region12
      $region11: #{qwen2_5_vl_mlp.1} parent=5 // pred_region
        %s174 = ssub.s32 %s18, 1
        // Predicated region
        $region13: #{qwen2_5_vl_mlp.1} parent=11 // pred_check
          %p175 = pneg %p82
        $region14: #{qwen2_5_vl_mlp.1} parent=11 // pred_check_branch
          %177 = sbr.rel (%p175) target = $region16
        $region15: #{qwen2_5_vl_mlp.1} parent=11 // pred_region
          %s178 = smul.u32 4, %s28
          %s180 = ssub.s32 16384, 16384
          %181 = vsyncadd [#allocation7], %s180
          %s182 = smul.addr %s178, 128
          %s183 = scalar_lea.hbm %s1, %s182
          %s184 = sshll.u32 [#allocation6], 4
          %s185 = int_to_ptr.vmem [resolvable:$true] %s184
          %190 = dma.hbm_to_vmem [thread:$0]  %s183, 16384, %s185, [#allocation7], 512, 512, 32
        $region16: #{qwen2_5_vl_mlp.1} parent=11 // pred_fallthru
          _
        // Predicated region
        $region17: #{qwen2_5_vl_mlp.1} parent=11 // pred_check
          %p191 = pneg %p108
        $region18: #{qwen2_5_vl_mlp.1} parent=11 // pred_check_branch
          %193 = sbr.rel (%p191) target = $region20
        $region19: #{qwen2_5_vl_mlp.1} parent=11 // pred_region
          %s194 = smul.u32 4, %s28
          %s196 = ssub.s32 16384, 16384
          %197 = vsyncadd [#allocation7], %s196
          %s198 = smul.addr %s194, 128
          %s199 = scalar_lea.hbm %s2, %s198
          %s200 = sshll.u32 [#allocation8], 4
          %s201 = int_to_ptr.vmem [resolvable:$true] %s200
          %206 = dma.hbm_to_vmem [thread:$0]  %s199, 16384, %s201, [#allocation7], 512, 512, 32
        $region20: #{qwen2_5_vl_mlp.1} parent=11 // pred_fallthru
          _
        // Predicated region
        $region21: #{qwen2_5_vl_mlp.1} parent=11 // pred_check
          %p207 = pneg %p134
        $region22: #{qwen2_5_vl_mlp.1} parent=11 // pred_check_branch
          %209 = sbr.rel (%p207) target = $region24
        $region23: #{qwen2_5_vl_mlp.1} parent=11 // pred_region
          %s210 = smul.u32 64, %s28
          %s212 = ssub.s32 16384, 16384
          %213 = vsyncadd [#allocation10], %s212
          %s214 = smul.addr %s210, 2
          %s215 = smul.addr %s214, 128
          %s216 = scalar_lea.hbm %s3, %s215
          %s217 = sshll.u32 [#allocation9], 4
          %s218 = int_to_ptr.vmem [resolvable:$true] %s217
          %223 = dma.hbm_to_vmem [thread:$0]  %s216, 16384, %s218, [#allocation10], 256, 256, 16
        $region24: #{qwen2_5_vl_mlp.1} parent=11 // pred_fallthru
          _
      $region12: #{qwen2_5_vl_mlp.1} parent=5 // pred_fallthru
        _
      %p224 = scmp.lt.s32.totalorder %s18, 2
      // Predicated region
      $region25: #{qwen2_5_vl_mlp.1} parent=5 // pred_check
        %p225 = pneg %p224
      $region26: #{qwen2_5_vl_mlp.1} parent=5 // pred_check_branch
        %227 = sbr.rel (%p225) target = $region28
      $region27: #{qwen2_5_vl_mlp.1} parent=5 // pred_region
        // Predicated region
        $region29: #{qwen2_5_vl_mlp.1} parent=27 // pred_check
          %p228 = pneg %p50
        $region30: #{qwen2_5_vl_mlp.1} parent=27 // pred_check_branch
          %230 = sbr.rel (%p228) target = $region32
        $region31: #{qwen2_5_vl_mlp.1} parent=27 // pred_region
          %s231 = sand.u32 %s40, 1
          %s232 = scalar_lea.sflag [#allocation4], %s231
          %s233 = sand.u32 %s40, 1
          %s234 = smul.addr %s233, 512
          %s235 = scalar_lea.vmem [#allocation3], %s234
          %s236 = smul.u32 32, %s25
          %s238 = ssub.s32 8192, 8192
          %239 = vsyncadd %s232, %s238
          %s240 = smul.addr %s236, 2
          %s241 = smul.addr %s240, 128
          %s242 = scalar_lea.hbm %s0, %s241
          %s243 = sshll.u32 %s235, 4
          %s244 = int_to_ptr.vmem [resolvable:$true] %s243
          %249 = dma.hbm_to_vmem [thread:$0]  %s242, 8192, %s244, %s232, 256, 256, 16
        $region32: #{qwen2_5_vl_mlp.1} parent=27 // pred_fallthru
          _
      $region28: #{qwen2_5_vl_mlp.1} parent=5 // pred_fallthru
        _
      %p250 = scmp.le.s32.totalorder 1, %s18
      %p251 = scmp.lt.s32.totalorder %s18, 3
      %p252 = pnand %p250, %p251
      %p253 = pneg %p252
      // Predicated region
      $region33: #{qwen2_5_vl_mlp.1} parent=5 // pred_check
        _
      $region34: #{qwen2_5_vl_mlp.1} parent=5 // pred_check_branch
        %255 = sbr.rel (%p252) target = $region36
      $region35: #{qwen2_5_vl_mlp.1} parent=5 // pred_region
        %s256 = ssub.s32 %s18, 1
        %s257 = sand.u32 %s43, 1
        %s258 = scalar_lea.sflag [#allocation4], %s257
        %s259 = sand.u32 %s43, 1
        %s260 = smul.addr %s259, 512
        %s261 = scalar_lea.vmem [#allocation3], %s260
        // Predicated region
        $region37: #{qwen2_5_vl_mlp.1} parent=35 // pred_check
          %p262 = pneg %p56
        $region38: #{qwen2_5_vl_mlp.1} parent=35 // pred_check_branch
          %264 = sbr.rel (%p262) target = $region40
        $region39: #{qwen2_5_vl_mlp.1} parent=35 // pred_region
          %265 = dma.done %s258, 8192
        $region40: #{qwen2_5_vl_mlp.1} parent=35 // pred_fallthru
          _
        // Predicated region
        $region41: #{qwen2_5_vl_mlp.1} parent=35 // pred_check
          %p266 = pneg %p82
        $region42: #{qwen2_5_vl_mlp.1} parent=35 // pred_check_branch
          %268 = sbr.rel (%p266) target = $region44
        $region43: #{qwen2_5_vl_mlp.1} parent=35 // pred_region
          %269 = dma.done [#allocation7], 16384
        $region44: #{qwen2_5_vl_mlp.1} parent=35 // pred_fallthru
          _
        // Predicated region
        $region45: #{qwen2_5_vl_mlp.1} parent=35 // pred_check
          %p270 = pneg %p108
        $region46: #{qwen2_5_vl_mlp.1} parent=35 // pred_check_branch
          %272 = sbr.rel (%p270) target = $region48
        $region47: #{qwen2_5_vl_mlp.1} parent=35 // pred_region
          %273 = dma.done [#allocation7], 16384
        $region48: #{qwen2_5_vl_mlp.1} parent=35 // pred_fallthru
          _
        // Predicated region
        $region49: #{qwen2_5_vl_mlp.1} parent=35 // pred_check
          %p274 = pneg %p134
        $region50: #{qwen2_5_vl_mlp.1} parent=35 // pred_check_branch
          %276 = sbr.rel (%p274) target = $region52
        $region51: #{qwen2_5_vl_mlp.1} parent=35 // pred_region
          %277 = dma.done [#allocation10], 16384
        $region52: #{qwen2_5_vl_mlp.1} parent=35 // pred_fallthru
          _
        %s278 = sand.u32 %s43, 1
        %s279 = scalar_lea.sflag [#allocation4], %s278
        %s280 = sand.u32 %s43, 1
        %s281 = smul.addr %s280, 512
        %s282 = scalar_lea.vmem [#allocation3], %s281
        %p283 = pneg %p56
        %p284 = pneg %p53
        %p285 = pneg %p82
        %p286 = pneg %p79
        %p287 = pneg %p108
        %p288 = pneg %p105
        %p289 = pneg %p134
        %p290 = pneg %p131
        %p291 = pneg %p160
        %p292 = pneg %p157
        %s293 = sand.u32 %s147, 1
        %s294 = scalar_lea.sflag [#allocation5], %s293
        %s295 = sand.u32 %s147, 1
        %s296 = smul.addr %s295, 512
        %s297 = scalar_lea.vmem [#allocation11], %s296
        %s298 = smul.u32 32, %s27
        %s299 = smul.u32 4, %s28
        %s300 = smul.u32 4, %s28
        %s301 = smul.u32 64, %s28
        %s302 = smul.u32 32, %s27
        %p303 = scmp.eq.s32.totalorder %s28, 0
        // Predicated region
        $region53: #{qwen2_5_vl_mlp.1} parent=35 // pred_check
          %p304 = pneg %p303
        $region54: #{qwen2_5_vl_mlp.1} parent=35 // pred_check_branch
          %306 = sbr.rel (%p304) target = $region56
        $region55: #{qwen2_5_vl_mlp.1} parent=35 // pred_region
          %307 = vst [vmem:[#allocation2] sm:$0xff] 0.0
          %308 = vst [vmem:[#allocation2 + $0x8] sm:$0xff] 0.0
          %309 = vst [vmem:[#allocation2 + $0x10] sm:$0xff] 0.0
          %310 = vst [vmem:[#allocation2 + $0x18] sm:$0xff] 0.0
          %311 = vst [vmem:[#allocation2 + $0x20] sm:$0xff] 0.0
          %312 = vst [vmem:[#allocation2 + $0x28] sm:$0xff] 0.0
          %313 = vst [vmem:[#allocation2 + $0x30] sm:$0xff] 0.0
          %314 = vst [vmem:[#allocation2 + $0x38] sm:$0xff] 0.0
          %315 = vst [vmem:[#allocation2 + $0x40] sm:$0xff] 0.0
          %316 = vst [vmem:[#allocation2 + $0x48] sm:$0xff] 0.0
          %317 = vst [vmem:[#allocation2 + $0x50] sm:$0xff] 0.0
          %318 = vst [vmem:[#allocation2 + $0x58] sm:$0xff] 0.0
          %319 = vst [vmem:[#allocation2 + $0x60] sm:$0xff] 0.0
          %320 = vst [vmem:[#allocation2 + $0x68] sm:$0xff] 0.0
          %321 = vst [vmem:[#allocation2 + $0x70] sm:$0xff] 0.0
          %322 = vst [vmem:[#allocation2 + $0x78] sm:$0xff] 0.0
          %323 = vst [vmem:[#allocation2 + $0x80] sm:$0xff] 0.0
          %324 = vst [vmem:[#allocation2 + $0x88] sm:$0xff] 0.0
          %325 = vst [vmem:[#allocation2 + $0x90] sm:$0xff] 0.0
          %326 = vst [vmem:[#allocation2 + $0x98] sm:$0xff] 0.0
          %327 = vst [vmem:[#allocation2 + $0xa0] sm:$0xff] 0.0
          %328 = vst [vmem:[#allocation2 + $0xa8] sm:$0xff] 0.0
          %329 = vst [vmem:[#allocation2 + $0xb0] sm:$0xff] 0.0
          %330 = vst [vmem:[#allocation2 + $0xb8] sm:$0xff] 0.0
          %331 = vst [vmem:[#allocation2 + $0xc0] sm:$0xff] 0.0
          %332 = vst [vmem:[#allocation2 + $0xc8] sm:$0xff] 0.0
          %333 = vst [vmem:[#allocation2 + $0xd0] sm:$0xff] 0.0
          %334 = vst [vmem:[#allocation2 + $0xd8] sm:$0xff] 0.0
          %335 = vst [vmem:[#allocation2 + $0xe0] sm:$0xff] 0.0
          %336 = vst [vmem:[#allocation2 + $0xe8] sm:$0xff] 0.0
          %337 = vst [vmem:[#allocation2 + $0xf0] sm:$0xff] 0.0
          %338 = vst [vmem:[#allocation2 + $0xf8] sm:$0xff] 0.0
          %339 = vst [vmem:[#allocation2 + $0x100] sm:$0xff] 0.0
          %340 = vst [vmem:[#allocation2 + $0x108] sm:$0xff] 0.0
          %341 = vst [vmem:[#allocation2 + $0x110] sm:$0xff] 0.0
          %342 = vst [vmem:[#allocation2 + $0x118] sm:$0xff] 0.0
          %343 = vst [vmem:[#allocation2 + $0x120] sm:$0xff] 0.0
          %344 = vst [vmem:[#allocation2 + $0x128] sm:$0xff] 0.0
          %345 = vst [vmem:[#allocation2 + $0x130] sm:$0xff] 0.0
          %346 = vst [vmem:[#allocation2 + $0x138] sm:$0xff] 0.0
          %347 = vst [vmem:[#allocation2 + $0x140] sm:$0xff] 0.0
          %348 = vst [vmem:[#allocation2 + $0x148] sm:$0xff] 0.0
          %349 = vst [vmem:[#allocation2 + $0x150] sm:$0xff] 0.0
          %350 = vst [vmem:[#allocation2 + $0x158] sm:$0xff] 0.0
          %351 = vst [vmem:[#allocation2 + $0x160] sm:$0xff] 0.0
          %352 = vst [vmem:[#allocation2 + $0x168] sm:$0xff] 0.0
          %353 = vst [vmem:[#allocation2 + $0x170] sm:$0xff] 0.0
          %354 = vst [vmem:[#allocation2 + $0x178] sm:$0xff] 0.0
          %355 = vst [vmem:[#allocation2 + $0x180] sm:$0xff] 0.0
          %356 = vst [vmem:[#allocation2 + $0x188] sm:$0xff] 0.0
          %357 = vst [vmem:[#allocation2 + $0x190] sm:$0xff] 0.0
          %358 = vst [vmem:[#allocation2 + $0x198] sm:$0xff] 0.0
          %359 = vst [vmem:[#allocation2 + $0x1a0] sm:$0xff] 0.0
          %360 = vst [vmem:[#allocation2 + $0x1a8] sm:$0xff] 0.0
          %361 = vst [vmem:[#allocation2 + $0x1b0] sm:$0xff] 0.0
          %362 = vst [vmem:[#allocation2 + $0x1b8] sm:$0xff] 0.0
          %363 = vst [vmem:[#allocation2 + $0x1c0] sm:$0xff] 0.0
          %364 = vst [vmem:[#allocation2 + $0x1c8] sm:$0xff] 0.0
          %365 = vst [vmem:[#allocation2 + $0x1d0] sm:$0xff] 0.0
          %366 = vst [vmem:[#allocation2 + $0x1d8] sm:$0xff] 0.0
          %367 = vst [vmem:[#allocation2 + $0x1e0] sm:$0xff] 0.0
          %368 = vst [vmem:[#allocation2 + $0x1e8] sm:$0xff] 0.0
          %369 = vst [vmem:[#allocation2 + $0x1f0] sm:$0xff] 0.0
          %370 = vst [vmem:[#allocation2 + $0x1f8] sm:$0xff] 0.0
        $region56: #{qwen2_5_vl_mlp.1} parent=35 // pred_fallthru
          _
        %v371 = vld [vmem:[%s261] sm:$0xff]
        %v372 = vld [vmem:[%s261 + $0x8] sm:$0xff]
        %v373 = vld [vmem:[%s261 + $0x10] sm:$0xff]
        %v374 = vld [vmem:[%s261 + $0x18] sm:$0xff]
        %v375 = vld [vmem:[%s261 + $0x20] sm:$0xff]
        %v376 = vld [vmem:[%s261 + $0x28] sm:$0xff]
        %v377 = vld [vmem:[%s261 + $0x30] sm:$0xff]
        %v378 = vld [vmem:[%s261 + $0x38] sm:$0xff]
        %v379 = vld [vmem:[%s261 + $0x40] sm:$0xff]
        %v380 = vld [vmem:[%s261 + $0x48] sm:$0xff]
        %v381 = vld [vmem:[%s261 + $0x50] sm:$0xff]
        %v382 = vld [vmem:[%s261 + $0x58] sm:$0xff]
        %v383 = vld [vmem:[%s261 + $0x60] sm:$0xff]
        %v384 = vld [vmem:[%s261 + $0x68] sm:$0xff]
        %v385 = vld [vmem:[%s261 + $0x70] sm:$0xff]
        %v386 = vld [vmem:[%s261 + $0x78] sm:$0xff]
        %v387 = vld [vmem:[%s261 + $0x80] sm:$0xff]
        %v388 = vld [vmem:[%s261 + $0x88] sm:$0xff]
        %v389 = vld [vmem:[%s261 + $0x90] sm:$0xff]
        %v390 = vld [vmem:[%s261 + $0x98] sm:$0xff]
        %v391 = vld [vmem:[%s261 + $0xa0] sm:$0xff]
        %v392 = vld [vmem:[%s261 + $0xa8] sm:$0xff]
        %v393 = vld [vmem:[%s261 + $0xb0] sm:$0xff]
        %v394 = vld [vmem:[%s261 + $0xb8] sm:$0xff]
        %v395 = vld [vmem:[%s261 + $0xc0] sm:$0xff]
        %v396 = vld [vmem:[%s261 + $0xc8] sm:$0xff]
        %v397 = vld [vmem:[%s261 + $0xd0] sm:$0xff]
        %v398 = vld [vmem:[%s261 + $0xd8] sm:$0xff]
        %v399 = vld [vmem:[%s261 + $0xe0] sm:$0xff]
        %v400 = vld [vmem:[%s261 + $0xe8] sm:$0xff]
        %v401 = vld [vmem:[%s261 + $0xf0] sm:$0xff]
        %v402 = vld [vmem:[%s261 + $0xf8] sm:$0xff]
        %v403 = vld [vmem:[%s261 + $0x100] sm:$0xff]
        %v404 = vld [vmem:[%s261 + $0x108] sm:$0xff]
        %v405 = vld [vmem:[%s261 + $0x110] sm:$0xff]
        %v406 = vld [vmem:[%s261 + $0x118] sm:$0xff]
        %v407 = vld [vmem:[%s261 + $0x120] sm:$0xff]
        %v408 = vld [vmem:[%s261 + $0x128] sm:$0xff]
        %v409 = vld [vmem:[%s261 + $0x130] sm:$0xff]
        %v410 = vld [vmem:[%s261 + $0x138] sm:$0xff]
        %v411 = vld [vmem:[%s261 + $0x140] sm:$0xff]
        %v412 = vld [vmem:[%s261 + $0x148] sm:$0xff]
        %v413 = vld [vmem:[%s261 + $0x150] sm:$0xff]
        %v414 = vld [vmem:[%s261 + $0x158] sm:$0xff]
        %v415 = vld [vmem:[%s261 + $0x160] sm:$0xff]
        %v416 = vld [vmem:[%s261 + $0x168] sm:$0xff]
        %v417 = vld [vmem:[%s261 + $0x170] sm:$0xff]
        %v418 = vld [vmem:[%s261 + $0x178] sm:$0xff]
        %v419 = vld [vmem:[%s261 + $0x180] sm:$0xff]
        %v420 = vld [vmem:[%s261 + $0x188] sm:$0xff]
        %v421 = vld [vmem:[%s261 + $0x190] sm:$0xff]
        %v422 = vld [vmem:[%s261 + $0x198] sm:$0xff]
        %v423 = vld [vmem:[%s261 + $0x1a0] sm:$0xff]
        %v424 = vld [vmem:[%s261 + $0x1a8] sm:$0xff]
        %v425 = vld [vmem:[%s261 + $0x1b0] sm:$0xff]
        %v426 = vld [vmem:[%s261 + $0x1b8] sm:$0xff]
        %v427 = vld [vmem:[%s261 + $0x1c0] sm:$0xff]
        %v428 = vld [vmem:[%s261 + $0x1c8] sm:$0xff]
        %v429 = vld [vmem:[%s261 + $0x1d0] sm:$0xff]
        %v430 = vld [vmem:[%s261 + $0x1d8] sm:$0xff]
        %v431 = vld [vmem:[%s261 + $0x1e0] sm:$0xff]
        %v432 = vld [vmem:[%s261 + $0x1e8] sm:$0xff]
        %v433 = vld [vmem:[%s261 + $0x1f0] sm:$0xff]
        %v434 = vld [vmem:[%s261 + $0x1f8] sm:$0xff]
        %v435 = vld [vmem:[#allocation6] sm:$0xff]
        %v436 = vld [vmem:[#allocation6 + $0x8] sm:$0xff]
        %v437 = vld [vmem:[#allocation6 + $0x10] sm:$0xff]
        %v438 = vld [vmem:[#allocation6 + $0x18] sm:$0xff]
        %v439 = vld [vmem:[#allocation6 + $0x20] sm:$0xff]
        %v440 = vld [vmem:[#allocation6 + $0x28] sm:$0xff]
        %v441 = vld [vmem:[#allocation6 + $0x30] sm:$0xff]
        %v442 = vld [vmem:[#allocation6 + $0x38] sm:$0xff]
        %v443 = vld [vmem:[#allocation6 + $0x40] sm:$0xff]
        %v444 = vld [vmem:[#allocation6 + $0x48] sm:$0xff]
        %v445 = vld [vmem:[#allocation6 + $0x50] sm:$0xff]
        %v446 = vld [vmem:[#allocation6 + $0x58] sm:$0xff]
        %v447 = vld [vmem:[#allocation6 + $0x60] sm:$0xff]
        %v448 = vld [vmem:[#allocation6 + $0x68] sm:$0xff]
        %v449 = vld [vmem:[#allocation6 + $0x70] sm:$0xff]
        %v450 = vld [vmem:[#allocation6 + $0x78] sm:$0xff]
        %v451 = vld [vmem:[#allocation6 + $0x80] sm:$0xff]
        %v452 = vld [vmem:[#allocation6 + $0x88] sm:$0xff]
        %v453 = vld [vmem:[#allocation6 + $0x90] sm:$0xff]
        %v454 = vld [vmem:[#allocation6 + $0x98] sm:$0xff]
        %v455 = vld [vmem:[#allocation6 + $0xa0] sm:$0xff]
        %v456 = vld [vmem:[#allocation6 + $0xa8] sm:$0xff]
        %v457 = vld [vmem:[#allocation6 + $0xb0] sm:$0xff]
        %v458 = vld [vmem:[#allocation6 + $0xb8] sm:$0xff]
        %v459 = vld [vmem:[#allocation6 + $0xc0] sm:$0xff]
        %v460 = vld [vmem:[#allocation6 + $0xc8] sm:$0xff]
        %v461 = vld [vmem:[#allocation6 + $0xd0] sm:$0xff]
        %v462 = vld [vmem:[#allocation6 + $0xd8] sm:$0xff]
        %v463 = vld [vmem:[#allocation6 + $0xe0] sm:$0xff]
        %v464 = vld [vmem:[#allocation6 + $0xe8] sm:$0xff]
        %v465 = vld [vmem:[#allocation6 + $0xf0] sm:$0xff]
        %v466 = vld [vmem:[#allocation6 + $0xf8] sm:$0xff]
        %v467 = vld [vmem:[#allocation6 + $0x100] sm:$0xff]
        %v468 = vld [vmem:[#allocation6 + $0x108] sm:$0xff]
        %v469 = vld [vmem:[#allocation6 + $0x110] sm:$0xff]
        %v470 = vld [vmem:[#allocation6 + $0x118] sm:$0xff]
        %v471 = vld [vmem:[#allocation6 + $0x120] sm:$0xff]
        %v472 = vld [vmem:[#allocation6 + $0x128] sm:$0xff]
        %v473 = vld [vmem:[#allocation6 + $0x130] sm:$0xff]
        %v474 = vld [vmem:[#allocation6 + $0x138] sm:$0xff]
        %v475 = vld [vmem:[#allocation6 + $0x140] sm:$0xff]
        %v476 = vld [vmem:[#allocation6 + $0x148] sm:$0xff]
        %v477 = vld [vmem:[#allocation6 + $0x150] sm:$0xff]
        %v478 = vld [vmem:[#allocation6 + $0x158] sm:$0xff]
        %v479 = vld [vmem:[#allocation6 + $0x160] sm:$0xff]
        %v480 = vld [vmem:[#allocation6 + $0x168] sm:$0xff]
        %v481 = vld [vmem:[#allocation6 + $0x170] sm:$0xff]
        %v482 = vld [vmem:[#allocation6 + $0x178] sm:$0xff]
        %v483 = vld [vmem:[#allocation6 + $0x180] sm:$0xff]
        %v484 = vld [vmem:[#allocation6 + $0x188] sm:$0xff]
        %v485 = vld [vmem:[#allocation6 + $0x190] sm:$0xff]
        %v486 = vld [vmem:[#allocation6 + $0x198] sm:$0xff]
        %v487 = vld [vmem:[#allocation6 + $0x1a0] sm:$0xff]
        %v488 = vld [vmem:[#allocation6 + $0x1a8] sm:$0xff]
        %v489 = vld [vmem:[#allocation6 + $0x1b0] sm:$0xff]
        %v490 = vld [vmem:[#allocation6 + $0x1b8] sm:$0xff]
        %v491 = vld [vmem:[#allocation6 + $0x1c0] sm:$0xff]
        %v492 = vld [vmem:[#allocation6 + $0x1c8] sm:$0xff]
        %v493 = vld [vmem:[#allocation6 + $0x1d0] sm:$0xff]
        %v494 = vld [vmem:[#allocation6 + $0x1d8] sm:$0xff]
        %v495 = vld [vmem:[#allocation6 + $0x1e0] sm:$0xff]
        %v496 = vld [vmem:[#allocation6 + $0x1e8] sm:$0xff]
        %v497 = vld [vmem:[#allocation6 + $0x1f0] sm:$0xff]
        %v498 = vld [vmem:[#allocation6 + $0x1f8] sm:$0xff]
        %v499 = vld [vmem:[#allocation6 + $0x200] sm:$0xff]
        %v500 = vld [vmem:[#allocation6 + $0x208] sm:$0xff]
        %v501 = vld [vmem:[#allocation6 + $0x210] sm:$0xff]
        %v502 = vld [vmem:[#allocation6 + $0x218] sm:$0xff]
        %v503 = vld [vmem:[#allocation6 + $0x220] sm:$0xff]
        %v504 = vld [vmem:[#allocation6 + $0x228] sm:$0xff]
        %v505 = vld [vmem:[#allocation6 + $0x230] sm:$0xff]
        %v506 = vld [vmem:[#allocation6 + $0x238] sm:$0xff]
        %v507 = vld [vmem:[#allocation6 + $0x240] sm:$0xff]
        %v508 = vld [vmem:[#allocation6 + $0x248] sm:$0xff]
        %v509 = vld [vmem:[#allocation6 + $0x250] sm:$0xff]
        %v510 = vld [vmem:[#allocation6 + $0x258] sm:$0xff]
        %v511 = vld [vmem:[#allocation6 + $0x260] sm:$0xff]
        %v512 = vld [vmem:[#allocation6 + $0x268] sm:$0xff]
        %v513 = vld [vmem:[#allocation6 + $0x270] sm:$0xff]
        %v514 = vld [vmem:[#allocation6 + $0x278] sm:$0xff]
        %v515 = vld [vmem:[#allocation6 + $0x280] sm:$0xff]
        %v516 = vld [vmem:[#allocation6 + $0x288] sm:$0xff]
        %v517 = vld [vmem:[#allocation6 + $0x290] sm:$0xff]
        %v518 = vld [vmem:[#allocation6 + $0x298] sm:$0xff]
        %v519 = vld [vmem:[#allocation6 + $0x2a0] sm:$0xff]
        %v520 = vld [vmem:[#allocation6 + $0x2a8] sm:$0xff]
        %v521 = vld [vmem:[#allocation6 + $0x2b0] sm:$0xff]
        %v522 = vld [vmem:[#allocation6 + $0x2b8] sm:$0xff]
        %v523 = vld [vmem:[#allocation6 + $0x2c0] sm:$0xff]
        %v524 = vld [vmem:[#allocation6 + $0x2c8] sm:$0xff]
        %v525 = vld [vmem:[#allocation6 + $0x2d0] sm:$0xff]
        %v526 = vld [vmem:[#allocation6 + $0x2d8] sm:$0xff]
        %v527 = vld [vmem:[#allocation6 + $0x2e0] sm:$0xff]
        %v528 = vld [vmem:[#allocation6 + $0x2e8] sm:$0xff]
        %v529 = vld [vmem:[#allocation6 + $0x2f0] sm:$0xff]
        %v530 = vld [vmem:[#allocation6 + $0x2f8] sm:$0xff]
        %v531 = vld [vmem:[#allocation6 + $0x300] sm:$0xff]
        %v532 = vld [vmem:[#allocation6 + $0x308] sm:$0xff]
        %v533 = vld [vmem:[#allocation6 + $0x310] sm:$0xff]
        %v534 = vld [vmem:[#allocation6 + $0x318] sm:$0xff]
        %v535 = vld [vmem:[#allocation6 + $0x320] sm:$0xff]
        %v536 = vld [vmem:[#allocation6 + $0x328] sm:$0xff]
        %v537 = vld [vmem:[#allocation6 + $0x330] sm:$0xff]
        %v538 = vld [vmem:[#allocation6 + $0x338] sm:$0xff]
        %v539 = vld [vmem:[#allocation6 + $0x340] sm:$0xff]
        %v540 = vld [vmem:[#allocation6 + $0x348] sm:$0xff]
        %v541 = vld [vmem:[#allocation6 + $0x350] sm:$0xff]
        %v542 = vld [vmem:[#allocation6 + $0x358] sm:$0xff]
        %v543 = vld [vmem:[#allocation6 + $0x360] sm:$0xff]
        %v544 = vld [vmem:[#allocation6 + $0x368] sm:$0xff]
        %v545 = vld [vmem:[#allocation6 + $0x370] sm:$0xff]
        %v546 = vld [vmem:[#allocation6 + $0x378] sm:$0xff]
        %v547 = vld [vmem:[#allocation6 + $0x380] sm:$0xff]
        %v548 = vld [vmem:[#allocation6 + $0x388] sm:$0xff]
        %v549 = vld [vmem:[#allocation6 + $0x390] sm:$0xff]
        %v550 = vld [vmem:[#allocation6 + $0x398] sm:$0xff]
        %v551 = vld [vmem:[#allocation6 + $0x3a0] sm:$0xff]
        %v552 = vld [vmem:[#allocation6 + $0x3a8] sm:$0xff]
        %v553 = vld [vmem:[#allocation6 + $0x3b0] sm:$0xff]
        %v554 = vld [vmem:[#allocation6 + $0x3b8] sm:$0xff]
        %v555 = vld [vmem:[#allocation6 + $0x3c0] sm:$0xff]
        %v556 = vld [vmem:[#allocation6 + $0x3c8] sm:$0xff]
        %v557 = vld [vmem:[#allocation6 + $0x3d0] sm:$0xff]
        %v558 = vld [vmem:[#allocation6 + $0x3d8] sm:$0xff]
        %v559 = vld [vmem:[#allocation6 + $0x3e0] sm:$0xff]
        %v560 = vld [vmem:[#allocation6 + $0x3e8] sm:$0xff]
        %v561 = vld [vmem:[#allocation6 + $0x3f0] sm:$0xff]
        %v562 = vld [vmem:[#allocation6 + $0x3f8] sm:$0xff]
        %563 = vmatprep.subr.mxu0 %v436
        %564 = vmatpush1.msra.mxu0 %v435
        %565 = vmatprep.subr.mxu0 %v440
        %566 = vmatpush1.msra.mxu0 %v439
        %567 = vmatprep.subr.mxu0 %v444
        %568 = vmatpush1.msra.mxu0 %v443
        %569 = vmatprep.subr.mxu0 %v448
        %570 = vmatpush1.msra.mxu0 %v447
        %571 = vmatprep.subr.mxu0 %v452
        %572 = vmatpush1.msra.mxu0 %v451
        %573 = vmatprep.subr.mxu0 %v456
        %574 = vmatpush1.msra.mxu0 %v455
        %575 = vmatprep.subr.mxu0 %v460
        %576 = vmatpush1.msra.mxu0 %v459
        %577 = vmatprep.subr.mxu0 %v464
        %578 = vmatpush1.msra.mxu0 %v463
        %579 = vmatprep.subr.mxu0 %v468
        %580 = vmatpush1.msra.mxu0 %v467
        %581 = vmatprep.subr.mxu0 %v472
        %582 = vmatpush1.msra.mxu0 %v471
        %583 = vmatprep.subr.mxu0 %v476
        %584 = vmatpush1.msra.mxu0 %v475
        %585 = vmatprep.subr.mxu0 %v480
        %586 = vmatpush1.msra.mxu0 %v479
        %587 = vmatprep.subr.mxu0 %v484
        %588 = vmatpush1.msra.mxu0 %v483
        %589 = vmatprep.subr.mxu0 %v488
        %590 = vmatpush1.msra.mxu0 %v487
        %591 = vmatprep.subr.mxu0 %v492
        %592 = vmatpush1.msra.mxu0 %v491
        %593 = vmatprep.subr.mxu0 %v496
        %594 = vmatpush1.msra.mxu0 %v495
        %595 = vmatprep.subr.mxu0 %v500
        %596 = vmatpush1.msra.mxu0 %v499
        %597 = vmatprep.subr.mxu0 %v504
        %598 = vmatpush1.msra.mxu0 %v503
        %599 = vmatprep.subr.mxu0 %v508
        %600 = vmatpush1.msra.mxu0 %v507
        %601 = vmatprep.subr.mxu0 %v512
        %602 = vmatpush1.msra.mxu0 %v511
        %603 = vmatprep.subr.mxu0 %v516
        %604 = vmatpush1.msra.mxu0 %v515
        %605 = vmatprep.subr.mxu0 %v520
        %606 = vmatpush1.msra.mxu0 %v519
        %607 = vmatprep.subr.mxu0 %v524
        %608 = vmatpush1.msra.mxu0 %v523
        %609 = vmatprep.subr.mxu0 %v528
        %610 = vmatpush1.msra.mxu0 %v527
        %611 = vmatprep.subr.mxu0 %v532
        %612 = vmatpush1.msra.mxu0 %v531
        %613 = vmatprep.subr.mxu0 %v536
        %614 = vmatpush1.msra.mxu0 %v535
        %615 = vmatprep.subr.mxu0 %v540
        %616 = vmatpush1.msra.mxu0 %v539
        %617 = vmatprep.subr.mxu0 %v544
        %618 = vmatpush1.msra.mxu0 %v543
        %619 = vmatprep.subr.mxu0 %v548
        %620 = vmatpush1.msra.mxu0 %v547
        %621 = vmatprep.subr.mxu0 %v552
        %622 = vmatpush1.msra.mxu0 %v551
        %623 = vmatprep.subr.mxu0 %v556
        %624 = vmatpush1.msra.mxu0 %v555
        %625 = vmatprep.subr.mxu0 %v560
        %626 = vmatpush1.msra.mxu0 %v559
        %627 = vmatprep.mubr.f32.mxu0 %v372
        %628 = vmatmul.mubr.f32.gmra.mrb[0].mxu0 %v371
        %v629 = vpop.f32.mrb[0].mxu0
        %v630 = vadd.f32 0.0, %v629
        %v631 = vpop.f32.mrb[0].mxu0
        %v632 = vadd.f32 0.0, %v631
        %633 = vmatprep.mubr.f32.mxu0 %v374
        %634 = vmatmul.mubr.f32.gmra.mrb[0].mxu0 %v373
        %v635 = vpop.f32.mrb[0].mxu0
        %v636 = vadd.f32 0.0, %v635
        %v637 = vpop.f32.mrb[0].mxu0
        %v638 = vadd.f32 0.0, %v637
        %639 = vmatprep.mubr.f32.mxu0 %v376
        %640 = vmatmul.mubr.f32.gmra.mrb[0].mxu0 %v375
        %v641 = vpop.f32.mrb[0].mxu0
        %v642 = vadd.f32 0.0, %v641
        %v643 = vpop.f32.mrb[0].mxu0
        %v644 = vadd.f32 0.0, %v643
        %645 = vmatprep.mubr.f32.mxu0 %v378
        %646 = vmatmul.mubr.f32.gmra.mrb[0].mxu0 %v377
        %v647 = vpop.f32.mrb[0].mxu0
        %v648 = vadd.f32 0.0, %v647
        %v649 = vpop.f32.mrb[0].mxu0
        %v650 = vadd.f32 0.0, %v649
        %651 = vmatprep.mubr.f32.mxu0 %v380
        %652 = vmatmul.mubr.f32.gmra.mrb[0].mxu0 %v379
        %v653 = vpop.f32.mrb[0].mxu0
        %v654 = vadd.f32 0.0, %v653
        %v655 = vpop.f32.mrb[0].mxu0
        %v656 = vadd.f32 0.0, %v655
        %657 = vmatprep.mubr.f32.mxu0 %v382
        %658 = vmatmul.mubr.f32.gmra.mrb[0].mxu0 %v381
        %v659 = vpop.f32.mrb[0].mxu0
        %v660 = vadd.f32 0.0, %v659
        %v661 = vpop.f32.mrb[0].mxu0
        %v662 = vadd.f32 0.0, %v661
        %663 = vmatprep.mubr.f32.mxu0 %v384
        %664 = vmatmul.mubr.f32.gmra.mrb[0].mxu0 %v383
        %v665 = vpop.f32.mrb[0].mxu0
        %v666 = vadd.f32 0.0, %v665
        %v667 = vpop.f32.mrb[0].mxu0
        %v668 = vadd.f32 0.0, %v667
        %669 = vmatprep.mubr.f32.mxu0 %v386
        %670 = vmatmul.mubr.f32.gmra.mrb[0].mxu0 %v385
        %v671 = vpop.f32.mrb[0].mxu0
        %v672 = vadd.f32 0.0, %v671
        %v673 = vpop.f32.mrb[0].mxu0
        %v674 = vadd.f32 0.0, %v673
        %675 = vmatprep.mubr.f32.mxu0 %v388
        %676 = vmatmul.mubr.f32.gmra.mrb[0].mxu0 %v387
        %v677 = vpop.f32.mrb[0].mxu0
        %v678 = vadd.f32 0.0, %v677
        %v679 = vpop.f32.mrb[0].mxu0
        %v680 = vadd.f32 0.0, %v679
        %681 = vmatprep.mubr.f32.mxu0 %v390
        %682 = vmatmul.mubr.f32.gmra.mrb[0].mxu0 %v389
        %v683 = vpop.f32.mrb[0].mxu0
        %v684 = vadd.f32 0.0, %v683
        %v685 = vpop.f32.mrb[0].mxu0
        %v686 = vadd.f32 0.0, %v685
        %687 = vmatprep.mubr.f32.mxu0 %v392
        %688 = vmatmul.mubr.f32.gmra.mrb[0].mxu0 %v391
        %v689 = vpop.f32.mrb[0].mxu0
        %v690 = vadd.f32 0.0, %v689
        %v691 = vpop.f32.mrb[0].mxu0
        %v692 = vadd.f32 0.0, %v691
        %693 = vmatprep.mubr.f32.mxu0 %v394
        %694 = vmatmul.mubr.f32.gmra.mrb[0].mxu0 %v393
        %v695 = vpop.f32.mrb[0].mxu0
        %v696 = vadd.f32 0.0, %v695
        %v697 = vpop.f32.mrb[0].mxu0
        %v698 = vadd.f32 0.0, %v697
        %699 = vmatprep.mubr.f32.mxu0 %v396
        %700 = vmatmul.mubr.f32.gmra.mrb[0].mxu0 %v395
        %v701 = vpop.f32.mrb[0].mxu0
        %v702 = vadd.f32 0.0, %v701
        %v703 = vpop.f32.mrb[0].mxu0
        %v704 = vadd.f32 0.0, %v703
        %705 = vmatprep.mubr.f32.mxu0 %v398
        %706 = vmatmul.mubr.f32.gmra.mrb[0].mxu0 %v397
        %v707 = vpop.f32.mrb[0].mxu0
        %v708 = vadd.f32 0.0, %v707
        %v709 = vpop.f32.mrb[0].mxu0
        %v710 = vadd.f32 0.0, %v709
        %711 = vmatprep.mubr.f32.mxu0 %v400
        %712 = vmatmul.mubr.f32.gmra.mrb[0].mxu0 %v399
        %v713 = vpop.f32.mrb[0].mxu0
        %v714 = vadd.f32 0.0, %v713
        %v715 = vpop.f32.mrb[0].mxu0
        %v716 = vadd.f32 0.0, %v715
        %717 = vmatprep.mubr.f32.mxu0 %v402
        %718 = vmatmul.mubr.f32.gmra.mrb[0].mxu0 %v401
        %v719 = vpop.f32.mrb[0].mxu0
        %v720 = vadd.f32 0.0, %v719
        %v721 = vpop.f32.mrb[0].mxu0
        %v722 = vadd.f32 0.0, %v721
        %723 = vmatprep.mubr.f32.mxu0 %v404
        %724 = vmatmul.mubr.f32.gmra.mrb[0].mxu0 %v403
        %v725 = vpop.f32.mrb[0].mxu0
        %v726 = vadd.f32 0.0, %v725
        %v727 = vpop.f32.mrb[0].mxu0
        %v728 = vadd.f32 0.0, %v727
        %729 = vmatprep.mubr.f32.mxu0 %v406
        %730 = vmatmul.mubr.f32.gmra.mrb[0].mxu0 %v405
        %v731 = vpop.f32.mrb[0].mxu0
        %v732 = vadd.f32 0.0, %v731
        %v733 = vpop.f32.mrb[0].mxu0
        %v734 = vadd.f32 0.0, %v733
        %735 = vmatprep.mubr.f32.mxu0 %v408
        %736 = vmatmul.mubr.f32.gmra.mrb[0].mxu0 %v407
        %v737 = vpop.f32.mrb[0].mxu0
        %v738 = vadd.f32 0.0, %v737
        %v739 = vpop.f32.mrb[0].mxu0
        %v740 = vadd.f32 0.0, %v739
        %741 = vmatprep.mubr.f32.mxu0 %v410
        %742 = vmatmul.mubr.f32.gmra.mrb[0].mxu0 %v409
        %v743 = vpop.f32.mrb[0].mxu0
        %v744 = vadd.f32 0.0, %v743
        %v745 = vpop.f32.mrb[0].mxu0
        %v746 = vadd.f32 0.0, %v745
        %747 = vmatprep.mubr.f32.mxu0 %v412
        %748 = vmatmul.mubr.f32.gmra.mrb[0].mxu0 %v411
        %v749 = vpop.f32.mrb[0].mxu0
        %v750 = vadd.f32 0.0, %v749
        %v751 = vpop.f32.mrb[0].mxu0
        %v752 = vadd.f32 0.0, %v751
        %753 = vmatprep.mubr.f32.mxu0 %v414
        %754 = vmatmul.mubr.f32.gmra.mrb[0].mxu0 %v413
        %v755 = vpop.f32.mrb[0].mxu0
        %v756 = vadd.f32 0.0, %v755
        %v757 = vpop.f32.mrb[0].mxu0
        %v758 = vadd.f32 0.0, %v757
        %759 = vmatprep.mubr.f32.mxu0 %v416
        %760 = vmatmul.mubr.f32.gmra.mrb[0].mxu0 %v415
        %v761 = vpop.f32.mrb[0].mxu0
        %v762 = vadd.f32 0.0, %v761
        %v763 = vpop.f32.mrb[0].mxu0
        %v764 = vadd.f32 0.0, %v763
        %765 = vmatprep.mubr.f32.mxu0 %v418
        %766 = vmatmul.mubr.f32.gmra.mrb[0].mxu0 %v417
        %v767 = vpop.f32.mrb[0].mxu0
        %v768 = vadd.f32 0.0, %v767
        %v769 = vpop.f32.mrb[0].mxu0
        %v770 = vadd.f32 0.0, %v769
        %771 = vmatprep.mubr.f32.mxu0 %v420
        %772 = vmatmul.mubr.f32.gmra.mrb[0].mxu0 %v419
        %v773 = vpop.f32.mrb[0].mxu0
        %v774 = vadd.f32 0.0, %v773
        %v775 = vpop.f32.mrb[0].mxu0
        %v776 = vadd.f32 0.0, %v775
        %777 = vmatprep.mubr.f32.mxu0 %v422
        %778 = vmatmul.mubr.f32.gmra.mrb[0].mxu0 %v421
        %v779 = vpop.f32.mrb[0].mxu0
        %v780 = vadd.f32 0.0, %v779
        %v781 = vpop.f32.mrb[0].mxu0
        %v782 = vadd.f32 0.0, %v781
        %783 = vmatprep.mubr.f32.mxu0 %v424
        %784 = vmatmul.mubr.f32.gmra.mrb[0].mxu0 %v423
        %v785 = vpop.f32.mrb[0].mxu0
        %v786 = vadd.f32 0.0, %v785
        %v787 = vpop.f32.mrb[0].mxu0
        %v788 = vadd.f32 0.0, %v787
        %789 = vmatprep.mubr.f32.mxu0 %v426
        %790 = vmatmul.mubr.f32.gmra.mrb[0].mxu0 %v425
        %v791 = vpop.f32.mrb[0].mxu0
        %v792 = vadd.f32 0.0, %v791
        %v793 = vpop.f32.mrb[0].mxu0
        %v794 = vadd.f32 0.0, %v793
        %795 = vmatprep.mubr.f32.mxu0 %v428
        %796 = vmatmul.mubr.f32.gmra.mrb[0].mxu0 %v427
        %v797 = vpop.f32.mrb[0].mxu0
        %v798 = vadd.f32 0.0, %v797
        %v799 = vpop.f32.mrb[0].mxu0
        %v800 = vadd.f32 0.0, %v799
        %801 = vmatprep.mubr.f32.mxu0 %v430
        %802 = vmatmul.mubr.f32.gmra.mrb[0].mxu0 %v429
        %v803 = vpop.f32.mrb[0].mxu0
        %v804 = vadd.f32 0.0, %v803
        %v805 = vpop.f32.mrb[0].mxu0
        %v806 = vadd.f32 0.0, %v805
        %807 = vmatprep.mubr.f32.mxu0 %v432
        %808 = vmatmul.mubr.f32.gmra.mrb[0].mxu0 %v431
        %v809 = vpop.f32.mrb[0].mxu0
        %v810 = vadd.f32 0.0, %v809
        %v811 = vpop.f32.mrb[0].mxu0
        %v812 = vadd.f32 0.0, %v811
        %813 = vmatprep.mubr.f32.mxu0 %v434
        %814 = vmatmul.mubr.f32.gmra.mrb[0].mxu0 %v433
        %v815 = vpop.f32.mrb[0].mxu0
        %v816 = vadd.f32 0.0, %v815
        %v817 = vpop.f32.mrb[0].mxu0
        %v818 = vadd.f32 0.0, %v817
        %819 = vdwg.mxu0
        %820 = vmatprep.subr.mxu0 %v438
        %821 = vmatpush1.msra.mxu0 %v437
        %822 = vmatprep.subr.mxu0 %v442
        %823 = vmatpush1.msra.mxu0 %v441
        %824 = vmatprep.subr.mxu0 %v446
        %825 = vmatpush1.msra.mxu0 %v445
        %826 = vmatprep.subr.mxu0 %v450
        %827 = vmatpush1.msra.mxu0 %v449
        %828 = vmatprep.subr.mxu0 %v454
        %829 = vmatpush1.msra.mxu0 %v453
        %830 = vmatprep.subr.mxu0 %v458
        %831 = vmatpush1.msra.mxu0 %v457
        %832 = vmatprep.subr.mxu0 %v462
        %833 = vmatpush1.msra.mxu0 %v461
        %834 = vmatprep.subr.mxu0 %v466
        %835 = vmatpush1.msra.mxu0 %v465
        %836 = vmatprep.subr.mxu0 %v470
        %837 = vmatpush1.msra.mxu0 %v469
        %838 = vmatprep.subr.mxu0 %v474
        %839 = vmatpush1.msra.mxu0 %v473
        %840 = vmatprep.subr.mxu0 %v478
        %841 = vmatpush1.msra.mxu0 %v477
        %842 = vmatprep.subr.mxu0 %v482
        %843 = vmatpush1.msra.mxu0 %v481
        %844 = vmatprep.subr.mxu0 %v486
        %845 = vmatpush1.msra.mxu0 %v485
        %846 = vmatprep.subr.mxu0 %v490
        %847 = vmatpush1.msra.mxu0 %v489
        %848 = vmatprep.subr.mxu0 %v494
        %849 = vmatpush1.msra.mxu0 %v493
        %850 = vmatprep.subr.mxu0 %v498
        %851 = vmatpush1.msra.mxu0 %v497
        %852 = vmatprep.subr.mxu0 %v502
        %853 = vmatpush1.msra.mxu0 %v501
        %854 = vmatprep.subr.mxu0 %v506
        %855 = vmatpush1.msra.mxu0 %v505
        %856 = vmatprep.subr.mxu0 %v510
        %857 = vmatpush1.msra.mxu0 %v509
        %858 = vmatprep.subr.mxu0 %v514
        %859 = vmatpush1.msra.mxu0 %v513
        %860 = vmatprep.subr.mxu0 %v518
        %861 = vmatpush1.msra.mxu0 %v517
        %862 = vmatprep.subr.mxu0 %v522
        %863 = vmatpush1.msra.mxu0 %v521
        %864 = vmatprep.subr.mxu0 %v526
        %865 = vmatpush1.msra.mxu0 %v525
        %866 = vmatprep.subr.mxu0 %v530
        %867 = vmatpush1.msra.mxu0 %v529
        %868 = vmatprep.subr.mxu0 %v534
        %869 = vmatpush1.msra.mxu0 %v533
        %870 = vmatprep.subr.mxu0 %v538
        %871 = vmatpush1.msra.mxu0 %v537
        %872 = vmatprep.subr.mxu0 %v542
        %873 = vmatpush1.msra.mxu0 %v541
        %874 = vmatprep.subr.mxu0 %v546
        %875 = vmatpush1.msra.mxu0 %v545
        %876 = vmatprep.subr.mxu0 %v550
        %877 = vmatpush1.msra.mxu0 %v549
        %878 = vmatprep.subr.mxu0 %v554
        %879 = vmatpush1.msra.mxu0 %v553
        %880 = vmatprep.subr.mxu0 %v558
        %881 = vmatpush1.msra.mxu0 %v557
        %882 = vmatprep.subr.mxu0 %v562
        %883 = vmatpush1.msra.mxu0 %v561
        %884 = vmatprep.mubr.f32.mxu0 %v372
        %885 = vmatmul.mubr.f32.gmra.mrb[0].mxu0 %v371
        %v886 = vpop.f32.mrb[0].mxu0
        %v887 = vadd.f32 0.0, %v886
        %v888 = vpop.f32.mrb[0].mxu0
        %v889 = vadd.f32 0.0, %v888
        %890 = vmatprep.mubr.f32.mxu0 %v374
        %891 = vmatmul.mubr.f32.gmra.mrb[0].mxu0 %v373
        %v892 = vpop.f32.mrb[0].mxu0
        %v893 = vadd.f32 0.0, %v892
        %v894 = vpop.f32.mrb[0].mxu0
        %v895 = vadd.f32 0.0, %v894
        %896 = vmatprep.mubr.f32.mxu0 %v376
        %897 = vmatmul.mubr.f32.gmra.mrb[0].mxu0 %v375
        %v898 = vpop.f32.mrb[0].mxu0
        %v899 = vadd.f32 0.0, %v898
        %v900 = vpop.f32.mrb[0].mxu0
        %v901 = vadd.f32 0.0, %v900
        %902 = vmatprep.mubr.f32.mxu0 %v378
        %903 = vmatmul.mubr.f32.gmra.mrb[0].mxu0 %v377
        %v904 = vpop.f32.mrb[0].mxu0
        %v905 = vadd.f32 0.0, %v904
        %v906 = vpop.f32.mrb[0].mxu0
        %v907 = vadd.f32 0.0, %v906
        %908 = vmatprep.mubr.f32.mxu0 %v380
        %909 = vmatmul.mubr.f32.gmra.mrb[0].mxu0 %v379
        %v910 = vpop.f32.mrb[0].mxu0
        %v911 = vadd.f32 0.0, %v910
        %v912 = vpop.f32.mrb[0].mxu0
        %v913 = vadd.f32 0.0, %v912
        %914 = vmatprep.mubr.f32.mxu0 %v382
        %915 = vmatmul.mubr.f32.gmra.mrb[0].mxu0 %v381
        %v916 = vpop.f32.mrb[0].mxu0
        %v917 = vadd.f32 0.0, %v916
        %v918 = vpop.f32.mrb[0].mxu0
        %v919 = vadd.f32 0.0, %v918
        %920 = vmatprep.mubr.f32.mxu0 %v384
        %921 = vmatmul.mubr.f32.gmra.mrb[0].mxu0 %v383
        %v922 = vpop.f32.mrb[0].mxu0
        %v923 = vadd.f32 0.0, %v922
        %v924 = vpop.f32.mrb[0].mxu0
        %v925 = vadd.f32 0.0, %v924
        %926 = vmatprep.mubr.f32.mxu0 %v386
        %927 = vmatmul.mubr.f32.gmra.mrb[0].mxu0 %v385
        %v928 = vpop.f32.mrb[0].mxu0
        %v929 = vadd.f32 0.0, %v928
        %v930 = vpop.f32.mrb[0].mxu0
        %v931 = vadd.f32 0.0, %v930
        %932 = vmatprep.mubr.f32.mxu0 %v388
        %933 = vmatmul.mubr.f32.gmra.mrb[0].mxu0 %v387
        %v934 = vpop.f32.mrb[0].mxu0
        %v935 = vadd.f32 0.0, %v934
        %v936 = vpop.f32.mrb[0].mxu0
        %v937 = vadd.f32 0.0, %v936
        %938 = vmatprep.mubr.f32.mxu0 %v390
        %939 = vmatmul.mubr.f32.gmra.mrb[0].mxu0 %v389
        %v940 = vpop.f32.mrb[0].mxu0
        %v941 = vadd.f32 0.0, %v940
        %v942 = vpop.f32.mrb[0].mxu0
        %v943 = vadd.f32 0.0, %v942
        %944 = vmatprep.mubr.f32.mxu0 %v392
        %945 = vmatmul.mubr.f32.gmra.mrb[0].mxu0 %v391
        %v946 = vpop.f32.mrb[0].mxu0
        %v947 = vadd.f32 0.0, %v946
        %v948 = vpop.f32.mrb[0].mxu0
        %v949 = vadd.f32 0.0, %v948
        %950 = vmatprep.mubr.f32.mxu0 %v394
        %951 = vmatmul.mubr.f32.gmra.mrb[0].mxu0 %v393
        %v952 = vpop.f32.mrb[0].mxu0
        %v953 = vadd.f32 0.0, %v952
        %v954 = vpop.f32.mrb[0].mxu0
        %v955 = vadd.f32 0.0, %v954
        %956 = vmatprep.mubr.f32.mxu0 %v396
        %957 = vmatmul.mubr.f32.gmra.mrb[0].mxu0 %v395
        %v958 = vpop.f32.mrb[0].mxu0
        %v959 = vadd.f32 0.0, %v958
        %v960 = vpop.f32.mrb[0].mxu0
        %v961 = vadd.f32 0.0, %v960
        %962 = vmatprep.mubr.f32.mxu0 %v398
        %963 = vmatmul.mubr.f32.gmra.mrb[0].mxu0 %v397
        %v964 = vpop.f32.mrb[0].mxu0
        %v965 = vadd.f32 0.0, %v964
        %v966 = vpop.f32.mrb[0].mxu0
        %v967 = vadd.f32 0.0, %v966
        %968 = vmatprep.mubr.f32.mxu0 %v400
        %969 = vmatmul.mubr.f32.gmra.mrb[0].mxu0 %v399
        %v970 = vpop.f32.mrb[0].mxu0
        %v971 = vadd.f32 0.0, %v970
        %v972 = vpop.f32.mrb[0].mxu0
        %v973 = vadd.f32 0.0, %v972
        %974 = vmatprep.mubr.f32.mxu0 %v402
        %975 = vmatmul.mubr.f32.gmra.mrb[0].mxu0 %v401
        %v976 = vpop.f32.mrb[0].mxu0
        %v977 = vadd.f32 0.0, %v976
        %v978 = vpop.f32.mrb[0].mxu0
        %v979 = vadd.f32 0.0, %v978
        %980 = vmatprep.mubr.f32.mxu0 %v404
        %981 = vmatmul.mubr.f32.gmra.mrb[0].mxu0 %v403
        %v982 = vpop.f32.mrb[0].mxu0
        %v983 = vadd.f32 0.0, %v982
        %v984 = vpop.f32.mrb[0].mxu0
        %v985 = vadd.f32 0.0, %v984
        %986 = vmatprep.mubr.f32.mxu0 %v406
        %987 = vmatmul.mubr.f32.gmra.mrb[0].mxu0 %v405
        %v988 = vpop.f32.mrb[0].mxu0
        %v989 = vadd.f32 0.0, %v988
        %v990 = vpop.f32.mrb[0].mxu0
        %v991 = vadd.f32 0.0, %v990
        %992 = vmatprep.mubr.f32.mxu0 %v408
        %993 = vmatmul.mubr.f32.gmra.mrb[0].mxu0 %v407
        %v994 = vpop.f32.mrb[0].mxu0
        %v995 = vadd.f32 0.0, %v994
        %v996 = vpop.f32.mrb[0].mxu0
        %v997 = vadd.f32 0.0, %v996
        %998 = vmatprep.mubr.f32.mxu0 %v410
        %999 = vmatmul.mubr.f32.gmra.mrb[0].mxu0 %v409
        %v1000 = vpop.f32.mrb[0].mxu0
        %v1001 = vadd.f32 0.0, %v1000
        %v1002 = vpop.f32.mrb[0].mxu0
        %v1003 = vadd.f32 0.0, %v1002
        %1004 = vmatprep.mubr.f32.mxu0 %v412
        %1005 = vmatmul.mubr.f32.gmra.mrb[0].mxu0 %v411
        %v1006 = vpop.f32.mrb[0].mxu0
        %v1007 = vadd.f32 0.0, %v1006
        %v1008 = vpop.f32.mrb[0].mxu0
        %v1009 = vadd.f32 0.0, %v1008
        %1010 = vmatprep.mubr.f32.mxu0 %v414
        %1011 = vmatmul.mubr.f32.gmra.mrb[0].mxu0 %v413
        %v1012 = vpop.f32.mrb[0].mxu0
        %v1013 = vadd.f32 0.0, %v1012
        %v1014 = vpop.f32.mrb[0].mxu0
        %v1015 = vadd.f32 0.0, %v1014
        %1016 = vmatprep.mubr.f32.mxu0 %v416
        %1017 = vmatmul.mubr.f32.gmra.mrb[0].mxu0 %v415
        %v1018 = vpop.f32.mrb[0].mxu0
        %v1019 = vadd.f32 0.0, %v1018
        %v1020 = vpop.f32.mrb[0].mxu0
        %v1021 = vadd.f32 0.0, %v1020
        %1022 = vmatprep.mubr.f32.mxu0 %v418
        %1023 = vmatmul.mubr.f32.gmra.mrb[0].mxu0 %v417
        %v1024 = vpop.f32.mrb[0].mxu0
        %v1025 = vadd.f32 0.0, %v1024
        %v1026 = vpop.f32.mrb[0].mxu0
        %v1027 = vadd.f32 0.0, %v1026
        %1028 = vmatprep.mubr.f32.mxu0 %v420
        %1029 = vmatmul.mubr.f32.gmra.mrb[0].mxu0 %v419
        %v1030 = vpop.f32.mrb[0].mxu0
        %v1031 = vadd.f32 0.0, %v1030
        %v1032 = vpop.f32.mrb[0].mxu0
        %v1033 = vadd.f32 0.0, %v1032
        %1034 = vmatprep.mubr.f32.mxu0 %v422
        %1035 = vmatmul.mubr.f32.gmra.mrb[0].mxu0 %v421
        %v1036 = vpop.f32.mrb[0].mxu0
        %v1037 = vadd.f32 0.0, %v1036
        %v1038 = vpop.f32.mrb[0].mxu0
        %v1039 = vadd.f32 0.0, %v1038
        %1040 = vmatprep.mubr.f32.mxu0 %v424
        %1041 = vmatmul.mubr.f32.gmra.mrb[0].mxu0 %v423
        %v1042 = vpop.f32.mrb[0].mxu0
        %v1043 = vadd.f32 0.0, %v1042
        %v1044 = vpop.f32.mrb[0].mxu0
        %v1045 = vadd.f32 0.0, %v1044
        %1046 = vmatprep.mubr.f32.mxu0 %v426
        %1047 = vmatmul.mubr.f32.gmra.mrb[0].mxu0 %v425
        %v1048 = vpop.f32.mrb[0].mxu0
        %v1049 = vadd.f32 0.0, %v1048
        %v1050 = vpop.f32.mrb[0].mxu0
        %v1051 = vadd.f32 0.0, %v1050
        %1052 = vmatprep.mubr.f32.mxu0 %v428
        %1053 = vmatmul.mubr.f32.gmra.mrb[0].mxu0 %v427
        %v1054 = vpop.f32.mrb[0].mxu0
        %v1055 = vadd.f32 0.0, %v1054
        %v1056 = vpop.f32.mrb[0].mxu0
        %v1057 = vadd.f32 0.0, %v1056
        %1058 = vmatprep.mubr.f32.mxu0 %v430
        %1059 = vmatmul.mubr.f32.gmra.mrb[0].mxu0 %v429
        %v1060 = vpop.f32.mrb[0].mxu0
        %v1061 = vadd.f32 0.0, %v1060
        %v1062 = vpop.f32.mrb[0].mxu0
        %v1063 = vadd.f32 0.0, %v1062
        %1064 = vmatprep.mubr.f32.mxu0 %v432
        %1065 = vmatmul.mubr.f32.gmra.mrb[0].mxu0 %v431
        %v1066 = vpop.f32.mrb[0].mxu0
        %v1067 = vadd.f32 0.0, %v1066
        %v1068 = vpop.f32.mrb[0].mxu0
        %v1069 = vadd.f32 0.0, %v1068
        %1070 = vmatprep.mubr.f32.mxu0 %v434
        %1071 = vmatmul.mubr.f32.gmra.mrb[0].mxu0 %v433
        %v1072 = vpop.f32.mrb[0].mxu0
        %v1073 = vadd.f32 0.0, %v1072
        %v1074 = vpop.f32.mrb[0].mxu0
        %v1075 = vadd.f32 0.0, %v1074
        %1076 = vdwg.mxu0
        %v1077 = vld [vmem:[#allocation8] sm:$0xff]
        %v1078 = vld [vmem:[#allocation8 + $0x8] sm:$0xff]
        %v1079 = vld [vmem:[#allocation8 + $0x10] sm:$0xff]
        %v1080 = vld [vmem:[#allocation8 + $0x18] sm:$0xff]
        %v1081 = vld [vmem:[#allocation8 + $0x20] sm:$0xff]
        %v1082 = vld [vmem:[#allocation8 + $0x28] sm:$0xff]
        %v1083 = vld [vmem:[#allocation8 + $0x30] sm:$0xff]
        %v1084 = vld [vmem:[#allocation8 + $0x38] sm:$0xff]
        %v1085 = vld [vmem:[#allocation8 + $0x40] sm:$0xff]
        %v1086 = vld [vmem:[#allocation8 + $0x48] sm:$0xff]
        %v1087 = vld [vmem:[#allocation8 + $0x50] sm:$0xff]
        %v1088 = vld [vmem:[#allocation8 + $0x58] sm:$0xff]
        %v1089 = vld [vmem:[#allocation8 + $0x60] sm:$0xff]
        %v1090 = vld [vmem:[#allocation8 + $0x68] sm:$0xff]
        %v1091 = vld [vmem:[#allocation8 + $0x70] sm:$0xff]
        %v1092 = vld [vmem:[#allocation8 + $0x78] sm:$0xff]
        %v1093 = vld [vmem:[#allocation8 + $0x80] sm:$0xff]
        %v1094 = vld [vmem:[#allocation8 + $0x88] sm:$0xff]
        %v1095 = vld [vmem:[#allocation8 + $0x90] sm:$0xff]
        %v1096 = vld [vmem:[#allocation8 + $0x98] sm:$0xff]
        %v1097 = vld [vmem:[#allocation8 + $0xa0] sm:$0xff]
        %v1098 = vld [vmem:[#allocation8 + $0xa8] sm:$0xff]
        %v1099 = vld [vmem:[#allocation8 + $0xb0] sm:$0xff]
        %v1100 = vld [vmem:[#allocation8 + $0xb8] sm:$0xff]
        %v1101 = vld [vmem:[#allocation8 + $0xc0] sm:$0xff]
        %v1102 = vld [vmem:[#allocation8 + $0xc8] sm:$0xff]
        %v1103 = vld [vmem:[#allocation8 + $0xd0] sm:$0xff]
        %v1104 = vld [vmem:[#allocation8 + $0xd8] sm:$0xff]
        %v1105 = vld [vmem:[#allocation8 + $0xe0] sm:$0xff]
        %v1106 = vld [vmem:[#allocation8 + $0xe8] sm:$0xff]
        %v1107 = vld [vmem:[#allocation8 + $0xf0] sm:$0xff]
        %v1108 = vld [vmem:[#allocation8 + $0xf8] sm:$0xff]
        %v1109 = vld [vmem:[#allocation8 + $0x100] sm:$0xff]
        %v1110 = vld [vmem:[#allocation8 + $0x108] sm:$0xff]
        %v1111 = vld [vmem:[#allocation8 + $0x110] sm:$0xff]
        %v1112 = vld [vmem:[#allocation8 + $0x118] sm:$0xff]
        %v1113 = vld [vmem:[#allocation8 + $0x120] sm:$0xff]
        %v1114 = vld [vmem:[#allocation8 + $0x128] sm:$0xff]
        %v1115 = vld [vmem:[#allocation8 + $0x130] sm:$0xff]
        %v1116 = vld [vmem:[#allocation8 + $0x138] sm:$0xff]
        %v1117 = vld [vmem:[#allocation8 + $0x140] sm:$0xff]
        %v1118 = vld [vmem:[#allocation8 + $0x148] sm:$0xff]
        %v1119 = vld [vmem:[#allocation8 + $0x150] sm:$0xff]
        %v1120 = vld [vmem:[#allocation8 + $0x158] sm:$0xff]
        %v1121 = vld [vmem:[#allocation8 + $0x160] sm:$0xff]
        %v1122 = vld [vmem:[#allocation8 + $0x168] sm:$0xff]
        %v1123 = vld [vmem:[#allocation8 + $0x170] sm:$0xff]
        %v1124 = vld [vmem:[#allocation8 + $0x178] sm:$0xff]
        %v1125 = vld [vmem:[#allocation8 + $0x180] sm:$0xff]
        %v1126 = vld [vmem:[#allocation8 + $0x188] sm:$0xff]
        %v1127 = vld [vmem:[#allocation8 + $0x190] sm:$0xff]
        %v1128 = vld [vmem:[#allocation8 + $0x198] sm:$0xff]
        %v1129 = vld [vmem:[#allocation8 + $0x1a0] sm:$0xff]
        %v1130 = vld [vmem:[#allocation8 + $0x1a8] sm:$0xff]
        %v1131 = vld [vmem:[#allocation8 + $0x1b0] sm:$0xff]
        %v1132 = vld [vmem:[#allocation8 + $0x1b8] sm:$0xff]
        %v1133 = vld [vmem:[#allocation8 + $0x1c0] sm:$0xff]
        %v1134 = vld [vmem:[#allocation8 + $0x1c8] sm:$0xff]
        %v1135 = vld [vmem:[#allocation8 + $0x1d0] sm:$0xff]
        %v1136 = vld [vmem:[#allocation8 + $0x1d8] sm:$0xff]
        %v1137 = vld [vmem:[#allocation8 + $0x1e0] sm:$0xff]
        %v1138 = vld [vmem:[#allocation8 + $0x1e8] sm:$0xff]
        %v1139 = vld [vmem:[#allocation8 + $0x1f0] sm:$0xff]
        %v1140 = vld [vmem:[#allocation8 + $0x1f8] sm:$0xff]
        %v1141 = vld [vmem:[#allocation8 + $0x200] sm:$0xff]
        %v1142 = vld [vmem:[#allocation8 + $0x208] sm:$0xff]
        %v1143 = vld [vmem:[#allocation8 + $0x210] sm:$0xff]
        %v1144 = vld [vmem:[#allocation8 + $0x218] sm:$0xff]
        %v1145 = vld [vmem:[#allocation8 + $0x220] sm:$0xff]
        %v1146 = vld [vmem:[#allocation8 + $0x228] sm:$0xff]
        %v1147 = vld [vmem:[#allocation8 + $0x230] sm:$0xff]
        %v1148 = vld [vmem:[#allocation8 + $0x238] sm:$0xff]
        %v1149 = vld [vmem:[#allocation8 + $0x240] sm:$0xff]
        %v1150 = vld [vmem:[#allocation8 + $0x248] sm:$0xff]
        %v1151 = vld [vmem:[#allocation8 + $0x250] sm:$0xff]
        %v1152 = vld [vmem:[#allocation8 + $0x258] sm:$0xff]
        %v1153 = vld [vmem:[#allocation8 + $0x260] sm:$0xff]
        %v1154 = vld [vmem:[#allocation8 + $0x268] sm:$0xff]
        %v1155 = vld [vmem:[#allocation8 + $0x270] sm:$0xff]
        %v1156 = vld [vmem:[#allocation8 + $0x278] sm:$0xff]
        %v1157 = vld [vmem:[#allocation8 + $0x280] sm:$0xff]
        %v1158 = vld [vmem:[#allocation8 + $0x288] sm:$0xff]
        %v1159 = vld [vmem:[#allocation8 + $0x290] sm:$0xff]
        %v1160 = vld [vmem:[#allocation8 + $0x298] sm:$0xff]
        %v1161 = vld [vmem:[#allocation8 + $0x2a0] sm:$0xff]
        %v1162 = vld [vmem:[#allocation8 + $0x2a8] sm:$0xff]
        %v1163 = vld [vmem:[#allocation8 + $0x2b0] sm:$0xff]
        %v1164 = vld [vmem:[#allocation8 + $0x2b8] sm:$0xff]
        %v1165 = vld [vmem:[#allocation8 + $0x2c0] sm:$0xff]
        %v1166 = vld [vmem:[#allocation8 + $0x2c8] sm:$0xff]
        %v1167 = vld [vmem:[#allocation8 + $0x2d0] sm:$0xff]
        %v1168 = vld [vmem:[#allocation8 + $0x2d8] sm:$0xff]
        %v1169 = vld [vmem:[#allocation8 + $0x2e0] sm:$0xff]
        %v1170 = vld [vmem:[#allocation8 + $0x2e8] sm:$0xff]
        %v1171 = vld [vmem:[#allocation8 + $0x2f0] sm:$0xff]
        %v1172 = vld [vmem:[#allocation8 + $0x2f8] sm:$0xff]
        %v1173 = vld [vmem:[#allocation8 + $0x300] sm:$0xff]
        %v1174 = vld [vmem:[#allocation8 + $0x308] sm:$0xff]
        %v1175 = vld [vmem:[#allocation8 + $0x310] sm:$0xff]
        %v1176 = vld [vmem:[#allocation8 + $0x318] sm:$0xff]
        %v1177 = vld [vmem:[#allocation8 + $0x320] sm:$0xff]
        %v1178 = vld [vmem:[#allocation8 + $0x328] sm:$0xff]
        %v1179 = vld [vmem:[#allocation8 + $0x330] sm:$0xff]
        %v1180 = vld [vmem:[#allocation8 + $0x338] sm:$0xff]
        %v1181 = vld [vmem:[#allocation8 + $0x340] sm:$0xff]
        %v1182 = vld [vmem:[#allocation8 + $0x348] sm:$0xff]
        %v1183 = vld [vmem:[#allocation8 + $0x350] sm:$0xff]
        %v1184 = vld [vmem:[#allocation8 + $0x358] sm:$0xff]
        %v1185 = vld [vmem:[#allocation8 + $0x360] sm:$0xff]
        %v1186 = vld [vmem:[#allocation8 + $0x368] sm:$0xff]
        %v1187 = vld [vmem:[#allocation8 + $0x370] sm:$0xff]
        %v1188 = vld [vmem:[#allocation8 + $0x378] sm:$0xff]
        %v1189 = vld [vmem:[#allocation8 + $0x380] sm:$0xff]
        %v1190 = vld [vmem:[#allocation8 + $0x388] sm:$0xff]
        %v1191 = vld [vmem:[#allocation8 + $0x390] sm:$0xff]
        %v1192 = vld [vmem:[#allocation8 + $0x398] sm:$0xff]
        %v1193 = vld [vmem:[#allocation8 + $0x3a0] sm:$0xff]
        %v1194 = vld [vmem:[#allocation8 + $0x3a8] sm:$0xff]
        %v1195 = vld [vmem:[#allocation8 + $0x3b0] sm:$0xff]
        %v1196 = vld [vmem:[#allocation8 + $0x3b8] sm:$0xff]
        %v1197 = vld [vmem:[#allocation8 + $0x3c0] sm:$0xff]
        %v1198 = vld [vmem:[#allocation8 + $0x3c8] sm:$0xff]
        %v1199 = vld [vmem:[#allocation8 + $0x3d0] sm:$0xff]
        %v1200 = vld [vmem:[#allocation8 + $0x3d8] sm:$0xff]
        %v1201 = vld [vmem:[#allocation8 + $0x3e0] sm:$0xff]
        %v1202 = vld [vmem:[#allocation8 + $0x3e8] sm:$0xff]
        %v1203 = vld [vmem:[#allocation8 + $0x3f0] sm:$0xff]
        %v1204 = vld [vmem:[#allocation8 + $0x3f8] sm:$0xff]
        %1205 = vmatprep.subr.mxu0 %v1078
        %1206 = vmatpush1.msra.mxu0 %v1077
        %1207 = vmatprep.subr.mxu0 %v1082
        %1208 = vmatpush1.msra.mxu0 %v1081
        %1209 = vmatprep.subr.mxu0 %v1086
        %1210 = vmatpush1.msra.mxu0 %v1085
        %1211 = vmatprep.subr.mxu0 %v1090
        %1212 = vmatpush1.msra.mxu0 %v1089
        %1213 = vmatprep.subr.mxu0 %v1094
        %1214 = vmatpush1.msra.mxu0 %v1093
        %1215 = vmatprep.subr.mxu0 %v1098
        %1216 = vmatpush1.msra.mxu0 %v1097
        %1217 = vmatprep.subr.mxu0 %v1102
        %1218 = vmatpush1.msra.mxu0 %v1101
        %1219 = vmatprep.subr.mxu0 %v1106
        %1220 = vmatpush1.msra.mxu0 %v1105
        %1221 = vmatprep.subr.mxu0 %v1110
        %1222 = vmatpush1.msra.mxu0 %v1109
        %1223 = vmatprep.subr.mxu0 %v1114
        %1224 = vmatpush1.msra.mxu0 %v1113
        %1225 = vmatprep.subr.mxu0 %v1118
        %1226 = vmatpush1.msra.mxu0 %v1117
        %1227 = vmatprep.subr.mxu0 %v1122
        %1228 = vmatpush1.msra.mxu0 %v1121
        %1229 = vmatprep.subr.mxu0 %v1126
        %1230 = vmatpush1.msra.mxu0 %v1125
        %1231 = vmatprep.subr.mxu0 %v1130
        %1232 = vmatpush1.msra.mxu0 %v1129
        %1233 = vmatprep.subr.mxu0 %v1134
        %1234 = vmatpush1.msra.mxu0 %v1133
        %1235 = vmatprep.subr.mxu0 %v1138
        %1236 = vmatpush1.msra.mxu0 %v1137
        %1237 = vmatprep.subr.mxu0 %v1142
        %1238 = vmatpush1.msra.mxu0 %v1141
        %1239 = vmatprep.subr.mxu0 %v1146
        %1240 = vmatpush1.msra.mxu0 %v1145
        %1241 = vmatprep.subr.mxu0 %v1150
        %1242 = vmatpush1.msra.mxu0 %v1149
        %1243 = vmatprep.subr.mxu0 %v1154
        %1244 = vmatpush1.msra.mxu0 %v1153
        %1245 = vmatprep.subr.mxu0 %v1158
        %1246 = vmatpush1.msra.mxu0 %v1157
        %1247 = vmatprep.subr.mxu0 %v1162
        %1248 = vmatpush1.msra.mxu0 %v1161
        %1249 = vmatprep.subr.mxu0 %v1166
        %1250 = vmatpush1.msra.mxu0 %v1165
        %1251 = vmatprep.subr.mxu0 %v1170
        %1252 = vmatpush1.msra.mxu0 %v1169
        %1253 = vmatprep.subr.mxu0 %v1174
        %1254 = vmatpush1.msra.mxu0 %v1173
        %1255 = vmatprep.subr.mxu0 %v1178
        %1256 = vmatpush1.msra.mxu0 %v1177
        %1257 = vmatprep.subr.mxu0 %v1182
        %1258 = vmatpush1.msra.mxu0 %v1181
        %1259 = vmatprep.subr.mxu0 %v1186
        %1260 = vmatpush1.msra.mxu0 %v1185
        %1261 = vmatprep.subr.mxu0 %v1190
        %1262 = vmatpush1.msra.mxu0 %v1189
        %1263 = vmatprep.subr.mxu0 %v1194
        %1264 = vmatpush1.msra.mxu0 %v1193
        %1265 = vmatprep.subr.mxu0 %v1198
        %1266 = vmatpush1.msra.mxu0 %v1197
        %1267 = vmatprep.subr.mxu0 %v1202
        %1268 = vmatpush1.msra.mxu0 %v1201
        %1269 = vmatprep.mubr.f32.mxu0 %v372
        %1270 = vmatmul.mubr.f32.gmra.mrb[0].mxu0 %v371
        %v1271 = vpop.f32.mrb[0].mxu0
        %v1272 = vadd.f32 0.0, %v1271
        %v1273 = vpop.f32.mrb[0].mxu0
        %v1274 = vadd.f32 0.0, %v1273
        %1275 = vmatprep.mubr.f32.mxu0 %v374
        %1276 = vmatmul.mubr.f32.gmra.mrb[0].mxu0 %v373
        %v1277 = vpop.f32.mrb[0].mxu0
        %v1278 = vadd.f32 0.0, %v1277
        %v1279 = vpop.f32.mrb[0].mxu0
        %v1280 = vadd.f32 0.0, %v1279
        %1281 = vmatprep.mubr.f32.mxu0 %v376
        %1282 = vmatmul.mubr.f32.gmra.mrb[0].mxu0 %v375
        %v1283 = vpop.f32.mrb[0].mxu0
        %v1284 = vadd.f32 0.0, %v1283
        %v1285 = vpop.f32.mrb[0].mxu0
        %v1286 = vadd.f32 0.0, %v1285
        %1287 = vmatprep.mubr.f32.mxu0 %v378
        %1288 = vmatmul.mubr.f32.gmra.mrb[0].mxu0 %v377
        %v1289 = vpop.f32.mrb[0].mxu0
        %v1290 = vadd.f32 0.0, %v1289
        %v1291 = vpop.f32.mrb[0].mxu0
        %v1292 = vadd.f32 0.0, %v1291
        %1293 = vmatprep.mubr.f32.mxu0 %v380
        %1294 = vmatmul.mubr.f32.gmra.mrb[0].mxu0 %v379
        %v1295 = vpop.f32.mrb[0].mxu0
        %v1296 = vadd.f32 0.0, %v1295
        %v1297 = vpop.f32.mrb[0].mxu0
        %v1298 = vadd.f32 0.0, %v1297
        %1299 = vmatprep.mubr.f32.mxu0 %v382
        %1300 = vmatmul.mubr.f32.gmra.mrb[0].mxu0 %v381
        %v1301 = vpop.f32.mrb[0].mxu0
        %v1302 = vadd.f32 0.0, %v1301
        %v1303 = vpop.f32.mrb[0].mxu0
        %v1304 = vadd.f32 0.0, %v1303
        %1305 = vmatprep.mubr.f32.mxu0 %v384
        %1306 = vmatmul.mubr.f32.gmra.mrb[0].mxu0 %v383
        %v1307 = vpop.f32.mrb[0].mxu0
        %v1308 = vadd.f32 0.0, %v1307
        %v1309 = vpop.f32.mrb[0].mxu0
        %v1310 = vadd.f32 0.0, %v1309
        %1311 = vmatprep.mubr.f32.mxu0 %v386
        %1312 = vmatmul.mubr.f32.gmra.mrb[0].mxu0 %v385
        %v1313 = vpop.f32.mrb[0].mxu0
        %v1314 = vadd.f32 0.0, %v1313
        %v1315 = vpop.f32.mrb[0].mxu0
        %v1316 = vadd.f32 0.0, %v1315
        %1317 = vmatprep.mubr.f32.mxu0 %v388
        %1318 = vmatmul.mubr.f32.gmra.mrb[0].mxu0 %v387
        %v1319 = vpop.f32.mrb[0].mxu0
        %v1320 = vadd.f32 0.0, %v1319
        %v1321 = vpop.f32.mrb[0].mxu0
        %v1322 = vadd.f32 0.0, %v1321
        %1323 = vmatprep.mubr.f32.mxu0 %v390
        %1324 = vmatmul.mubr.f32.gmra.mrb[0].mxu0 %v389
        %v1325 = vpop.f32.mrb[0].mxu0
        %v1326 = vadd.f32 0.0, %v1325
        %v1327 = vpop.f32.mrb[0].mxu0
        %v1328 = vadd.f32 0.0, %v1327
        %1329 = vmatprep.mubr.f32.mxu0 %v392
        %1330 = vmatmul.mubr.f32.gmra.mrb[0].mxu0 %v391
        %v1331 = vpop.f32.mrb[0].mxu0
        %v1332 = vadd.f32 0.0, %v1331
        %v1333 = vpop.f32.mrb[0].mxu0
        %v1334 = vadd.f32 0.0, %v1333
        %1335 = vmatprep.mubr.f32.mxu0 %v394
        %1336 = vmatmul.mubr.f32.gmra.mrb[0].mxu0 %v393
        %v1337 = vpop.f32.mrb[0].mxu0
        %v1338 = vadd.f32 0.0, %v1337
        %v1339 = vpop.f32.mrb[0].mxu0
        %v1340 = vadd.f32 0.0, %v1339
        %1341 = vmatprep.mubr.f32.mxu0 %v396
        %1342 = vmatmul.mubr.f32.gmra.mrb[0].mxu0 %v395
        %v1343 = vpop.f32.mrb[0].mxu0
        %v1344 = vadd.f32 0.0, %v1343
        %v1345 = vpop.f32.mrb[0].mxu0
        %v1346 = vadd.f32 0.0, %v1345
        %1347 = vmatprep.mubr.f32.mxu0 %v398
        %1348 = vmatmul.mubr.f32.gmra.mrb[0].mxu0 %v397
        %v1349 = vpop.f32.mrb[0].mxu0
        %v1350 = vadd.f32 0.0, %v1349
        %v1351 = vpop.f32.mrb[0].mxu0
        %v1352 = vadd.f32 0.0, %v1351
        %1353 = vmatprep.mubr.f32.mxu0 %v400
        %1354 = vmatmul.mubr.f32.gmra.mrb[0].mxu0 %v399
        %v1355 = vpop.f32.mrb[0].mxu0
        %v1356 = vadd.f32 0.0, %v1355
        %v1357 = vpop.f32.mrb[0].mxu0
        %v1358 = vadd.f32 0.0, %v1357
        %1359 = vmatprep.mubr.f32.mxu0 %v402
        %1360 = vmatmul.mubr.f32.gmra.mrb[0].mxu0 %v401
        %v1361 = vpop.f32.mrb[0].mxu0
        %v1362 = vadd.f32 0.0, %v1361
        %v1363 = vpop.f32.mrb[0].mxu0
        %v1364 = vadd.f32 0.0, %v1363
        %1365 = vmatprep.mubr.f32.mxu0 %v404
        %1366 = vmatmul.mubr.f32.gmra.mrb[0].mxu0 %v403
        %v1367 = vpop.f32.mrb[0].mxu0
        %v1368 = vadd.f32 0.0, %v1367
        %v1369 = vpop.f32.mrb[0].mxu0
        %v1370 = vadd.f32 0.0, %v1369
        %1371 = vmatprep.mubr.f32.mxu0 %v406
        %1372 = vmatmul.mubr.f32.gmra.mrb[0].mxu0 %v405
        %v1373 = vpop.f32.mrb[0].mxu0
        %v1374 = vadd.f32 0.0, %v1373
        %v1375 = vpop.f32.mrb[0].mxu0
        %v1376 = vadd.f32 0.0, %v1375
        %1377 = vmatprep.mubr.f32.mxu0 %v408
        %1378 = vmatmul.mubr.f32.gmra.mrb[0].mxu0 %v407
        %v1379 = vpop.f32.mrb[0].mxu0
        %v1380 = vadd.f32 0.0, %v1379
        %v1381 = vpop.f32.mrb[0].mxu0
        %v1382 = vadd.f32 0.0, %v1381
        %1383 = vmatprep.mubr.f32.mxu0 %v410
        %1384 = vmatmul.mubr.f32.gmra.mrb[0].mxu0 %v409
        %v1385 = vpop.f32.mrb[0].mxu0
        %v1386 = vadd.f32 0.0, %v1385
        %v1387 = vpop.f32.mrb[0].mxu0
        %v1388 = vadd.f32 0.0, %v1387
        %1389 = vmatprep.mubr.f32.mxu0 %v412
        %1390 = vmatmul.mubr.f32.gmra.mrb[0].mxu0 %v411
        %v1391 = vpop.f32.mrb[0].mxu0
        %v1392 = vadd.f32 0.0, %v1391
        %v1393 = vpop.f32.mrb[0].mxu0
        %v1394 = vadd.f32 0.0, %v1393
        %1395 = vmatprep.mubr.f32.mxu0 %v414
        %1396 = vmatmul.mubr.f32.gmra.mrb[0].mxu0 %v413
        %v1397 = vpop.f32.mrb[0].mxu0
        %v1398 = vadd.f32 0.0, %v1397
        %v1399 = vpop.f32.mrb[0].mxu0
        %v1400 = vadd.f32 0.0, %v1399
        %1401 = vmatprep.mubr.f32.mxu0 %v416
        %1402 = vmatmul.mubr.f32.gmra.mrb[0].mxu0 %v415
        %v1403 = vpop.f32.mrb[0].mxu0
        %v1404 = vadd.f32 0.0, %v1403
        %v1405 = vpop.f32.mrb[0].mxu0
        %v1406 = vadd.f32 0.0, %v1405
        %1407 = vmatprep.mubr.f32.mxu0 %v418
        %1408 = vmatmul.mubr.f32.gmra.mrb[0].mxu0 %v417
        %v1409 = vpop.f32.mrb[0].mxu0
        %v1410 = vadd.f32 0.0, %v1409
        %v1411 = vpop.f32.mrb[0].mxu0
        %v1412 = vadd.f32 0.0, %v1411
        %1413 = vmatprep.mubr.f32.mxu0 %v420
        %1414 = vmatmul.mubr.f32.gmra.mrb[0].mxu0 %v419
        %v1415 = vpop.f32.mrb[0].mxu0
        %v1416 = vadd.f32 0.0, %v1415
        %v1417 = vpop.f32.mrb[0].mxu0
        %v1418 = vadd.f32 0.0, %v1417
        %1419 = vmatprep.mubr.f32.mxu0 %v422
        %1420 = vmatmul.mubr.f32.gmra.mrb[0].mxu0 %v421
        %v1421 = vpop.f32.mrb[0].mxu0
        %v1422 = vadd.f32 0.0, %v1421
        %v1423 = vpop.f32.mrb[0].mxu0
        %v1424 = vadd.f32 0.0, %v1423
        %1425 = vmatprep.mubr.f32.mxu0 %v424
        %1426 = vmatmul.mubr.f32.gmra.mrb[0].mxu0 %v423
        %v1427 = vpop.f32.mrb[0].mxu0
        %v1428 = vadd.f32 0.0, %v1427
        %v1429 = vpop.f32.mrb[0].mxu0
        %v1430 = vadd.f32 0.0, %v1429
        %1431 = vmatprep.mubr.f32.mxu0 %v426
        %1432 = vmatmul.mubr.f32.gmra.mrb[0].mxu0 %v425
        %v1433 = vpop.f32.mrb[0].mxu0
        %v1434 = vadd.f32 0.0, %v1433
        %v1435 = vpop.f32.mrb[0].mxu0
        %v1436 = vadd.f32 0.0, %v1435
        %1437 = vmatprep.mubr.f32.mxu0 %v428
        %1438 = vmatmul.mubr.f32.gmra.mrb[0].mxu0 %v427
        %v1439 = vpop.f32.mrb[0].mxu0
        %v1440 = vadd.f32 0.0, %v1439
        %v1441 = vpop.f32.mrb[0].mxu0
        %v1442 = vadd.f32 0.0, %v1441
        %1443 = vmatprep.mubr.f32.mxu0 %v430
        %1444 = vmatmul.mubr.f32.gmra.mrb[0].mxu0 %v429
        %v1445 = vpop.f32.mrb[0].mxu0
        %v1446 = vadd.f32 0.0, %v1445
        %v1447 = vpop.f32.mrb[0].mxu0
        %v1448 = vadd.f32 0.0, %v1447
        %1449 = vmatprep.mubr.f32.mxu0 %v432
        %1450 = vmatmul.mubr.f32.gmra.mrb[0].mxu0 %v431
        %v1451 = vpop.f32.mrb[0].mxu0
        %v1452 = vadd.f32 0.0, %v1451
        %v1453 = vpop.f32.mrb[0].mxu0
        %v1454 = vadd.f32 0.0, %v1453
        %1455 = vmatprep.mubr.f32.mxu0 %v434
        %1456 = vmatmul.mubr.f32.gmra.mrb[0].mxu0 %v433
        %v1457 = vpop.f32.mrb[0].mxu0
        %v1458 = vadd.f32 0.0, %v1457
        %v1459 = vpop.f32.mrb[0].mxu0
        %v1460 = vadd.f32 0.0, %v1459
        %1461 = vdwg.mxu0
        %1462 = vmatprep.subr.mxu0 %v1080
        %1463 = vmatpush1.msra.mxu0 %v1079
        %1464 = vmatprep.subr.mxu0 %v1084
        %1465 = vmatpush1.msra.mxu0 %v1083
        %1466 = vmatprep.subr.mxu0 %v1088
        %1467 = vmatpush1.msra.mxu0 %v1087
        %1468 = vmatprep.subr.mxu0 %v1092
        %1469 = vmatpush1.msra.mxu0 %v1091
        %1470 = vmatprep.subr.mxu0 %v1096
        %1471 = vmatpush1.msra.mxu0 %v1095
        %1472 = vmatprep.subr.mxu0 %v1100
        %1473 = vmatpush1.msra.mxu0 %v1099
        %1474 = vmatprep.subr.mxu0 %v1104
        %1475 = vmatpush1.msra.mxu0 %v1103
        %1476 = vmatprep.subr.mxu0 %v1108
        %1477 = vmatpush1.msra.mxu0 %v1107
        %1478 = vmatprep.subr.mxu0 %v1112
        %1479 = vmatpush1.msra.mxu0 %v1111
        %1480 = vmatprep.subr.mxu0 %v1116
        %1481 = vmatpush1.msra.mxu0 %v1115
        %1482 = vmatprep.subr.mxu0 %v1120
        %1483 = vmatpush1.msra.mxu0 %v1119
        %1484 = vmatprep.subr.mxu0 %v1124
        %1485 = vmatpush1.msra.mxu0 %v1123
        %1486 = vmatprep.subr.mxu0 %v1128
        %1487 = vmatpush1.msra.mxu0 %v1127
        %1488 = vmatprep.subr.mxu0 %v1132
        %1489 = vmatpush1.msra.mxu0 %v1131
        %1490 = vmatprep.subr.mxu0 %v1136
        %1491 = vmatpush1.msra.mxu0 %v1135
        %1492 = vmatprep.subr.mxu0 %v1140
        %1493 = vmatpush1.msra.mxu0 %v1139
        %1494 = vmatprep.subr.mxu0 %v1144
        %1495 = vmatpush1.msra.mxu0 %v1143
        %1496 = vmatprep.subr.mxu0 %v1148
        %1497 = vmatpush1.msra.mxu0 %v1147
        %1498 = vmatprep.subr.mxu0 %v1152
        %1499 = vmatpush1.msra.mxu0 %v1151
        %1500 = vmatprep.subr.mxu0 %v1156
        %1501 = vmatpush1.msra.mxu0 %v1155
        %1502 = vmatprep.subr.mxu0 %v1160
        %1503 = vmatpush1.msra.mxu0 %v1159
        %1504 = vmatprep.subr.mxu0 %v1164
        %1505 = vmatpush1.msra.mxu0 %v1163
        %1506 = vmatprep.subr.mxu0 %v1168
        %1507 = vmatpush1.msra.mxu0 %v1167
        %1508 = vmatprep.subr.mxu0 %v1172
        %1509 = vmatpush1.msra.mxu0 %v1171
        %1510 = vmatprep.subr.mxu0 %v1176
        %1511 = vmatpush1.msra.mxu0 %v1175
        %1512 = vmatprep.subr.mxu0 %v1180
        %1513 = vmatpush1.msra.mxu0 %v1179
        %1514 = vmatprep.subr.mxu0 %v1184
        %1515 = vmatpush1.msra.mxu0 %v1183
        %1516 = vmatprep.subr.mxu0 %v1188
        %1517 = vmatpush1.msra.mxu0 %v1187
        %1518 = vmatprep.subr.mxu0 %v1192
        %1519 = vmatpush1.msra.mxu0 %v1191
        %1520 = vmatprep.subr.mxu0 %v1196
        %1521 = vmatpush1.msra.mxu0 %v1195
        %1522 = vmatprep.subr.mxu0 %v1200
        %1523 = vmatpush1.msra.mxu0 %v1199
        %1524 = vmatprep.subr.mxu0 %v1204
        %1525 = vmatpush1.msra.mxu0 %v1203
        %1526 = vmatprep.mubr.f32.mxu0 %v372
        %1527 = vmatmul.mubr.f32.gmra.mrb[0].mxu0 %v371
        %v1528 = vpop.f32.mrb[0].mxu0
        %v1529 = vadd.f32 0.0, %v1528
        %v1530 = vpop.f32.mrb[0].mxu0
        %v1531 = vadd.f32 0.0, %v1530
        %1532 = vmatprep.mubr.f32.mxu0 %v374
        %1533 = vmatmul.mubr.f32.gmra.mrb[0].mxu0 %v373
        %v1534 = vpop.f32.mrb[0].mxu0
        %v1535 = vadd.f32 0.0, %v1534
        %v1536 = vpop.f32.mrb[0].mxu0
        %v1537 = vadd.f32 0.0, %v1536
        %1538 = vmatprep.mubr.f32.mxu0 %v376
        %1539 = vmatmul.mubr.f32.gmra.mrb[0].mxu0 %v375
        %v1540 = vpop.f32.mrb[0].mxu0
        %v1541 = vadd.f32 0.0, %v1540
        %v1542 = vpop.f32.mrb[0].mxu0
        %v1543 = vadd.f32 0.0, %v1542
        %1544 = vmatprep.mubr.f32.mxu0 %v378
        %1545 = vmatmul.mubr.f32.gmra.mrb[0].mxu0 %v377
        %v1546 = vpop.f32.mrb[0].mxu0
        %v1547 = vadd.f32 0.0, %v1546
        %v1548 = vpop.f32.mrb[0].mxu0
        %v1549 = vadd.f32 0.0, %v1548
        %1550 = vmatprep.mubr.f32.mxu0 %v380
        %1551 = vmatmul.mubr.f32.gmra.mrb[0].mxu0 %v379
        %v1552 = vpop.f32.mrb[0].mxu0
        %v1553 = vadd.f32 0.0, %v1552
        %v1554 = vpop.f32.mrb[0].mxu0
        %v1555 = vadd.f32 0.0, %v1554
        %1556 = vmatprep.mubr.f32.mxu0 %v382
        %1557 = vmatmul.mubr.f32.gmra.mrb[0].mxu0 %v381
        %v1558 = vpop.f32.mrb[0].mxu0
        %v1559 = vadd.f32 0.0, %v1558
        %v1560 = vpop.f32.mrb[0].mxu0
        %v1561 = vadd.f32 0.0, %v1560
        %1562 = vmatprep.mubr.f32.mxu0 %v384
        %1563 = vmatmul.mubr.f32.gmra.mrb[0].mxu0 %v383
        %v1564 = vpop.f32.mrb[0].mxu0
        %v1565 = vadd.f32 0.0, %v1564
        %v1566 = vpop.f32.mrb[0].mxu0
        %v1567 = vadd.f32 0.0, %v1566
        %1568 = vmatprep.mubr.f32.mxu0 %v386
        %1569 = vmatmul.mubr.f32.gmra.mrb[0].mxu0 %v385
        %v1570 = vpop.f32.mrb[0].mxu0
        %v1571 = vadd.f32 0.0, %v1570
        %v1572 = vpop.f32.mrb[0].mxu0
        %v1573 = vadd.f32 0.0, %v1572
        %1574 = vmatprep.mubr.f32.mxu0 %v388
        %1575 = vmatmul.mubr.f32.gmra.mrb[0].mxu0 %v387
        %v1576 = vpop.f32.mrb[0].mxu0
        %v1577 = vadd.f32 0.0, %v1576
        %v1578 = vpop.f32.mrb[0].mxu0
        %v1579 = vadd.f32 0.0, %v1578
        %1580 = vmatprep.mubr.f32.mxu0 %v390
        %1581 = vmatmul.mubr.f32.gmra.mrb[0].mxu0 %v389
        %v1582 = vpop.f32.mrb[0].mxu0
        %v1583 = vadd.f32 0.0, %v1582
        %v1584 = vpop.f32.mrb[0].mxu0
        %v1585 = vadd.f32 0.0, %v1584
        %1586 = vmatprep.mubr.f32.mxu0 %v392
        %1587 = vmatmul.mubr.f32.gmra.mrb[0].mxu0 %v391
        %v1588 = vpop.f32.mrb[0].mxu0
        %v1589 = vadd.f32 0.0, %v1588
        %v1590 = vpop.f32.mrb[0].mxu0
        %v1591 = vadd.f32 0.0, %v1590
        %1592 = vmatprep.mubr.f32.mxu0 %v394
        %1593 = vmatmul.mubr.f32.gmra.mrb[0].mxu0 %v393
        %v1594 = vpop.f32.mrb[0].mxu0
        %v1595 = vadd.f32 0.0, %v1594
        %v1596 = vpop.f32.mrb[0].mxu0
        %v1597 = vadd.f32 0.0, %v1596
        %1598 = vmatprep.mubr.f32.mxu0 %v396
        %1599 = vmatmul.mubr.f32.gmra.mrb[0].mxu0 %v395
        %v1600 = vpop.f32.mrb[0].mxu0
        %v1601 = vadd.f32 0.0, %v1600
        %v1602 = vpop.f32.mrb[0].mxu0
        %v1603 = vadd.f32 0.0, %v1602
        %1604 = vmatprep.mubr.f32.mxu0 %v398
        %1605 = vmatmul.mubr.f32.gmra.mrb[0].mxu0 %v397
        %v1606 = vpop.f32.mrb[0].mxu0
        %v1607 = vadd.f32 0.0, %v1606
        %v1608 = vpop.f32.mrb[0].mxu0
        %v1609 = vadd.f32 0.0, %v1608
        %1610 = vmatprep.mubr.f32.mxu0 %v400
        %1611 = vmatmul.mubr.f32.gmra.mrb[0].mxu0 %v399
        %v1612 = vpop.f32.mrb[0].mxu0
        %v1613 = vadd.f32 0.0, %v1612
        %v1614 = vpop.f32.mrb[0].mxu0
        %v1615 = vadd.f32 0.0, %v1614
        %1616 = vmatprep.mubr.f32.mxu0 %v402
        %1617 = vmatmul.mubr.f32.gmra.mrb[0].mxu0 %v401
        %v1618 = vpop.f32.mrb[0].mxu0
        %v1619 = vadd.f32 0.0, %v1618
        %v1620 = vpop.f32.mrb[0].mxu0
        %v1621 = vadd.f32 0.0, %v1620
        %1622 = vmatprep.mubr.f32.mxu0 %v404
        %1623 = vmatmul.mubr.f32.gmra.mrb[0].mxu0 %v403
        %v1624 = vpop.f32.mrb[0].mxu0
        %v1625 = vadd.f32 0.0, %v1624
        %v1626 = vpop.f32.mrb[0].mxu0
        %v1627 = vadd.f32 0.0, %v1626
        %1628 = vmatprep.mubr.f32.mxu0 %v406
        %1629 = vmatmul.mubr.f32.gmra.mrb[0].mxu0 %v405
        %v1630 = vpop.f32.mrb[0].mxu0
        %v1631 = vadd.f32 0.0, %v1630
        %v1632 = vpop.f32.mrb[0].mxu0
        %v1633 = vadd.f32 0.0, %v1632
        %1634 = vmatprep.mubr.f32.mxu0 %v408
        %1635 = vmatmul.mubr.f32.gmra.mrb[0].mxu0 %v407
        %v1636 = vpop.f32.mrb[0].mxu0
        %v1637 = vadd.f32 0.0, %v1636
        %v1638 = vpop.f32.mrb[0].mxu0
        %v1639 = vadd.f32 0.0, %v1638
        %1640 = vmatprep.mubr.f32.mxu0 %v410
        %1641 = vmatmul.mubr.f32.gmra.mrb[0].mxu0 %v409
        %v1642 = vpop.f32.mrb[0].mxu0
        %v1643 = vadd.f32 0.0, %v1642
        %v1644 = vpop.f32.mrb[0].mxu0
        %v1645 = vadd.f32 0.0, %v1644
        %1646 = vmatprep.mubr.f32.mxu0 %v412
        %1647 = vmatmul.mubr.f32.gmra.mrb[0].mxu0 %v411
        %v1648 = vpop.f32.mrb[0].mxu0
        %v1649 = vadd.f32 0.0, %v1648
        %v1650 = vpop.f32.mrb[0].mxu0
        %v1651 = vadd.f32 0.0, %v1650
        %1652 = vmatprep.mubr.f32.mxu0 %v414
        %1653 = vmatmul.mubr.f32.gmra.mrb[0].mxu0 %v413
        %v1654 = vpop.f32.mrb[0].mxu0
        %v1655 = vadd.f32 0.0, %v1654
        %v1656 = vpop.f32.mrb[0].mxu0
        %v1657 = vadd.f32 0.0, %v1656
        %1658 = vmatprep.mubr.f32.mxu0 %v416
        %1659 = vmatmul.mubr.f32.gmra.mrb[0].mxu0 %v415
        %v1660 = vpop.f32.mrb[0].mxu0
        %v1661 = vadd.f32 0.0, %v1660
        %v1662 = vpop.f32.mrb[0].mxu0
        %v1663 = vadd.f32 0.0, %v1662
        %1664 = vmatprep.mubr.f32.mxu0 %v418
        %1665 = vmatmul.mubr.f32.gmra.mrb[0].mxu0 %v417
        %v1666 = vpop.f32.mrb[0].mxu0
        %v1667 = vadd.f32 0.0, %v1666
        %v1668 = vpop.f32.mrb[0].mxu0
        %v1669 = vadd.f32 0.0, %v1668
        %1670 = vmatprep.mubr.f32.mxu0 %v420
        %1671 = vmatmul.mubr.f32.gmra.mrb[0].mxu0 %v419
        %v1672 = vpop.f32.mrb[0].mxu0
        %v1673 = vadd.f32 0.0, %v1672
        %v1674 = vpop.f32.mrb[0].mxu0
        %v1675 = vadd.f32 0.0, %v1674
        %1676 = vmatprep.mubr.f32.mxu0 %v422
        %1677 = vmatmul.mubr.f32.gmra.mrb[0].mxu0 %v421
        %v1678 = vpop.f32.mrb[0].mxu0
        %v1679 = vadd.f32 0.0, %v1678
        %v1680 = vpop.f32.mrb[0].mxu0
        %v1681 = vadd.f32 0.0, %v1680
        %1682 = vmatprep.mubr.f32.mxu0 %v424
        %1683 = vmatmul.mubr.f32.gmra.mrb[0].mxu0 %v423
        %v1684 = vpop.f32.mrb[0].mxu0
        %v1685 = vadd.f32 0.0, %v1684
        %v1686 = vpop.f32.mrb[0].mxu0
        %v1687 = vadd.f32 0.0, %v1686
        %1688 = vmatprep.mubr.f32.mxu0 %v426
        %1689 = vmatmul.mubr.f32.gmra.mrb[0].mxu0 %v425
        %v1690 = vpop.f32.mrb[0].mxu0
        %v1691 = vadd.f32 0.0, %v1690
        %v1692 = vpop.f32.mrb[0].mxu0
        %v1693 = vadd.f32 0.0, %v1692
        %1694 = vmatprep.mubr.f32.mxu0 %v428
        %1695 = vmatmul.mubr.f32.gmra.mrb[0].mxu0 %v427
        %v1696 = vpop.f32.mrb[0].mxu0
        %v1697 = vadd.f32 0.0, %v1696
        %v1698 = vpop.f32.mrb[0].mxu0
        %v1699 = vadd.f32 0.0, %v1698
        %1700 = vmatprep.mubr.f32.mxu0 %v430
        %1701 = vmatmul.mubr.f32.gmra.mrb[0].mxu0 %v429
        %v1702 = vpop.f32.mrb[0].mxu0
        %v1703 = vadd.f32 0.0, %v1702
        %v1704 = vpop.f32.mrb[0].mxu0
        %v1705 = vadd.f32 0.0, %v1704
        %1706 = vmatprep.mubr.f32.mxu0 %v432
        %1707 = vmatmul.mubr.f32.gmra.mrb[0].mxu0 %v431
        %v1708 = vpop.f32.mrb[0].mxu0
        %v1709 = vadd.f32 0.0, %v1708
        %v1710 = vpop.f32.mrb[0].mxu0
        %v1711 = vadd.f32 0.0, %v1710
        %1712 = vmatprep.mubr.f32.mxu0 %v434
        %1713 = vmatmul.mubr.f32.gmra.mrb[0].mxu0 %v433
        %v1714 = vpop.f32.mrb[0].mxu0
        %v1715 = vadd.f32 0.0, %v1714
        %v1716 = vpop.f32.mrb[0].mxu0
        %v1717 = vadd.f32 0.0, %v1716
        %1718 = vdwg.mxu0
        %v1719 = vsub.f32 0.0, %v630
        %v1720 = vsub.f32 0.0, %v632
        %v1721 = vsub.f32 0.0, %v887
        %v1722 = vsub.f32 0.0, %v889
        %v1723 = vsub.f32 0.0, %v636
        %v1724 = vsub.f32 0.0, %v638
        %v1725 = vsub.f32 0.0, %v893
        %v1726 = vsub.f32 0.0, %v895
        %v1727 = vsub.f32 0.0, %v642
        %v1728 = vsub.f32 0.0, %v644
        %v1729 = vsub.f32 0.0, %v899
        %v1730 = vsub.f32 0.0, %v901
        %v1731 = vsub.f32 0.0, %v648
        %v1732 = vsub.f32 0.0, %v650
        %v1733 = vsub.f32 0.0, %v905
        %v1734 = vsub.f32 0.0, %v907
        %v1735 = vsub.f32 0.0, %v654
        %v1736 = vsub.f32 0.0, %v656
        %v1737 = vsub.f32 0.0, %v911
        %v1738 = vsub.f32 0.0, %v913
        %v1739 = vsub.f32 0.0, %v660
        %v1740 = vsub.f32 0.0, %v662
        %v1741 = vsub.f32 0.0, %v917
        %v1742 = vsub.f32 0.0, %v919
        %v1743 = vsub.f32 0.0, %v666
        %v1744 = vsub.f32 0.0, %v668
        %v1745 = vsub.f32 0.0, %v923
        %v1746 = vsub.f32 0.0, %v925
        %v1747 = vsub.f32 0.0, %v672
        %v1748 = vsub.f32 0.0, %v674
        %v1749 = vsub.f32 0.0, %v929
        %v1750 = vsub.f32 0.0, %v931
        %v1751 = vsub.f32 0.0, %v678
        %v1752 = vsub.f32 0.0, %v680
        %v1753 = vsub.f32 0.0, %v935
        %v1754 = vsub.f32 0.0, %v937
        %v1755 = vsub.f32 0.0, %v684
        %v1756 = vsub.f32 0.0, %v686
        %v1757 = vsub.f32 0.0, %v941
        %v1758 = vsub.f32 0.0, %v943
        %v1759 = vsub.f32 0.0, %v690
        %v1760 = vsub.f32 0.0, %v692
        %v1761 = vsub.f32 0.0, %v947
        %v1762 = vsub.f32 0.0, %v949
        %v1763 = vsub.f32 0.0, %v696
        %v1764 = vsub.f32 0.0, %v698
        %v1765 = vsub.f32 0.0, %v953
        %v1766 = vsub.f32 0.0, %v955
        %v1767 = vsub.f32 0.0, %v702
        %v1768 = vsub.f32 0.0, %v704
        %v1769 = vsub.f32 0.0, %v959
        %v1770 = vsub.f32 0.0, %v961
        %v1771 = vsub.f32 0.0, %v708
        %v1772 = vsub.f32 0.0, %v710
        %v1773 = vsub.f32 0.0, %v965
        %v1774 = vsub.f32 0.0, %v967
        %v1775 = vsub.f32 0.0, %v714
        %v1776 = vsub.f32 0.0, %v716
        %v1777 = vsub.f32 0.0, %v971
        %v1778 = vsub.f32 0.0, %v973
        %v1779 = vsub.f32 0.0, %v720
        %v1780 = vsub.f32 0.0, %v722
        %v1781 = vsub.f32 0.0, %v977
        %v1782 = vsub.f32 0.0, %v979
        %v1783 = vsub.f32 0.0, %v726
        %v1784 = vsub.f32 0.0, %v728
        %v1785 = vsub.f32 0.0, %v983
        %v1786 = vsub.f32 0.0, %v985
        %v1787 = vsub.f32 0.0, %v732
        %v1788 = vsub.f32 0.0, %v734
        %v1789 = vsub.f32 0.0, %v989
        %v1790 = vsub.f32 0.0, %v991
        %v1791 = vsub.f32 0.0, %v738
        %v1792 = vsub.f32 0.0, %v740
        %v1793 = vsub.f32 0.0, %v995
        %v1794 = vsub.f32 0.0, %v997
        %v1795 = vsub.f32 0.0, %v744
        %v1796 = vsub.f32 0.0, %v746
        %v1797 = vsub.f32 0.0, %v1001
        %v1798 = vsub.f32 0.0, %v1003
        %v1799 = vsub.f32 0.0, %v750
        %v1800 = vsub.f32 0.0, %v752
        %v1801 = vsub.f32 0.0, %v1007
        %v1802 = vsub.f32 0.0, %v1009
        %v1803 = vsub.f32 0.0, %v756
        %v1804 = vsub.f32 0.0, %v758
        %v1805 = vsub.f32 0.0, %v1013
        %v1806 = vsub.f32 0.0, %v1015
        %v1807 = vsub.f32 0.0, %v762
        %v1808 = vsub.f32 0.0, %v764
        %v1809 = vsub.f32 0.0, %v1019
        %v1810 = vsub.f32 0.0, %v1021
        %v1811 = vsub.f32 0.0, %v768
        %v1812 = vsub.f32 0.0, %v770
        %v1813 = vsub.f32 0.0, %v1025
        %v1814 = vsub.f32 0.0, %v1027
        %v1815 = vsub.f32 0.0, %v774
        %v1816 = vsub.f32 0.0, %v776
        %v1817 = vsub.f32 0.0, %v1031
        %v1818 = vsub.f32 0.0, %v1033
        %v1819 = vsub.f32 0.0, %v780
        %v1820 = vsub.f32 0.0, %v782
        %v1821 = vsub.f32 0.0, %v1037
        %v1822 = vsub.f32 0.0, %v1039
        %v1823 = vsub.f32 0.0, %v786
        %v1824 = vsub.f32 0.0, %v788
        %v1825 = vsub.f32 0.0, %v1043
        %v1826 = vsub.f32 0.0, %v1045
        %v1827 = vsub.f32 0.0, %v792
        %v1828 = vsub.f32 0.0, %v794
        %v1829 = vsub.f32 0.0, %v1049
        %v1830 = vsub.f32 0.0, %v1051
        %v1831 = vsub.f32 0.0, %v798
        %v1832 = vsub.f32 0.0, %v800
        %v1833 = vsub.f32 0.0, %v1055
        %v1834 = vsub.f32 0.0, %v1057
        %v1835 = vsub.f32 0.0, %v804
        %v1836 = vsub.f32 0.0, %v806
        %v1837 = vsub.f32 0.0, %v1061
        %v1838 = vsub.f32 0.0, %v1063
        %v1839 = vsub.f32 0.0, %v810
        %v1840 = vsub.f32 0.0, %v812
        %v1841 = vsub.f32 0.0, %v1067
        %v1842 = vsub.f32 0.0, %v1069
        %v1843 = vsub.f32 0.0, %v816
        %v1844 = vsub.f32 0.0, %v818
        %v1845 = vsub.f32 0.0, %v1073
        %v1846 = vsub.f32 0.0, %v1075
        %v1847 = vmul.f32 %v1719, 1.442695
        %v1848 = vpow.pop %v1847
        %v1849 = vmul.f32 %v1720, 1.442695
        %v1850 = vpow.pop %v1849
        %v1851 = vmul.f32 %v1721, 1.442695
        %v1852 = vpow.pop %v1851
        %v1853 = vmul.f32 %v1722, 1.442695
        %v1854 = vpow.pop %v1853
        %v1855 = vmul.f32 %v1723, 1.442695
        %v1856 = vpow.pop %v1855
        %v1857 = vmul.f32 %v1724, 1.442695
        %v1858 = vpow.pop %v1857
        %v1859 = vmul.f32 %v1725, 1.442695
        %v1860 = vpow.pop %v1859
        %v1861 = vmul.f32 %v1726, 1.442695
        %v1862 = vpow.pop %v1861
        %v1863 = vmul.f32 %v1727, 1.442695
        %v1864 = vpow.pop %v1863
        %v1865 = vmul.f32 %v1728, 1.442695
        %v1866 = vpow.pop %v1865
        %v1867 = vmul.f32 %v1729, 1.442695
        %v1868 = vpow.pop %v1867
        %v1869 = vmul.f32 %v1730, 1.442695
        %v1870 = vpow.pop %v1869
        %v1871 = vmul.f32 %v1731, 1.442695
        %v1872 = vpow.pop %v1871
        %v1873 = vmul.f32 %v1732, 1.442695
        %v1874 = vpow.pop %v1873
        %v1875 = vmul.f32 %v1733, 1.442695
        %v1876 = vpow.pop %v1875
        %v1877 = vmul.f32 %v1734, 1.442695
        %v1878 = vpow.pop %v1877
        %v1879 = vmul.f32 %v1735, 1.442695
        %v1880 = vpow.pop %v1879
        %v1881 = vmul.f32 %v1736, 1.442695
        %v1882 = vpow.pop %v1881
        %v1883 = vmul.f32 %v1737, 1.442695
        %v1884 = vpow.pop %v1883
        %v1885 = vmul.f32 %v1738, 1.442695
        %v1886 = vpow.pop %v1885
        %v1887 = vmul.f32 %v1739, 1.442695
        %v1888 = vpow.pop %v1887
        %v1889 = vmul.f32 %v1740, 1.442695
        %v1890 = vpow.pop %v1889
        %v1891 = vmul.f32 %v1741, 1.442695
        %v1892 = vpow.pop %v1891
        %v1893 = vmul.f32 %v1742, 1.442695
        %v1894 = vpow.pop %v1893
        %v1895 = vmul.f32 %v1743, 1.442695
        %v1896 = vpow.pop %v1895
        %v1897 = vmul.f32 %v1744, 1.442695
        %v1898 = vpow.pop %v1897
        %v1899 = vmul.f32 %v1745, 1.442695
        %v1900 = vpow.pop %v1899
        %v1901 = vmul.f32 %v1746, 1.442695
        %v1902 = vpow.pop %v1901
        %v1903 = vmul.f32 %v1747, 1.442695
        %v1904 = vpow.pop %v1903
        %v1905 = vmul.f32 %v1748, 1.442695
        %v1906 = vpow.pop %v1905
        %v1907 = vmul.f32 %v1749, 1.442695
        %v1908 = vpow.pop %v1907
        %v1909 = vmul.f32 %v1750, 1.442695
        %v1910 = vpow.pop %v1909
        %v1911 = vmul.f32 %v1751, 1.442695
        %v1912 = vpow.pop %v1911
        %v1913 = vmul.f32 %v1752, 1.442695
        %v1914 = vpow.pop %v1913
        %v1915 = vmul.f32 %v1753, 1.442695
        %v1916 = vpow.pop %v1915
        %v1917 = vmul.f32 %v1754, 1.442695
        %v1918 = vpow.pop %v1917
        %v1919 = vmul.f32 %v1755, 1.442695
        %v1920 = vpow.pop %v1919
        %v1921 = vmul.f32 %v1756, 1.442695
        %v1922 = vpow.pop %v1921
        %v1923 = vmul.f32 %v1757, 1.442695
        %v1924 = vpow.pop %v1923
        %v1925 = vmul.f32 %v1758, 1.442695
        %v1926 = vpow.pop %v1925
        %v1927 = vmul.f32 %v1759, 1.442695
        %v1928 = vpow.pop %v1927
        %v1929 = vmul.f32 %v1760, 1.442695
        %v1930 = vpow.pop %v1929
        %v1931 = vmul.f32 %v1761, 1.442695
        %v1932 = vpow.pop %v1931
        %v1933 = vmul.f32 %v1762, 1.442695
        %v1934 = vpow.pop %v1933
        %v1935 = vmul.f32 %v1763, 1.442695
        %v1936 = vpow.pop %v1935
        %v1937 = vmul.f32 %v1764, 1.442695
        %v1938 = vpow.pop %v1937
        %v1939 = vmul.f32 %v1765, 1.442695
        %v1940 = vpow.pop %v1939
        %v1941 = vmul.f32 %v1766, 1.442695
        %v1942 = vpow.pop %v1941
        %v1943 = vmul.f32 %v1767, 1.442695
        %v1944 = vpow.pop %v1943
        %v1945 = vmul.f32 %v1768, 1.442695
        %v1946 = vpow.pop %v1945
        %v1947 = vmul.f32 %v1769, 1.442695
        %v1948 = vpow.pop %v1947
        %v1949 = vmul.f32 %v1770, 1.442695
        %v1950 = vpow.pop %v1949
        %v1951 = vmul.f32 %v1771, 1.442695
        %v1952 = vpow.pop %v1951
        %v1953 = vmul.f32 %v1772, 1.442695
        %v1954 = vpow.pop %v1953
        %v1955 = vmul.f32 %v1773, 1.442695
        %v1956 = vpow.pop %v1955
        %v1957 = vmul.f32 %v1774, 1.442695
        %v1958 = vpow.pop %v1957
        %v1959 = vmul.f32 %v1775, 1.442695
        %v1960 = vpow.pop %v1959
        %v1961 = vmul.f32 %v1776, 1.442695
        %v1962 = vpow.pop %v1961
        %v1963 = vmul.f32 %v1777, 1.442695
        %v1964 = vpow.pop %v1963
        %v1965 = vmul.f32 %v1778, 1.442695
        %v1966 = vpow.pop %v1965
        %v1967 = vmul.f32 %v1779, 1.442695
        %v1968 = vpow.pop %v1967
        %v1969 = vmul.f32 %v1780, 1.442695
        %v1970 = vpow.pop %v1969
        %v1971 = vmul.f32 %v1781, 1.442695
        %v1972 = vpow.pop %v1971
        %v1973 = vmul.f32 %v1782, 1.442695
        %v1974 = vpow.pop %v1973
        %v1975 = vmul.f32 %v1783, 1.442695
        %v1976 = vpow.pop %v1975
        %v1977 = vmul.f32 %v1784, 1.442695
        %v1978 = vpow.pop %v1977
        %v1979 = vmul.f32 %v1785, 1.442695
        %v1980 = vpow.pop %v1979
        %v1981 = vmul.f32 %v1786, 1.442695
        %v1982 = vpow.pop %v1981
        %v1983 = vmul.f32 %v1787, 1.442695
        %v1984 = vpow.pop %v1983
        %v1985 = vmul.f32 %v1788, 1.442695
        %v1986 = vpow.pop %v1985
        %v1987 = vmul.f32 %v1789, 1.442695
        %v1988 = vpow.pop %v1987
        %v1989 = vmul.f32 %v1790, 1.442695
        %v1990 = vpow.pop %v1989
        %v1991 = vmul.f32 %v1791, 1.442695
        %v1992 = vpow.pop %v1991
        %v1993 = vmul.f32 %v1792, 1.442695
        %v1994 = vpow.pop %v1993
        %v1995 = vmul.f32 %v1793, 1.442695
        %v1996 = vpow.pop %v1995
        %v1997 = vmul.f32 %v1794, 1.442695
        %v1998 = vpow.pop %v1997
        %v1999 = vmul.f32 %v1795, 1.442695
        %v2000 = vpow.pop %v1999
        %v2001 = vmul.f32 %v1796, 1.442695
        %v2002 = vpow.pop %v2001
        %v2003 = vmul.f32 %v1797, 1.442695
        %v2004 = vpow.pop %v2003
        %v2005 = vmul.f32 %v1798, 1.442695
        %v2006 = vpow.pop %v2005
        %v2007 = vmul.f32 %v1799, 1.442695
        %v2008 = vpow.pop %v2007
        %v2009 = vmul.f32 %v1800, 1.442695
        %v2010 = vpow.pop %v2009
        %v2011 = vmul.f32 %v1801, 1.442695
        %v2012 = vpow.pop %v2011
        %v2013 = vmul.f32 %v1802, 1.442695
        %v2014 = vpow.pop %v2013
        %v2015 = vmul.f32 %v1803, 1.442695
        %v2016 = vpow.pop %v2015
        %v2017 = vmul.f32 %v1804, 1.442695
        %v2018 = vpow.pop %v2017
        %v2019 = vmul.f32 %v1805, 1.442695
        %v2020 = vpow.pop %v2019
        %v2021 = vmul.f32 %v1806, 1.442695
        %v2022 = vpow.pop %v2021
        %v2023 = vmul.f32 %v1807, 1.442695
        %v2024 = vpow.pop %v2023
        %v2025 = vmul.f32 %v1808, 1.442695
        %v2026 = vpow.pop %v2025
        %v2027 = vmul.f32 %v1809, 1.442695
        %v2028 = vpow.pop %v2027
        %v2029 = vmul.f32 %v1810, 1.442695
        %v2030 = vpow.pop %v2029
        %v2031 = vmul.f32 %v1811, 1.442695
        %v2032 = vpow.pop %v2031
        %v2033 = vmul.f32 %v1812, 1.442695
        %v2034 = vpow.pop %v2033
        %v2035 = vmul.f32 %v1813, 1.442695
        %v2036 = vpow.pop %v2035
        %v2037 = vmul.f32 %v1814, 1.442695
        %v2038 = vpow.pop %v2037
        %v2039 = vmul.f32 %v1815, 1.442695
        %v2040 = vpow.pop %v2039
        %v2041 = vmul.f32 %v1816, 1.442695
        %v2042 = vpow.pop %v2041
        %v2043 = vmul.f32 %v1817, 1.442695
        %v2044 = vpow.pop %v2043
        %v2045 = vmul.f32 %v1818, 1.442695
        %v2046 = vpow.pop %v2045
        %v2047 = vmul.f32 %v1819, 1.442695
        %v2048 = vpow.pop %v2047
        %v2049 = vmul.f32 %v1820, 1.442695
        %v2050 = vpow.pop %v2049
        %v2051 = vmul.f32 %v1821, 1.442695
        %v2052 = vpow.pop %v2051
        %v2053 = vmul.f32 %v1822, 1.442695
        %v2054 = vpow.pop %v2053
        %v2055 = vmul.f32 %v1823, 1.442695
        %v2056 = vpow.pop %v2055
        %v2057 = vmul.f32 %v1824, 1.442695
        %v2058 = vpow.pop %v2057
        %v2059 = vmul.f32 %v1825, 1.442695
        %v2060 = vpow.pop %v2059
        %v2061 = vmul.f32 %v1826, 1.442695
        %v2062 = vpow.pop %v2061
        %v2063 = vmul.f32 %v1827, 1.442695
        %v2064 = vpow.pop %v2063
        %v2065 = vmul.f32 %v1828, 1.442695
        %v2066 = vpow.pop %v2065
        %v2067 = vmul.f32 %v1829, 1.442695
        %v2068 = vpow.pop %v2067
        %v2069 = vmul.f32 %v1830, 1.442695
        %v2070 = vpow.pop %v2069
        %v2071 = vmul.f32 %v1831, 1.442695
        %v2072 = vpow.pop %v2071
        %v2073 = vmul.f32 %v1832, 1.442695
        %v2074 = vpow.pop %v2073
        %v2075 = vmul.f32 %v1833, 1.442695
        %v2076 = vpow.pop %v2075
        %v2077 = vmul.f32 %v1834, 1.442695
        %v2078 = vpow.pop %v2077
        %v2079 = vmul.f32 %v1835, 1.442695
        %v2080 = vpow.pop %v2079
        %v2081 = vmul.f32 %v1836, 1.442695
        %v2082 = vpow.pop %v2081
        %v2083 = vmul.f32 %v1837, 1.442695
        %v2084 = vpow.pop %v2083
        %v2085 = vmul.f32 %v1838, 1.442695
        %v2086 = vpow.pop %v2085
        %v2087 = vmul.f32 %v1839, 1.442695
        %v2088 = vpow.pop %v2087
        %v2089 = vmul.f32 %v1840, 1.442695
        %v2090 = vpow.pop %v2089
        %v2091 = vmul.f32 %v1841, 1.442695
        %v2092 = vpow.pop %v2091
        %v2093 = vmul.f32 %v1842, 1.442695
        %v2094 = vpow.pop %v2093
        %v2095 = vmul.f32 %v1843, 1.442695
        %v2096 = vpow.pop %v2095
        %v2097 = vmul.f32 %v1844, 1.442695
        %v2098 = vpow.pop %v2097
        %v2099 = vmul.f32 %v1845, 1.442695
        %v2100 = vpow.pop %v2099
        %v2101 = vmul.f32 %v1846, 1.442695
        %v2102 = vpow.pop %v2101
        %v2103 = vadd.f32 %v1848, 1.0
        %v2104 = vadd.f32 %v1850, 1.0
        %v2105 = vadd.f32 %v1852, 1.0
        %v2106 = vadd.f32 %v1854, 1.0
        %v2107 = vadd.f32 %v1856, 1.0
        %v2108 = vadd.f32 %v1858, 1.0
        %v2109 = vadd.f32 %v1860, 1.0
        %v2110 = vadd.f32 %v1862, 1.0
        %v2111 = vadd.f32 %v1864, 1.0
        %v2112 = vadd.f32 %v1866, 1.0
        %v2113 = vadd.f32 %v1868, 1.0
        %v2114 = vadd.f32 %v1870, 1.0
        %v2115 = vadd.f32 %v1872, 1.0
        %v2116 = vadd.f32 %v1874, 1.0
        %v2117 = vadd.f32 %v1876, 1.0
        %v2118 = vadd.f32 %v1878, 1.0
        %v2119 = vadd.f32 %v1880, 1.0
        %v2120 = vadd.f32 %v1882, 1.0
        %v2121 = vadd.f32 %v1884, 1.0
        %v2122 = vadd.f32 %v1886, 1.0
        %v2123 = vadd.f32 %v1888, 1.0
        %v2124 = vadd.f32 %v1890, 1.0
        %v2125 = vadd.f32 %v1892, 1.0
        %v2126 = vadd.f32 %v1894, 1.0
        %v2127 = vadd.f32 %v1896, 1.0
        %v2128 = vadd.f32 %v1898, 1.0
        %v2129 = vadd.f32 %v1900, 1.0
        %v2130 = vadd.f32 %v1902, 1.0
        %v2131 = vadd.f32 %v1904, 1.0
        %v2132 = vadd.f32 %v1906, 1.0
        %v2133 = vadd.f32 %v1908, 1.0
        %v2134 = vadd.f32 %v1910, 1.0
        %v2135 = vadd.f32 %v1912, 1.0
        %v2136 = vadd.f32 %v1914, 1.0
        %v2137 = vadd.f32 %v1916, 1.0
        %v2138 = vadd.f32 %v1918, 1.0
        %v2139 = vadd.f32 %v1920, 1.0
        %v2140 = vadd.f32 %v1922, 1.0
        %v2141 = vadd.f32 %v1924, 1.0
        %v2142 = vadd.f32 %v1926, 1.0
        %v2143 = vadd.f32 %v1928, 1.0
        %v2144 = vadd.f32 %v1930, 1.0
        %v2145 = vadd.f32 %v1932, 1.0
        %v2146 = vadd.f32 %v1934, 1.0
        %v2147 = vadd.f32 %v1936, 1.0
        %v2148 = vadd.f32 %v1938, 1.0
        %v2149 = vadd.f32 %v1940, 1.0
        %v2150 = vadd.f32 %v1942, 1.0
        %v2151 = vadd.f32 %v1944, 1.0
        %v2152 = vadd.f32 %v1946, 1.0
        %v2153 = vadd.f32 %v1948, 1.0
        %v2154 = vadd.f32 %v1950, 1.0
        %v2155 = vadd.f32 %v1952, 1.0
        %v2156 = vadd.f32 %v1954, 1.0
        %v2157 = vadd.f32 %v1956, 1.0
        %v2158 = vadd.f32 %v1958, 1.0
        %v2159 = vadd.f32 %v1960, 1.0
        %v2160 = vadd.f32 %v1962, 1.0
        %v2161 = vadd.f32 %v1964, 1.0
        %v2162 = vadd.f32 %v1966, 1.0
        %v2163 = vadd.f32 %v1968, 1.0
        %v2164 = vadd.f32 %v1970, 1.0
        %v2165 = vadd.f32 %v1972, 1.0
        %v2166 = vadd.f32 %v1974, 1.0
        %v2167 = vadd.f32 %v1976, 1.0
        %v2168 = vadd.f32 %v1978, 1.0
        %v2169 = vadd.f32 %v1980, 1.0
        %v2170 = vadd.f32 %v1982, 1.0
        %v2171 = vadd.f32 %v1984, 1.0
        %v2172 = vadd.f32 %v1986, 1.0
        %v2173 = vadd.f32 %v1988, 1.0
        %v2174 = vadd.f32 %v1990, 1.0
        %v2175 = vadd.f32 %v1992, 1.0
        %v2176 = vadd.f32 %v1994, 1.0
        %v2177 = vadd.f32 %v1996, 1.0
        %v2178 = vadd.f32 %v1998, 1.0
        %v2179 = vadd.f32 %v2000, 1.0
        %v2180 = vadd.f32 %v2002, 1.0
        %v2181 = vadd.f32 %v2004, 1.0
        %v2182 = vadd.f32 %v2006, 1.0
        %v2183 = vadd.f32 %v2008, 1.0
        %v2184 = vadd.f32 %v2010, 1.0
        %v2185 = vadd.f32 %v2012, 1.0
        %v2186 = vadd.f32 %v2014, 1.0
        %v2187 = vadd.f32 %v2016, 1.0
        %v2188 = vadd.f32 %v2018, 1.0
        %v2189 = vadd.f32 %v2020, 1.0
        %v2190 = vadd.f32 %v2022, 1.0
        %v2191 = vadd.f32 %v2024, 1.0
        %v2192 = vadd.f32 %v2026, 1.0
        %v2193 = vadd.f32 %v2028, 1.0
        %v2194 = vadd.f32 %v2030, 1.0
        %v2195 = vadd.f32 %v2032, 1.0
        %v2196 = vadd.f32 %v2034, 1.0
        %v2197 = vadd.f32 %v2036, 1.0
        %v2198 = vadd.f32 %v2038, 1.0
        %v2199 = vadd.f32 %v2040, 1.0
        %v2200 = vadd.f32 %v2042, 1.0
        %v2201 = vadd.f32 %v2044, 1.0
        %v2202 = vadd.f32 %v2046, 1.0
        %v2203 = vadd.f32 %v2048, 1.0
        %v2204 = vadd.f32 %v2050, 1.0
        %v2205 = vadd.f32 %v2052, 1.0
        %v2206 = vadd.f32 %v2054, 1.0
        %v2207 = vadd.f32 %v2056, 1.0
        %v2208 = vadd.f32 %v2058, 1.0
        %v2209 = vadd.f32 %v2060, 1.0
        %v2210 = vadd.f32 %v2062, 1.0
        %v2211 = vadd.f32 %v2064, 1.0
        %v2212 = vadd.f32 %v2066, 1.0
        %v2213 = vadd.f32 %v2068, 1.0
        %v2214 = vadd.f32 %v2070, 1.0
        %v2215 = vadd.f32 %v2072, 1.0
        %v2216 = vadd.f32 %v2074, 1.0
        %v2217 = vadd.f32 %v2076, 1.0
        %v2218 = vadd.f32 %v2078, 1.0
        %v2219 = vadd.f32 %v2080, 1.0
        %v2220 = vadd.f32 %v2082, 1.0
        %v2221 = vadd.f32 %v2084, 1.0
        %v2222 = vadd.f32 %v2086, 1.0
        %v2223 = vadd.f32 %v2088, 1.0
        %v2224 = vadd.f32 %v2090, 1.0
        %v2225 = vadd.f32 %v2092, 1.0
        %v2226 = vadd.f32 %v2094, 1.0
        %v2227 = vadd.f32 %v2096, 1.0
        %v2228 = vadd.f32 %v2098, 1.0
        %v2229 = vadd.f32 %v2100, 1.0
        %v2230 = vadd.f32 %v2102, 1.0
        %v2231 = vrcp.pop %v2103
        %v2232 = vmul.f32 1.0, %v2231
        %v2233 = vrcp.pop %v2104
        %v2234 = vmul.f32 1.0, %v2233
        %v2235 = vrcp.pop %v2105
        %v2236 = vmul.f32 1.0, %v2235
        %v2237 = vrcp.pop %v2106
        %v2238 = vmul.f32 1.0, %v2237
        %v2239 = vrcp.pop %v2107
        %v2240 = vmul.f32 1.0, %v2239
        %v2241 = vrcp.pop %v2108
        %v2242 = vmul.f32 1.0, %v2241
        %v2243 = vrcp.pop %v2109
        %v2244 = vmul.f32 1.0, %v2243
        %v2245 = vrcp.pop %v2110
        %v2246 = vmul.f32 1.0, %v2245
        %v2247 = vrcp.pop %v2111
        %v2248 = vmul.f32 1.0, %v2247
        %v2249 = vrcp.pop %v2112
        %v2250 = vmul.f32 1.0, %v2249
        %v2251 = vrcp.pop %v2113
        %v2252 = vmul.f32 1.0, %v2251
        %v2253 = vrcp.pop %v2114
        %v2254 = vmul.f32 1.0, %v2253
        %v2255 = vrcp.pop %v2115
        %v2256 = vmul.f32 1.0, %v2255
        %v2257 = vrcp.pop %v2116
        %v2258 = vmul.f32 1.0, %v2257
        %v2259 = vrcp.pop %v2117
        %v2260 = vmul.f32 1.0, %v2259
        %v2261 = vrcp.pop %v2118
        %v2262 = vmul.f32 1.0, %v2261
        %v2263 = vrcp.pop %v2119
        %v2264 = vmul.f32 1.0, %v2263
        %v2265 = vrcp.pop %v2120
        %v2266 = vmul.f32 1.0, %v2265
        %v2267 = vrcp.pop %v2121
        %v2268 = vmul.f32 1.0, %v2267
        %v2269 = vrcp.pop %v2122
        %v2270 = vmul.f32 1.0, %v2269
        %v2271 = vrcp.pop %v2123
        %v2272 = vmul.f32 1.0, %v2271
        %v2273 = vrcp.pop %v2124
        %v2274 = vmul.f32 1.0, %v2273
        %v2275 = vrcp.pop %v2125
        %v2276 = vmul.f32 1.0, %v2275
        %v2277 = vrcp.pop %v2126
        %v2278 = vmul.f32 1.0, %v2277
        %v2279 = vrcp.pop %v2127
        %v2280 = vmul.f32 1.0, %v2279
        %v2281 = vrcp.pop %v2128
        %v2282 = vmul.f32 1.0, %v2281
        %v2283 = vrcp.pop %v2129
        %v2284 = vmul.f32 1.0, %v2283
        %v2285 = vrcp.pop %v2130
        %v2286 = vmul.f32 1.0, %v2285
        %v2287 = vrcp.pop %v2131
        %v2288 = vmul.f32 1.0, %v2287
        %v2289 = vrcp.pop %v2132
        %v2290 = vmul.f32 1.0, %v2289
        %v2291 = vrcp.pop %v2133
        %v2292 = vmul.f32 1.0, %v2291
        %v2293 = vrcp.pop %v2134
        %v2294 = vmul.f32 1.0, %v2293
        %v2295 = vrcp.pop %v2135
        %v2296 = vmul.f32 1.0, %v2295
        %v2297 = vrcp.pop %v2136
        %v2298 = vmul.f32 1.0, %v2297
        %v2299 = vrcp.pop %v2137
        %v2300 = vmul.f32 1.0, %v2299
        %v2301 = vrcp.pop %v2138
        %v2302 = vmul.f32 1.0, %v2301
        %v2303 = vrcp.pop %v2139
        %v2304 = vmul.f32 1.0, %v2303
        %v2305 = vrcp.pop %v2140
        %v2306 = vmul.f32 1.0, %v2305
        %v2307 = vrcp.pop %v2141
        %v2308 = vmul.f32 1.0, %v2307
        %v2309 = vrcp.pop %v2142
        %v2310 = vmul.f32 1.0, %v2309
        %v2311 = vrcp.pop %v2143
        %v2312 = vmul.f32 1.0, %v2311
        %v2313 = vrcp.pop %v2144
        %v2314 = vmul.f32 1.0, %v2313
        %v2315 = vrcp.pop %v2145
        %v2316 = vmul.f32 1.0, %v2315
        %v2317 = vrcp.pop %v2146
        %v2318 = vmul.f32 1.0, %v2317
        %v2319 = vrcp.pop %v2147
        %v2320 = vmul.f32 1.0, %v2319
        %v2321 = vrcp.pop %v2148
        %v2322 = vmul.f32 1.0, %v2321
        %v2323 = vrcp.pop %v2149
        %v2324 = vmul.f32 1.0, %v2323
        %v2325 = vrcp.pop %v2150
        %v2326 = vmul.f32 1.0, %v2325
        %v2327 = vrcp.pop %v2151
        %v2328 = vmul.f32 1.0, %v2327
        %v2329 = vrcp.pop %v2152
        %v2330 = vmul.f32 1.0, %v2329
        %v2331 = vrcp.pop %v2153
        %v2332 = vmul.f32 1.0, %v2331
        %v2333 = vrcp.pop %v2154
        %v2334 = vmul.f32 1.0, %v2333
        %v2335 = vrcp.pop %v2155
        %v2336 = vmul.f32 1.0, %v2335
        %v2337 = vrcp.pop %v2156
        %v2338 = vmul.f32 1.0, %v2337
        %v2339 = vrcp.pop %v2157
        %v2340 = vmul.f32 1.0, %v2339
        %v2341 = vrcp.pop %v2158
        %v2342 = vmul.f32 1.0, %v2341
        %v2343 = vrcp.pop %v2159
        %v2344 = vmul.f32 1.0, %v2343
        %v2345 = vrcp.pop %v2160
        %v2346 = vmul.f32 1.0, %v2345
        %v2347 = vrcp.pop %v2161
        %v2348 = vmul.f32 1.0, %v2347
        %v2349 = vrcp.pop %v2162
        %v2350 = vmul.f32 1.0, %v2349
        %v2351 = vrcp.pop %v2163
        %v2352 = vmul.f32 1.0, %v2351
        %v2353 = vrcp.pop %v2164
        %v2354 = vmul.f32 1.0, %v2353
        %v2355 = vrcp.pop %v2165
        %v2356 = vmul.f32 1.0, %v2355
        %v2357 = vrcp.pop %v2166
        %v2358 = vmul.f32 1.0, %v2357
        %v2359 = vrcp.pop %v2167
        %v2360 = vmul.f32 1.0, %v2359
        %v2361 = vrcp.pop %v2168
        %v2362 = vmul.f32 1.0, %v2361
        %v2363 = vrcp.pop %v2169
        %v2364 = vmul.f32 1.0, %v2363
        %v2365 = vrcp.pop %v2170
        %v2366 = vmul.f32 1.0, %v2365
        %v2367 = vrcp.pop %v2171
        %v2368 = vmul.f32 1.0, %v2367
        %v2369 = vrcp.pop %v2172
        %v2370 = vmul.f32 1.0, %v2369
        %v2371 = vrcp.pop %v2173
        %v2372 = vmul.f32 1.0, %v2371
        %v2373 = vrcp.pop %v2174
        %v2374 = vmul.f32 1.0, %v2373
        %v2375 = vrcp.pop %v2175
        %v2376 = vmul.f32 1.0, %v2375
        %v2377 = vrcp.pop %v2176
        %v2378 = vmul.f32 1.0, %v2377
        %v2379 = vrcp.pop %v2177
        %v2380 = vmul.f32 1.0, %v2379
        %v2381 = vrcp.pop %v2178
        %v2382 = vmul.f32 1.0, %v2381
        %v2383 = vrcp.pop %v2179
        %v2384 = vmul.f32 1.0, %v2383
        %v2385 = vrcp.pop %v2180
        %v2386 = vmul.f32 1.0, %v2385
        %v2387 = vrcp.pop %v2181
        %v2388 = vmul.f32 1.0, %v2387
        %v2389 = vrcp.pop %v2182
        %v2390 = vmul.f32 1.0, %v2389
        %v2391 = vrcp.pop %v2183
        %v2392 = vmul.f32 1.0, %v2391
        %v2393 = vrcp.pop %v2184
        %v2394 = vmul.f32 1.0, %v2393
        %v2395 = vrcp.pop %v2185
        %v2396 = vmul.f32 1.0, %v2395
        %v2397 = vrcp.pop %v2186
        %v2398 = vmul.f32 1.0, %v2397
        %v2399 = vrcp.pop %v2187
        %v2400 = vmul.f32 1.0, %v2399
        %v2401 = vrcp.pop %v2188
        %v2402 = vmul.f32 1.0, %v2401
        %v2403 = vrcp.pop %v2189
        %v2404 = vmul.f32 1.0, %v2403
        %v2405 = vrcp.pop %v2190
        %v2406 = vmul.f32 1.0, %v2405
        %v2407 = vrcp.pop %v2191
        %v2408 = vmul.f32 1.0, %v2407
        %v2409 = vrcp.pop %v2192
        %v2410 = vmul.f32 1.0, %v2409
        %v2411 = vrcp.pop %v2193
        %v2412 = vmul.f32 1.0, %v2411
        %v2413 = vrcp.pop %v2194
        %v2414 = vmul.f32 1.0, %v2413
        %v2415 = vrcp.pop %v2195
        %v2416 = vmul.f32 1.0, %v2415
        %v2417 = vrcp.pop %v2196
        %v2418 = vmul.f32 1.0, %v2417
        %v2419 = vrcp.pop %v2197
        %v2420 = vmul.f32 1.0, %v2419
        %v2421 = vrcp.pop %v2198
        %v2422 = vmul.f32 1.0, %v2421
        %v2423 = vrcp.pop %v2199
        %v2424 = vmul.f32 1.0, %v2423
        %v2425 = vrcp.pop %v2200
        %v2426 = vmul.f32 1.0, %v2425
        %v2427 = vrcp.pop %v2201
        %v2428 = vmul.f32 1.0, %v2427
        %v2429 = vrcp.pop %v2202
        %v2430 = vmul.f32 1.0, %v2429
        %v2431 = vrcp.pop %v2203
        %v2432 = vmul.f32 1.0, %v2431
        %v2433 = vrcp.pop %v2204
        %v2434 = vmul.f32 1.0, %v2433
        %v2435 = vrcp.pop %v2205
        %v2436 = vmul.f32 1.0, %v2435
        %v2437 = vrcp.pop %v2206
        %v2438 = vmul.f32 1.0, %v2437
        %v2439 = vrcp.pop %v2207
        %v2440 = vmul.f32 1.0, %v2439
        %v2441 = vrcp.pop %v2208
        %v2442 = vmul.f32 1.0, %v2441
        %v2443 = vrcp.pop %v2209
        %v2444 = vmul.f32 1.0, %v2443
        %v2445 = vrcp.pop %v2210
        %v2446 = vmul.f32 1.0, %v2445
        %v2447 = vrcp.pop %v2211
        %v2448 = vmul.f32 1.0, %v2447
        %v2449 = vrcp.pop %v2212
        %v2450 = vmul.f32 1.0, %v2449
        %v2451 = vrcp.pop %v2213
        %v2452 = vmul.f32 1.0, %v2451
        %v2453 = vrcp.pop %v2214
        %v2454 = vmul.f32 1.0, %v2453
        %v2455 = vrcp.pop %v2215
        %v2456 = vmul.f32 1.0, %v2455
        %v2457 = vrcp.pop %v2216
        %v2458 = vmul.f32 1.0, %v2457
        %v2459 = vrcp.pop %v2217
        %v2460 = vmul.f32 1.0, %v2459
        %v2461 = vrcp.pop %v2218
        %v2462 = vmul.f32 1.0, %v2461
        %v2463 = vrcp.pop %v2219
        %v2464 = vmul.f32 1.0, %v2463
        %v2465 = vrcp.pop %v2220
        %v2466 = vmul.f32 1.0, %v2465
        %v2467 = vrcp.pop %v2221
        %v2468 = vmul.f32 1.0, %v2467
        %v2469 = vrcp.pop %v2222
        %v2470 = vmul.f32 1.0, %v2469
        %v2471 = vrcp.pop %v2223
        %v2472 = vmul.f32 1.0, %v2471
        %v2473 = vrcp.pop %v2224
        %v2474 = vmul.f32 1.0, %v2473
        %v2475 = vrcp.pop %v2225
        %v2476 = vmul.f32 1.0, %v2475
        %v2477 = vrcp.pop %v2226
        %v2478 = vmul.f32 1.0, %v2477
        %v2479 = vrcp.pop %v2227
        %v2480 = vmul.f32 1.0, %v2479
        %v2481 = vrcp.pop %v2228
        %v2482 = vmul.f32 1.0, %v2481
        %v2483 = vrcp.pop %v2229
        %v2484 = vmul.f32 1.0, %v2483
        %v2485 = vrcp.pop %v2230
        %v2486 = vmul.f32 1.0, %v2485
        %v2487 = vmul.f32 %v630, %v2232
        %v2488 = vmul.f32 %v632, %v2234
        %v2489 = vmul.f32 %v887, %v2236
        %v2490 = vmul.f32 %v889, %v2238
        %v2491 = vmul.f32 %v636, %v2240
        %v2492 = vmul.f32 %v638, %v2242
        %v2493 = vmul.f32 %v893, %v2244
        %v2494 = vmul.f32 %v895, %v2246
        %v2495 = vmul.f32 %v642, %v2248
        %v2496 = vmul.f32 %v644, %v2250
        %v2497 = vmul.f32 %v899, %v2252
        %v2498 = vmul.f32 %v901, %v2254
        %v2499 = vmul.f32 %v648, %v2256
        %v2500 = vmul.f32 %v650, %v2258
        %v2501 = vmul.f32 %v905, %v2260
        %v2502 = vmul.f32 %v907, %v2262
        %v2503 = vmul.f32 %v654, %v2264
        %v2504 = vmul.f32 %v656, %v2266
        %v2505 = vmul.f32 %v911, %v2268
        %v2506 = vmul.f32 %v913, %v2270
        %v2507 = vmul.f32 %v660, %v2272
        %v2508 = vmul.f32 %v662, %v2274
        %v2509 = vmul.f32 %v917, %v2276
        %v2510 = vmul.f32 %v919, %v2278
        %v2511 = vmul.f32 %v666, %v2280
        %v2512 = vmul.f32 %v668, %v2282
        %v2513 = vmul.f32 %v923, %v2284
        %v2514 = vmul.f32 %v925, %v2286
        %v2515 = vmul.f32 %v672, %v2288
        %v2516 = vmul.f32 %v674, %v2290
        %v2517 = vmul.f32 %v929, %v2292
        %v2518 = vmul.f32 %v931, %v2294
        %v2519 = vmul.f32 %v678, %v2296
        %v2520 = vmul.f32 %v680, %v2298
        %v2521 = vmul.f32 %v935, %v2300
        %v2522 = vmul.f32 %v937, %v2302
        %v2523 = vmul.f32 %v684, %v2304
        %v2524 = vmul.f32 %v686, %v2306
        %v2525 = vmul.f32 %v941, %v2308
        %v2526 = vmul.f32 %v943, %v2310
        %v2527 = vmul.f32 %v690, %v2312
        %v2528 = vmul.f32 %v692, %v2314
        %v2529 = vmul.f32 %v947, %v2316
        %v2530 = vmul.f32 %v949, %v2318
        %v2531 = vmul.f32 %v696, %v2320
        %v2532 = vmul.f32 %v698, %v2322
        %v2533 = vmul.f32 %v953, %v2324
        %v2534 = vmul.f32 %v955, %v2326
        %v2535 = vmul.f32 %v702, %v2328
        %v2536 = vmul.f32 %v704, %v2330
        %v2537 = vmul.f32 %v959, %v2332
        %v2538 = vmul.f32 %v961, %v2334
        %v2539 = vmul.f32 %v708, %v2336
        %v2540 = vmul.f32 %v710, %v2338
        %v2541 = vmul.f32 %v965, %v2340
        %v2542 = vmul.f32 %v967, %v2342
        %v2543 = vmul.f32 %v714, %v2344
        %v2544 = vmul.f32 %v716, %v2346
        %v2545 = vmul.f32 %v971, %v2348
        %v2546 = vmul.f32 %v973, %v2350
        %v2547 = vmul.f32 %v720, %v2352
        %v2548 = vmul.f32 %v722, %v2354
        %v2549 = vmul.f32 %v977, %v2356
        %v2550 = vmul.f32 %v979, %v2358
        %v2551 = vmul.f32 %v726, %v2360
        %v2552 = vmul.f32 %v728, %v2362
        %v2553 = vmul.f32 %v983, %v2364
        %v2554 = vmul.f32 %v985, %v2366
        %v2555 = vmul.f32 %v732, %v2368
        %v2556 = vmul.f32 %v734, %v2370
        %v2557 = vmul.f32 %v989, %v2372
        %v2558 = vmul.f32 %v991, %v2374
        %v2559 = vmul.f32 %v738, %v2376
        %v2560 = vmul.f32 %v740, %v2378
        %v2561 = vmul.f32 %v995, %v2380
        %v2562 = vmul.f32 %v997, %v2382
        %v2563 = vmul.f32 %v744, %v2384
        %v2564 = vmul.f32 %v746, %v2386
        %v2565 = vmul.f32 %v1001, %v2388
        %v2566 = vmul.f32 %v1003, %v2390
        %v2567 = vmul.f32 %v750, %v2392
        %v2568 = vmul.f32 %v752, %v2394
        %v2569 = vmul.f32 %v1007, %v2396
        %v2570 = vmul.f32 %v1009, %v2398
        %v2571 = vmul.f32 %v756, %v2400
        %v2572 = vmul.f32 %v758, %v2402
        %v2573 = vmul.f32 %v1013, %v2404
        %v2574 = vmul.f32 %v1015, %v2406
        %v2575 = vmul.f32 %v762, %v2408
        %v2576 = vmul.f32 %v764, %v2410
        %v2577 = vmul.f32 %v1019, %v2412
        %v2578 = vmul.f32 %v1021, %v2414
        %v2579 = vmul.f32 %v768, %v2416
        %v2580 = vmul.f32 %v770, %v2418
        %v2581 = vmul.f32 %v1025, %v2420
        %v2582 = vmul.f32 %v1027, %v2422
        %v2583 = vmul.f32 %v774, %v2424
        %v2584 = vmul.f32 %v776, %v2426
        %v2585 = vmul.f32 %v1031, %v2428
        %v2586 = vmul.f32 %v1033, %v2430
        %v2587 = vmul.f32 %v780, %v2432
        %v2588 = vmul.f32 %v782, %v2434
        %v2589 = vmul.f32 %v1037, %v2436
        %v2590 = vmul.f32 %v1039, %v2438
        %v2591 = vmul.f32 %v786, %v2440
        %v2592 = vmul.f32 %v788, %v2442
        %v2593 = vmul.f32 %v1043, %v2444
        %v2594 = vmul.f32 %v1045, %v2446
        %v2595 = vmul.f32 %v792, %v2448
        %v2596 = vmul.f32 %v794, %v2450
        %v2597 = vmul.f32 %v1049, %v2452
        %v2598 = vmul.f32 %v1051, %v2454
        %v2599 = vmul.f32 %v798, %v2456
        %v2600 = vmul.f32 %v800, %v2458
        %v2601 = vmul.f32 %v1055, %v2460
        %v2602 = vmul.f32 %v1057, %v2462
        %v2603 = vmul.f32 %v804, %v2464
        %v2604 = vmul.f32 %v806, %v2466
        %v2605 = vmul.f32 %v1061, %v2468
        %v2606 = vmul.f32 %v1063, %v2470
        %v2607 = vmul.f32 %v810, %v2472
        %v2608 = vmul.f32 %v812, %v2474
        %v2609 = vmul.f32 %v1067, %v2476
        %v2610 = vmul.f32 %v1069, %v2478
        %v2611 = vmul.f32 %v816, %v2480
        %v2612 = vmul.f32 %v818, %v2482
        %v2613 = vmul.f32 %v1073, %v2484
        %v2614 = vmul.f32 %v1075, %v2486
        %v2615 = vmul.f32 %v2487, %v1272
        %v2616 = vmul.f32 %v2488, %v1274
        %v2617 = vmul.f32 %v2489, %v1529
        %v2618 = vmul.f32 %v2490, %v1531
        %v2619 = vmul.f32 %v2491, %v1278
        %v2620 = vmul.f32 %v2492, %v1280
        %v2621 = vmul.f32 %v2493, %v1535
        %v2622 = vmul.f32 %v2494, %v1537
        %v2623 = vmul.f32 %v2495, %v1284
        %v2624 = vmul.f32 %v2496, %v1286
        %v2625 = vmul.f32 %v2497, %v1541
        %v2626 = vmul.f32 %v2498, %v1543
        %v2627 = vmul.f32 %v2499, %v1290
        %v2628 = vmul.f32 %v2500, %v1292
        %v2629 = vmul.f32 %v2501, %v1547
        %v2630 = vmul.f32 %v2502, %v1549
        %v2631 = vmul.f32 %v2503, %v1296
        %v2632 = vmul.f32 %v2504, %v1298
        %v2633 = vmul.f32 %v2505, %v1553
        %v2634 = vmul.f32 %v2506, %v1555
        %v2635 = vmul.f32 %v2507, %v1302
        %v2636 = vmul.f32 %v2508, %v1304
        %v2637 = vmul.f32 %v2509, %v1559
        %v2638 = vmul.f32 %v2510, %v1561
        %v2639 = vmul.f32 %v2511, %v1308
        %v2640 = vmul.f32 %v2512, %v1310
        %v2641 = vmul.f32 %v2513, %v1565
        %v2642 = vmul.f32 %v2514, %v1567
        %v2643 = vmul.f32 %v2515, %v1314
        %v2644 = vmul.f32 %v2516, %v1316
        %v2645 = vmul.f32 %v2517, %v1571
        %v2646 = vmul.f32 %v2518, %v1573
        %v2647 = vmul.f32 %v2519, %v1320
        %v2648 = vmul.f32 %v2520, %v1322
        %v2649 = vmul.f32 %v2521, %v1577
        %v2650 = vmul.f32 %v2522, %v1579
        %v2651 = vmul.f32 %v2523, %v1326
        %v2652 = vmul.f32 %v2524, %v1328
        %v2653 = vmul.f32 %v2525, %v1583
        %v2654 = vmul.f32 %v2526, %v1585
        %v2655 = vmul.f32 %v2527, %v1332
        %v2656 = vmul.f32 %v2528, %v1334
        %v2657 = vmul.f32 %v2529, %v1589
        %v2658 = vmul.f32 %v2530, %v1591
        %v2659 = vmul.f32 %v2531, %v1338
        %v2660 = vmul.f32 %v2532, %v1340
        %v2661 = vmul.f32 %v2533, %v1595
        %v2662 = vmul.f32 %v2534, %v1597
        %v2663 = vmul.f32 %v2535, %v1344
        %v2664 = vmul.f32 %v2536, %v1346
        %v2665 = vmul.f32 %v2537, %v1601
        %v2666 = vmul.f32 %v2538, %v1603
        %v2667 = vmul.f32 %v2539, %v1350
        %v2668 = vmul.f32 %v2540, %v1352
        %v2669 = vmul.f32 %v2541, %v1607
        %v2670 = vmul.f32 %v2542, %v1609
        %v2671 = vmul.f32 %v2543, %v1356
        %v2672 = vmul.f32 %v2544, %v1358
        %v2673 = vmul.f32 %v2545, %v1613
        %v2674 = vmul.f32 %v2546, %v1615
        %v2675 = vmul.f32 %v2547, %v1362
        %v2676 = vmul.f32 %v2548, %v1364
        %v2677 = vmul.f32 %v2549, %v1619
        %v2678 = vmul.f32 %v2550, %v1621
        %v2679 = vmul.f32 %v2551, %v1368
        %v2680 = vmul.f32 %v2552, %v1370
        %v2681 = vmul.f32 %v2553, %v1625
        %v2682 = vmul.f32 %v2554, %v1627
        %v2683 = vmul.f32 %v2555, %v1374
        %v2684 = vmul.f32 %v2556, %v1376
        %v2685 = vmul.f32 %v2557, %v1631
        %v2686 = vmul.f32 %v2558, %v1633
        %v2687 = vmul.f32 %v2559, %v1380
        %v2688 = vmul.f32 %v2560, %v1382
        %v2689 = vmul.f32 %v2561, %v1637
        %v2690 = vmul.f32 %v2562, %v1639
        %v2691 = vmul.f32 %v2563, %v1386
        %v2692 = vmul.f32 %v2564, %v1388
        %v2693 = vmul.f32 %v2565, %v1643
        %v2694 = vmul.f32 %v2566, %v1645
        %v2695 = vmul.f32 %v2567, %v1392
        %v2696 = vmul.f32 %v2568, %v1394
        %v2697 = vmul.f32 %v2569, %v1649
        %v2698 = vmul.f32 %v2570, %v1651
        %v2699 = vmul.f32 %v2571, %v1398
        %v2700 = vmul.f32 %v2572, %v1400
        %v2701 = vmul.f32 %v2573, %v1655
        %v2702 = vmul.f32 %v2574, %v1657
        %v2703 = vmul.f32 %v2575, %v1404
        %v2704 = vmul.f32 %v2576, %v1406
        %v2705 = vmul.f32 %v2577, %v1661
        %v2706 = vmul.f32 %v2578, %v1663
        %v2707 = vmul.f32 %v2579, %v1410
        %v2708 = vmul.f32 %v2580, %v1412
        %v2709 = vmul.f32 %v2581, %v1667
        %v2710 = vmul.f32 %v2582, %v1669
        %v2711 = vmul.f32 %v2583, %v1416
        %v2712 = vmul.f32 %v2584, %v1418
        %v2713 = vmul.f32 %v2585, %v1673
        %v2714 = vmul.f32 %v2586, %v1675
        %v2715 = vmul.f32 %v2587, %v1422
        %v2716 = vmul.f32 %v2588, %v1424
        %v2717 = vmul.f32 %v2589, %v1679
        %v2718 = vmul.f32 %v2590, %v1681
        %v2719 = vmul.f32 %v2591, %v1428
        %v2720 = vmul.f32 %v2592, %v1430
        %v2721 = vmul.f32 %v2593, %v1685
        %v2722 = vmul.f32 %v2594, %v1687
        %v2723 = vmul.f32 %v2595, %v1434
        %v2724 = vmul.f32 %v2596, %v1436
        %v2725 = vmul.f32 %v2597, %v1691
        %v2726 = vmul.f32 %v2598, %v1693
        %v2727 = vmul.f32 %v2599, %v1440
        %v2728 = vmul.f32 %v2600, %v1442
        %v2729 = vmul.f32 %v2601, %v1697
        %v2730 = vmul.f32 %v2602, %v1699
        %v2731 = vmul.f32 %v2603, %v1446
        %v2732 = vmul.f32 %v2604, %v1448
        %v2733 = vmul.f32 %v2605, %v1703
        %v2734 = vmul.f32 %v2606, %v1705
        %v2735 = vmul.f32 %v2607, %v1452
        %v2736 = vmul.f32 %v2608, %v1454
        %v2737 = vmul.f32 %v2609, %v1709
        %v2738 = vmul.f32 %v2610, %v1711
        %v2739 = vmul.f32 %v2611, %v1458
        %v2740 = vmul.f32 %v2612, %v1460
        %v2741 = vmul.f32 %v2613, %v1715
        %v2742 = vmul.f32 %v2614, %v1717
        %v2743 = vld [vmem:[#allocation2] sm:$0xff]
        %v2744 = vld [vmem:[#allocation2 + $0x8] sm:$0xff]
        %v2745 = vld [vmem:[#allocation2 + $0x10] sm:$0xff]
        %v2746 = vld [vmem:[#allocation2 + $0x18] sm:$0xff]
        %v2747 = vld [vmem:[#allocation2 + $0x20] sm:$0xff]
        %v2748 = vld [vmem:[#allocation2 + $0x28] sm:$0xff]
        %v2749 = vld [vmem:[#allocation2 + $0x30] sm:$0xff]
        %v2750 = vld [vmem:[#allocation2 + $0x38] sm:$0xff]
        %v2751 = vld [vmem:[#allocation2 + $0x40] sm:$0xff]
        %v2752 = vld [vmem:[#allocation2 + $0x48] sm:$0xff]
        %v2753 = vld [vmem:[#allocation2 + $0x50] sm:$0xff]
        %v2754 = vld [vmem:[#allocation2 + $0x58] sm:$0xff]
        %v2755 = vld [vmem:[#allocation2 + $0x60] sm:$0xff]
        %v2756 = vld [vmem:[#allocation2 + $0x68] sm:$0xff]
        %v2757 = vld [vmem:[#allocation2 + $0x70] sm:$0xff]
        %v2758 = vld [vmem:[#allocation2 + $0x78] sm:$0xff]
        %v2759 = vld [vmem:[#allocation2 + $0x80] sm:$0xff]
        %v2760 = vld [vmem:[#allocation2 + $0x88] sm:$0xff]
        %v2761 = vld [vmem:[#allocation2 + $0x90] sm:$0xff]
        %v2762 = vld [vmem:[#allocation2 + $0x98] sm:$0xff]
        %v2763 = vld [vmem:[#allocation2 + $0xa0] sm:$0xff]
        %v2764 = vld [vmem:[#allocation2 + $0xa8] sm:$0xff]
        %v2765 = vld [vmem:[#allocation2 + $0xb0] sm:$0xff]
        %v2766 = vld [vmem:[#allocation2 + $0xb8] sm:$0xff]
        %v2767 = vld [vmem:[#allocation2 + $0xc0] sm:$0xff]
        %v2768 = vld [vmem:[#allocation2 + $0xc8] sm:$0xff]
        %v2769 = vld [vmem:[#allocation2 + $0xd0] sm:$0xff]
        %v2770 = vld [vmem:[#allocation2 + $0xd8] sm:$0xff]
        %v2771 = vld [vmem:[#allocation2 + $0xe0] sm:$0xff]
        %v2772 = vld [vmem:[#allocation2 + $0xe8] sm:$0xff]
        %v2773 = vld [vmem:[#allocation2 + $0xf0] sm:$0xff]
        %v2774 = vld [vmem:[#allocation2 + $0xf8] sm:$0xff]
        %v2775 = vld [vmem:[#allocation2 + $0x100] sm:$0xff]
        %v2776 = vld [vmem:[#allocation2 + $0x108] sm:$0xff]
        %v2777 = vld [vmem:[#allocation2 + $0x110] sm:$0xff]
        %v2778 = vld [vmem:[#allocation2 + $0x118] sm:$0xff]
        %v2779 = vld [vmem:[#allocation2 + $0x120] sm:$0xff]
        %v2780 = vld [vmem:[#allocation2 + $0x128] sm:$0xff]
        %v2781 = vld [vmem:[#allocation2 + $0x130] sm:$0xff]
        %v2782 = vld [vmem:[#allocation2 + $0x138] sm:$0xff]
        %v2783 = vld [vmem:[#allocation2 + $0x140] sm:$0xff]
        %v2784 = vld [vmem:[#allocation2 + $0x148] sm:$0xff]
        %v2785 = vld [vmem:[#allocation2 + $0x150] sm:$0xff]
        %v2786 = vld [vmem:[#allocation2 + $0x158] sm:$0xff]
        %v2787 = vld [vmem:[#allocation2 + $0x160] sm:$0xff]
        %v2788 = vld [vmem:[#allocation2 + $0x168] sm:$0xff]
        %v2789 = vld [vmem:[#allocation2 + $0x170] sm:$0xff]
        %v2790 = vld [vmem:[#allocation2 + $0x178] sm:$0xff]
        %v2791 = vld [vmem:[#allocation2 + $0x180] sm:$0xff]
        %v2792 = vld [vmem:[#allocation2 + $0x188] sm:$0xff]
        %v2793 = vld [vmem:[#allocation2 + $0x190] sm:$0xff]
        %v2794 = vld [vmem:[#allocation2 + $0x198] sm:$0xff]
        %v2795 = vld [vmem:[#allocation2 + $0x1a0] sm:$0xff]
        %v2796 = vld [vmem:[#allocation2 + $0x1a8] sm:$0xff]
        %v2797 = vld [vmem:[#allocation2 + $0x1b0] sm:$0xff]
        %v2798 = vld [vmem:[#allocation2 + $0x1b8] sm:$0xff]
        %v2799 = vld [vmem:[#allocation2 + $0x1c0] sm:$0xff]
        %v2800 = vld [vmem:[#allocation2 + $0x1c8] sm:$0xff]
        %v2801 = vld [vmem:[#allocation2 + $0x1d0] sm:$0xff]
        %v2802 = vld [vmem:[#allocation2 + $0x1d8] sm:$0xff]
        %v2803 = vld [vmem:[#allocation2 + $0x1e0] sm:$0xff]
        %v2804 = vld [vmem:[#allocation2 + $0x1e8] sm:$0xff]
        %v2805 = vld [vmem:[#allocation2 + $0x1f0] sm:$0xff]
        %v2806 = vld [vmem:[#allocation2 + $0x1f8] sm:$0xff]
        %v2807 = vld [vmem:[#allocation9] sm:$0xff]
        %v2808 = vld [vmem:[#allocation9 + $0x8] sm:$0xff]
        %v2809 = vld [vmem:[#allocation9 + $0x10] sm:$0xff]
        %v2810 = vld [vmem:[#allocation9 + $0x18] sm:$0xff]
        %v2811 = vld [vmem:[#allocation9 + $0x20] sm:$0xff]
        %v2812 = vld [vmem:[#allocation9 + $0x28] sm:$0xff]
        %v2813 = vld [vmem:[#allocation9 + $0x30] sm:$0xff]
        %v2814 = vld [vmem:[#allocation9 + $0x38] sm:$0xff]
        %v2815 = vld [vmem:[#allocation9 + $0x40] sm:$0xff]
        %v2816 = vld [vmem:[#allocation9 + $0x48] sm:$0xff]
        %v2817 = vld [vmem:[#allocation9 + $0x50] sm:$0xff]
        %v2818 = vld [vmem:[#allocation9 + $0x58] sm:$0xff]
        %v2819 = vld [vmem:[#allocation9 + $0x60] sm:$0xff]
        %v2820 = vld [vmem:[#allocation9 + $0x68] sm:$0xff]
        %v2821 = vld [vmem:[#allocation9 + $0x70] sm:$0xff]
        %v2822 = vld [vmem:[#allocation9 + $0x78] sm:$0xff]
        %v2823 = vld [vmem:[#allocation9 + $0x80] sm:$0xff]
        %v2824 = vld [vmem:[#allocation9 + $0x88] sm:$0xff]
        %v2825 = vld [vmem:[#allocation9 + $0x90] sm:$0xff]
        %v2826 = vld [vmem:[#allocation9 + $0x98] sm:$0xff]
        %v2827 = vld [vmem:[#allocation9 + $0xa0] sm:$0xff]
        %v2828 = vld [vmem:[#allocation9 + $0xa8] sm:$0xff]
        %v2829 = vld [vmem:[#allocation9 + $0xb0] sm:$0xff]
        %v2830 = vld [vmem:[#allocation9 + $0xb8] sm:$0xff]
        %v2831 = vld [vmem:[#allocation9 + $0xc0] sm:$0xff]
        %v2832 = vld [vmem:[#allocation9 + $0xc8] sm:$0xff]
        %v2833 = vld [vmem:[#allocation9 + $0xd0] sm:$0xff]
        %v2834 = vld [vmem:[#allocation9 + $0xd8] sm:$0xff]
        %v2835 = vld [vmem:[#allocation9 + $0xe0] sm:$0xff]
        %v2836 = vld [vmem:[#allocation9 + $0xe8] sm:$0xff]
        %v2837 = vld [vmem:[#allocation9 + $0xf0] sm:$0xff]
        %v2838 = vld [vmem:[#allocation9 + $0xf8] sm:$0xff]
        %v2839 = vld [vmem:[#allocation9 + $0x100] sm:$0xff]
        %v2840 = vld [vmem:[#allocation9 + $0x108] sm:$0xff]
        %v2841 = vld [vmem:[#allocation9 + $0x110] sm:$0xff]
        %v2842 = vld [vmem:[#allocation9 + $0x118] sm:$0xff]
        %v2843 = vld [vmem:[#allocation9 + $0x120] sm:$0xff]
        %v2844 = vld [vmem:[#allocation9 + $0x128] sm:$0xff]
        %v2845 = vld [vmem:[#allocation9 + $0x130] sm:$0xff]
        %v2846 = vld [vmem:[#allocation9 + $0x138] sm:$0xff]
        %v2847 = vld [vmem:[#allocation9 + $0x140] sm:$0xff]
        %v2848 = vld [vmem:[#allocation9 + $0x148] sm:$0xff]
        %v2849 = vld [vmem:[#allocation9 + $0x150] sm:$0xff]
        %v2850 = vld [vmem:[#allocation9 + $0x158] sm:$0xff]
        %v2851 = vld [vmem:[#allocation9 + $0x160] sm:$0xff]
        %v2852 = vld [vmem:[#allocation9 + $0x168] sm:$0xff]
        %v2853 = vld [vmem:[#allocation9 + $0x170] sm:$0xff]
        %v2854 = vld [vmem:[#allocation9 + $0x178] sm:$0xff]
        %v2855 = vld [vmem:[#allocation9 + $0x180] sm:$0xff]
        %v2856 = vld [vmem:[#allocation9 + $0x188] sm:$0xff]
        %v2857 = vld [vmem:[#allocation9 + $0x190] sm:$0xff]
        %v2858 = vld [vmem:[#allocation9 + $0x198] sm:$0xff]
        %v2859 = vld [vmem:[#allocation9 + $0x1a0] sm:$0xff]
        %v2860 = vld [vmem:[#allocation9 + $0x1a8] sm:$0xff]
        %v2861 = vld [vmem:[#allocation9 + $0x1b0] sm:$0xff]
        %v2862 = vld [vmem:[#allocation9 + $0x1b8] sm:$0xff]
        %v2863 = vld [vmem:[#allocation9 + $0x1c0] sm:$0xff]
        %v2864 = vld [vmem:[#allocation9 + $0x1c8] sm:$0xff]
        %v2865 = vld [vmem:[#allocation9 + $0x1d0] sm:$0xff]
        %v2866 = vld [vmem:[#allocation9 + $0x1d8] sm:$0xff]
        %v2867 = vld [vmem:[#allocation9 + $0x1e0] sm:$0xff]
        %v2868 = vld [vmem:[#allocation9 + $0x1e8] sm:$0xff]
        %v2869 = vld [vmem:[#allocation9 + $0x1f0] sm:$0xff]
        %v2870 = vld [vmem:[#allocation9 + $0x1f8] sm:$0xff]
        %v2871 = vld [vmem:[#allocation9 + $0x200] sm:$0xff]
        %v2872 = vld [vmem:[#allocation9 + $0x208] sm:$0xff]
        %v2873 = vld [vmem:[#allocation9 + $0x210] sm:$0xff]
        %v2874 = vld [vmem:[#allocation9 + $0x218] sm:$0xff]
        %v2875 = vld [vmem:[#allocation9 + $0x220] sm:$0xff]
        %v2876 = vld [vmem:[#allocation9 + $0x228] sm:$0xff]
        %v2877 = vld [vmem:[#allocation9 + $0x230] sm:$0xff]
        %v2878 = vld [vmem:[#allocation9 + $0x238] sm:$0xff]
        %v2879 = vld [vmem:[#allocation9 + $0x240] sm:$0xff]
        %v2880 = vld [vmem:[#allocation9 + $0x248] sm:$0xff]
        %v2881 = vld [vmem:[#allocation9 + $0x250] sm:$0xff]
        %v2882 = vld [vmem:[#allocation9 + $0x258] sm:$0xff]
        %v2883 = vld [vmem:[#allocation9 + $0x260] sm:$0xff]
        %v2884 = vld [vmem:[#allocation9 + $0x268] sm:$0xff]
        %v2885 = vld [vmem:[#allocation9 + $0x270] sm:$0xff]
        %v2886 = vld [vmem:[#allocation9 + $0x278] sm:$0xff]
        %v2887 = vld [vmem:[#allocation9 + $0x280] sm:$0xff]
        %v2888 = vld [vmem:[#allocation9 + $0x288] sm:$0xff]
        %v2889 = vld [vmem:[#allocation9 + $0x290] sm:$0xff]
        %v2890 = vld [vmem:[#allocation9 + $0x298] sm:$0xff]
        %v2891 = vld [vmem:[#allocation9 + $0x2a0] sm:$0xff]
        %v2892 = vld [vmem:[#allocation9 + $0x2a8] sm:$0xff]
        %v2893 = vld [vmem:[#allocation9 + $0x2b0] sm:$0xff]
        %v2894 = vld [vmem:[#allocation9 + $0x2b8] sm:$0xff]
        %v2895 = vld [vmem:[#allocation9 + $0x2c0] sm:$0xff]
        %v2896 = vld [vmem:[#allocation9 + $0x2c8] sm:$0xff]
        %v2897 = vld [vmem:[#allocation9 + $0x2d0] sm:$0xff]
        %v2898 = vld [vmem:[#allocation9 + $0x2d8] sm:$0xff]
        %v2899 = vld [vmem:[#allocation9 + $0x2e0] sm:$0xff]
        %v2900 = vld [vmem:[#allocation9 + $0x2e8] sm:$0xff]
        %v2901 = vld [vmem:[#allocation9 + $0x2f0] sm:$0xff]
        %v2902 = vld [vmem:[#allocation9 + $0x2f8] sm:$0xff]
        %v2903 = vld [vmem:[#allocation9 + $0x300] sm:$0xff]
        %v2904 = vld [vmem:[#allocation9 + $0x308] sm:$0xff]
        %v2905 = vld [vmem:[#allocation9 + $0x310] sm:$0xff]
        %v2906 = vld [vmem:[#allocation9 + $0x318] sm:$0xff]
        %v2907 = vld [vmem:[#allocation9 + $0x320] sm:$0xff]
        %v2908 = vld [vmem:[#allocation9 + $0x328] sm:$0xff]
        %v2909 = vld [vmem:[#allocation9 + $0x330] sm:$0xff]
        %v2910 = vld [vmem:[#allocation9 + $0x338] sm:$0xff]
        %v2911 = vld [vmem:[#allocation9 + $0x340] sm:$0xff]
        %v2912 = vld [vmem:[#allocation9 + $0x348] sm:$0xff]
        %v2913 = vld [vmem:[#allocation9 + $0x350] sm:$0xff]
        %v2914 = vld [vmem:[#allocation9 + $0x358] sm:$0xff]
        %v2915 = vld [vmem:[#allocation9 + $0x360] sm:$0xff]
        %v2916 = vld [vmem:[#allocation9 + $0x368] sm:$0xff]
        %v2917 = vld [vmem:[#allocation9 + $0x370] sm:$0xff]
        %v2918 = vld [vmem:[#allocation9 + $0x378] sm:$0xff]
        %v2919 = vld [vmem:[#allocation9 + $0x380] sm:$0xff]
        %v2920 = vld [vmem:[#allocation9 + $0x388] sm:$0xff]
        %v2921 = vld [vmem:[#allocation9 + $0x390] sm:$0xff]
        %v2922 = vld [vmem:[#allocation9 + $0x398] sm:$0xff]
        %v2923 = vld [vmem:[#allocation9 + $0x3a0] sm:$0xff]
        %v2924 = vld [vmem:[#allocation9 + $0x3a8] sm:$0xff]
        %v2925 = vld [vmem:[#allocation9 + $0x3b0] sm:$0xff]
        %v2926 = vld [vmem:[#allocation9 + $0x3b8] sm:$0xff]
        %v2927 = vld [vmem:[#allocation9 + $0x3c0] sm:$0xff]
        %v2928 = vld [vmem:[#allocation9 + $0x3c8] sm:$0xff]
        %v2929 = vld [vmem:[#allocation9 + $0x3d0] sm:$0xff]
        %v2930 = vld [vmem:[#allocation9 + $0x3d8] sm:$0xff]
        %v2931 = vld [vmem:[#allocation9 + $0x3e0] sm:$0xff]
        %v2932 = vld [vmem:[#allocation9 + $0x3e8] sm:$0xff]
        %v2933 = vld [vmem:[#allocation9 + $0x3f0] sm:$0xff]
        %v2934 = vld [vmem:[#allocation9 + $0x3f8] sm:$0xff]
        %2935 = vmatprep.subr.mxu0 %v2808
        %2936 = vmatpush1.msra.mxu0 %v2807
        %2937 = vmatprep.subr.mxu0 %v2810
        %2938 = vmatpush1.msra.mxu0 %v2809
        %2939 = vmatprep.subr.mxu0 %v2812
        %2940 = vmatpush1.msra.mxu0 %v2811
        %2941 = vmatprep.subr.mxu0 %v2814
        %2942 = vmatpush1.msra.mxu0 %v2813
        %2943 = vmatprep.subr.mxu0 %v2816
        %2944 = vmatpush1.msra.mxu0 %v2815
        %2945 = vmatprep.subr.mxu0 %v2818
        %2946 = vmatpush1.msra.mxu0 %v2817
        %2947 = vmatprep.subr.mxu0 %v2820
        %2948 = vmatpush1.msra.mxu0 %v2819
        %2949 = vmatprep.subr.mxu0 %v2822
        %2950 = vmatpush1.msra.mxu0 %v2821
        %2951 = vmatprep.subr.mxu0 %v2824
        %2952 = vmatpush1.msra.mxu0 %v2823
        %2953 = vmatprep.subr.mxu0 %v2826
        %2954 = vmatpush1.msra.mxu0 %v2825
        %2955 = vmatprep.subr.mxu0 %v2828
        %2956 = vmatpush1.msra.mxu0 %v2827
        %2957 = vmatprep.subr.mxu0 %v2830
        %2958 = vmatpush1.msra.mxu0 %v2829
        %2959 = vmatprep.subr.mxu0 %v2832
        %2960 = vmatpush1.msra.mxu0 %v2831
        %2961 = vmatprep.subr.mxu0 %v2834
        %2962 = vmatpush1.msra.mxu0 %v2833
        %2963 = vmatprep.subr.mxu0 %v2836
        %2964 = vmatpush1.msra.mxu0 %v2835
        %2965 = vmatprep.subr.mxu0 %v2838
        %2966 = vmatpush1.msra.mxu0 %v2837
        %2967 = vmatprep.subr.mxu0 %v2840
        %2968 = vmatpush1.msra.mxu0 %v2839
        %2969 = vmatprep.subr.mxu0 %v2842
        %2970 = vmatpush1.msra.mxu0 %v2841
        %2971 = vmatprep.subr.mxu0 %v2844
        %2972 = vmatpush1.msra.mxu0 %v2843
        %2973 = vmatprep.subr.mxu0 %v2846
        %2974 = vmatpush1.msra.mxu0 %v2845
        %2975 = vmatprep.subr.mxu0 %v2848
        %2976 = vmatpush1.msra.mxu0 %v2847
        %2977 = vmatprep.subr.mxu0 %v2850
        %2978 = vmatpush1.msra.mxu0 %v2849
        %2979 = vmatprep.subr.mxu0 %v2852
        %2980 = vmatpush1.msra.mxu0 %v2851
        %2981 = vmatprep.subr.mxu0 %v2854
        %2982 = vmatpush1.msra.mxu0 %v2853
        %2983 = vmatprep.subr.mxu0 %v2856
        %2984 = vmatpush1.msra.mxu0 %v2855
        %2985 = vmatprep.subr.mxu0 %v2858
        %2986 = vmatpush1.msra.mxu0 %v2857
        %2987 = vmatprep.subr.mxu0 %v2860
        %2988 = vmatpush1.msra.mxu0 %v2859
        %2989 = vmatprep.subr.mxu0 %v2862
        %2990 = vmatpush1.msra.mxu0 %v2861
        %2991 = vmatprep.subr.mxu0 %v2864
        %2992 = vmatpush1.msra.mxu0 %v2863
        %2993 = vmatprep.subr.mxu0 %v2866
        %2994 = vmatpush1.msra.mxu0 %v2865
        %2995 = vmatprep.subr.mxu0 %v2868
        %2996 = vmatpush1.msra.mxu0 %v2867
        %2997 = vmatprep.subr.mxu0 %v2870
        %2998 = vmatpush1.msra.mxu0 %v2869
        %2999 = vmatprep.mubr.f32.mxu0 %v2616
        %3000 = vmatmul.mubr.f32.gmra.mrb[0].mxu0 %v2615
        %v3001 = vpop.f32.mrb[0].mxu0
        %v3002 = vadd.f32 0.0, %v3001
        %v3003 = vpop.f32.mrb[0].mxu0
        %v3004 = vadd.f32 0.0, %v3003
        %3005 = vmatprep.mubr.f32.mxu0 %v2620
        %3006 = vmatmul.mubr.f32.gmra.mrb[0].mxu0 %v2619
        %v3007 = vpop.f32.mrb[0].mxu0
        %v3008 = vadd.f32 0.0, %v3007
        %v3009 = vpop.f32.mrb[0].mxu0
        %v3010 = vadd.f32 0.0, %v3009
        %3011 = vmatprep.mubr.f32.mxu0 %v2624
        %3012 = vmatmul.mubr.f32.gmra.mrb[0].mxu0 %v2623
        %v3013 = vpop.f32.mrb[0].mxu0
        %v3014 = vadd.f32 0.0, %v3013
        %v3015 = vpop.f32.mrb[0].mxu0
        %v3016 = vadd.f32 0.0, %v3015
        %3017 = vmatprep.mubr.f32.mxu0 %v2628
        %3018 = vmatmul.mubr.f32.gmra.mrb[0].mxu0 %v2627
        %v3019 = vpop.f32.mrb[0].mxu0
        %v3020 = vadd.f32 0.0, %v3019
        %v3021 = vpop.f32.mrb[0].mxu0
        %v3022 = vadd.f32 0.0, %v3021
        %3023 = vmatprep.mubr.f32.mxu0 %v2632
        %3024 = vmatmul.mubr.f32.gmra.mrb[0].mxu0 %v2631
        %v3025 = vpop.f32.mrb[0].mxu0
        %v3026 = vadd.f32 0.0, %v3025
        %v3027 = vpop.f32.mrb[0].mxu0
        %v3028 = vadd.f32 0.0, %v3027
        %3029 = vmatprep.mubr.f32.mxu0 %v2636
        %3030 = vmatmul.mubr.f32.gmra.mrb[0].mxu0 %v2635
        %v3031 = vpop.f32.mrb[0].mxu0
        %v3032 = vadd.f32 0.0, %v3031
        %v3033 = vpop.f32.mrb[0].mxu0
        %v3034 = vadd.f32 0.0, %v3033
        %3035 = vmatprep.mubr.f32.mxu0 %v2640
        %3036 = vmatmul.mubr.f32.gmra.mrb[0].mxu0 %v2639
        %v3037 = vpop.f32.mrb[0].mxu0
        %v3038 = vadd.f32 0.0, %v3037
        %v3039 = vpop.f32.mrb[0].mxu0
        %v3040 = vadd.f32 0.0, %v3039
        %3041 = vmatprep.mubr.f32.mxu0 %v2644
        %3042 = vmatmul.mubr.f32.gmra.mrb[0].mxu0 %v2643
        %v3043 = vpop.f32.mrb[0].mxu0
        %v3044 = vadd.f32 0.0, %v3043
        %v3045 = vpop.f32.mrb[0].mxu0
        %v3046 = vadd.f32 0.0, %v3045
        %3047 = vmatprep.mubr.f32.mxu0 %v2648
        %3048 = vmatmul.mubr.f32.gmra.mrb[0].mxu0 %v2647
        %v3049 = vpop.f32.mrb[0].mxu0
        %v3050 = vadd.f32 0.0, %v3049
        %v3051 = vpop.f32.mrb[0].mxu0
        %v3052 = vadd.f32 0.0, %v3051
        %3053 = vmatprep.mubr.f32.mxu0 %v2652
        %3054 = vmatmul.mubr.f32.gmra.mrb[0].mxu0 %v2651
        %v3055 = vpop.f32.mrb[0].mxu0
        %v3056 = vadd.f32 0.0, %v3055
        %v3057 = vpop.f32.mrb[0].mxu0
        %v3058 = vadd.f32 0.0, %v3057
        %3059 = vmatprep.mubr.f32.mxu0 %v2656
        %3060 = vmatmul.mubr.f32.gmra.mrb[0].mxu0 %v2655
        %v3061 = vpop.f32.mrb[0].mxu0
        %v3062 = vadd.f32 0.0, %v3061
        %v3063 = vpop.f32.mrb[0].mxu0
        %v3064 = vadd.f32 0.0, %v3063
        %3065 = vmatprep.mubr.f32.mxu0 %v2660
        %3066 = vmatmul.mubr.f32.gmra.mrb[0].mxu0 %v2659
        %v3067 = vpop.f32.mrb[0].mxu0
        %v3068 = vadd.f32 0.0, %v3067
        %v3069 = vpop.f32.mrb[0].mxu0
        %v3070 = vadd.f32 0.0, %v3069
        %3071 = vmatprep.mubr.f32.mxu0 %v2664
        %3072 = vmatmul.mubr.f32.gmra.mrb[0].mxu0 %v2663
        %v3073 = vpop.f32.mrb[0].mxu0
        %v3074 = vadd.f32 0.0, %v3073
        %v3075 = vpop.f32.mrb[0].mxu0
        %v3076 = vadd.f32 0.0, %v3075
        %3077 = vmatprep.mubr.f32.mxu0 %v2668
        %3078 = vmatmul.mubr.f32.gmra.mrb[0].mxu0 %v2667
        %v3079 = vpop.f32.mrb[0].mxu0
        %v3080 = vadd.f32 0.0, %v3079
        %v3081 = vpop.f32.mrb[0].mxu0
        %v3082 = vadd.f32 0.0, %v3081
        %3083 = vmatprep.mubr.f32.mxu0 %v2672
        %3084 = vmatmul.mubr.f32.gmra.mrb[0].mxu0 %v2671
        %v3085 = vpop.f32.mrb[0].mxu0
        %v3086 = vadd.f32 0.0, %v3085
        %v3087 = vpop.f32.mrb[0].mxu0
        %v3088 = vadd.f32 0.0, %v3087
        %3089 = vmatprep.mubr.f32.mxu0 %v2676
        %3090 = vmatmul.mubr.f32.gmra.mrb[0].mxu0 %v2675
        %v3091 = vpop.f32.mrb[0].mxu0
        %v3092 = vadd.f32 0.0, %v3091
        %v3093 = vpop.f32.mrb[0].mxu0
        %v3094 = vadd.f32 0.0, %v3093
        %3095 = vmatprep.mubr.f32.mxu0 %v2680
        %3096 = vmatmul.mubr.f32.gmra.mrb[0].mxu0 %v2679
        %v3097 = vpop.f32.mrb[0].mxu0
        %v3098 = vadd.f32 0.0, %v3097
        %v3099 = vpop.f32.mrb[0].mxu0
        %v3100 = vadd.f32 0.0, %v3099
        %3101 = vmatprep.mubr.f32.mxu0 %v2684
        %3102 = vmatmul.mubr.f32.gmra.mrb[0].mxu0 %v2683
        %v3103 = vpop.f32.mrb[0].mxu0
        %v3104 = vadd.f32 0.0, %v3103
        %v3105 = vpop.f32.mrb[0].mxu0
        %v3106 = vadd.f32 0.0, %v3105
        %3107 = vmatprep.mubr.f32.mxu0 %v2688
        %3108 = vmatmul.mubr.f32.gmra.mrb[0].mxu0 %v2687
        %v3109 = vpop.f32.mrb[0].mxu0
        %v3110 = vadd.f32 0.0, %v3109
        %v3111 = vpop.f32.mrb[0].mxu0
        %v3112 = vadd.f32 0.0, %v3111
        %3113 = vmatprep.mubr.f32.mxu0 %v2692
        %3114 = vmatmul.mubr.f32.gmra.mrb[0].mxu0 %v2691
        %v3115 = vpop.f32.mrb[0].mxu0
        %v3116 = vadd.f32 0.0, %v3115
        %v3117 = vpop.f32.mrb[0].mxu0
        %v3118 = vadd.f32 0.0, %v3117
        %3119 = vmatprep.mubr.f32.mxu0 %v2696
        %3120 = vmatmul.mubr.f32.gmra.mrb[0].mxu0 %v2695
        %v3121 = vpop.f32.mrb[0].mxu0
        %v3122 = vadd.f32 0.0, %v3121
        %v3123 = vpop.f32.mrb[0].mxu0
        %v3124 = vadd.f32 0.0, %v3123
        %3125 = vmatprep.mubr.f32.mxu0 %v2700
        %3126 = vmatmul.mubr.f32.gmra.mrb[0].mxu0 %v2699
        %v3127 = vpop.f32.mrb[0].mxu0
        %v3128 = vadd.f32 0.0, %v3127
        %v3129 = vpop.f32.mrb[0].mxu0
        %v3130 = vadd.f32 0.0, %v3129
        %3131 = vmatprep.mubr.f32.mxu0 %v2704
        %3132 = vmatmul.mubr.f32.gmra.mrb[0].mxu0 %v2703
        %v3133 = vpop.f32.mrb[0].mxu0
        %v3134 = vadd.f32 0.0, %v3133
        %v3135 = vpop.f32.mrb[0].mxu0
        %v3136 = vadd.f32 0.0, %v3135
        %3137 = vmatprep.mubr.f32.mxu0 %v2708
        %3138 = vmatmul.mubr.f32.gmra.mrb[0].mxu0 %v2707
        %v3139 = vpop.f32.mrb[0].mxu0
        %v3140 = vadd.f32 0.0, %v3139
        %v3141 = vpop.f32.mrb[0].mxu0
        %v3142 = vadd.f32 0.0, %v3141
        %3143 = vmatprep.mubr.f32.mxu0 %v2712
        %3144 = vmatmul.mubr.f32.gmra.mrb[0].mxu0 %v2711
        %v3145 = vpop.f32.mrb[0].mxu0
        %v3146 = vadd.f32 0.0, %v3145
        %v3147 = vpop.f32.mrb[0].mxu0
        %v3148 = vadd.f32 0.0, %v3147
        %3149 = vmatprep.mubr.f32.mxu0 %v2716
        %3150 = vmatmul.mubr.f32.gmra.mrb[0].mxu0 %v2715
        %v3151 = vpop.f32.mrb[0].mxu0
        %v3152 = vadd.f32 0.0, %v3151
        %v3153 = vpop.f32.mrb[0].mxu0
        %v3154 = vadd.f32 0.0, %v3153
        %3155 = vmatprep.mubr.f32.mxu0 %v2720
        %3156 = vmatmul.mubr.f32.gmra.mrb[0].mxu0 %v2719
        %v3157 = vpop.f32.mrb[0].mxu0
        %v3158 = vadd.f32 0.0, %v3157
        %v3159 = vpop.f32.mrb[0].mxu0
        %v3160 = vadd.f32 0.0, %v3159
        %3161 = vmatprep.mubr.f32.mxu0 %v2724
        %3162 = vmatmul.mubr.f32.gmra.mrb[0].mxu0 %v2723
        %v3163 = vpop.f32.mrb[0].mxu0
        %v3164 = vadd.f32 0.0, %v3163
        %v3165 = vpop.f32.mrb[0].mxu0
        %v3166 = vadd.f32 0.0, %v3165
        %3167 = vmatprep.mubr.f32.mxu0 %v2728
        %3168 = vmatmul.mubr.f32.gmra.mrb[0].mxu0 %v2727
        %v3169 = vpop.f32.mrb[0].mxu0
        %v3170 = vadd.f32 0.0, %v3169
        %v3171 = vpop.f32.mrb[0].mxu0
        %v3172 = vadd.f32 0.0, %v3171
        %3173 = vmatprep.mubr.f32.mxu0 %v2732
        %3174 = vmatmul.mubr.f32.gmra.mrb[0].mxu0 %v2731
        %v3175 = vpop.f32.mrb[0].mxu0
        %v3176 = vadd.f32 0.0, %v3175
        %v3177 = vpop.f32.mrb[0].mxu0
        %v3178 = vadd.f32 0.0, %v3177
        %3179 = vmatprep.mubr.f32.mxu0 %v2736
        %3180 = vmatmul.mubr.f32.gmra.mrb[0].mxu0 %v2735
        %v3181 = vpop.f32.mrb[0].mxu0
        %v3182 = vadd.f32 0.0, %v3181
        %v3183 = vpop.f32.mrb[0].mxu0
        %v3184 = vadd.f32 0.0, %v3183
        %3185 = vmatprep.mubr.f32.mxu0 %v2740
        %3186 = vmatmul.mubr.f32.gmra.mrb[0].mxu0 %v2739
        %v3187 = vpop.f32.mrb[0].mxu0
        %v3188 = vadd.f32 0.0, %v3187
        %v3189 = vpop.f32.mrb[0].mxu0
        %v3190 = vadd.f32 0.0, %v3189
        %3191 = vdwg.mxu0
        %3192 = vmatprep.subr.mxu0 %v2872
        %3193 = vmatpush1.msra.mxu0 %v2871
        %3194 = vmatprep.subr.mxu0 %v2874
        %3195 = vmatpush1.msra.mxu0 %v2873
        %3196 = vmatprep.subr.mxu0 %v2876
        %3197 = vmatpush1.msra.mxu0 %v2875
        %3198 = vmatprep.subr.mxu0 %v2878
        %3199 = vmatpush1.msra.mxu0 %v2877
        %3200 = vmatprep.subr.mxu0 %v2880
        %3201 = vmatpush1.msra.mxu0 %v2879
        %3202 = vmatprep.subr.mxu0 %v2882
        %3203 = vmatpush1.msra.mxu0 %v2881
        %3204 = vmatprep.subr.mxu0 %v2884
        %3205 = vmatpush1.msra.mxu0 %v2883
        %3206 = vmatprep.subr.mxu0 %v2886
        %3207 = vmatpush1.msra.mxu0 %v2885
        %3208 = vmatprep.subr.mxu0 %v2888
        %3209 = vmatpush1.msra.mxu0 %v2887
        %3210 = vmatprep.subr.mxu0 %v2890
        %3211 = vmatpush1.msra.mxu0 %v2889
        %3212 = vmatprep.subr.mxu0 %v2892
        %3213 = vmatpush1.msra.mxu0 %v2891
        %3214 = vmatprep.subr.mxu0 %v2894
        %3215 = vmatpush1.msra.mxu0 %v2893
        %3216 = vmatprep.subr.mxu0 %v2896
        %3217 = vmatpush1.msra.mxu0 %v2895
        %3218 = vmatprep.subr.mxu0 %v2898
        %3219 = vmatpush1.msra.mxu0 %v2897
        %3220 = vmatprep.subr.mxu0 %v2900
        %3221 = vmatpush1.msra.mxu0 %v2899
        %3222 = vmatprep.subr.mxu0 %v2902
        %3223 = vmatpush1.msra.mxu0 %v2901
        %3224 = vmatprep.subr.mxu0 %v2904
        %3225 = vmatpush1.msra.mxu0 %v2903
        %3226 = vmatprep.subr.mxu0 %v2906
        %3227 = vmatpush1.msra.mxu0 %v2905
        %3228 = vmatprep.subr.mxu0 %v2908
        %3229 = vmatpush1.msra.mxu0 %v2907
        %3230 = vmatprep.subr.mxu0 %v2910
        %3231 = vmatpush1.msra.mxu0 %v2909
        %3232 = vmatprep.subr.mxu0 %v2912
        %3233 = vmatpush1.msra.mxu0 %v2911
        %3234 = vmatprep.subr.mxu0 %v2914
        %3235 = vmatpush1.msra.mxu0 %v2913
        %3236 = vmatprep.subr.mxu0 %v2916
        %3237 = vmatpush1.msra.mxu0 %v2915
        %3238 = vmatprep.subr.mxu0 %v2918
        %3239 = vmatpush1.msra.mxu0 %v2917
        %3240 = vmatprep.subr.mxu0 %v2920
        %3241 = vmatpush1.msra.mxu0 %v2919
        %3242 = vmatprep.subr.mxu0 %v2922
        %3243 = vmatpush1.msra.mxu0 %v2921
        %3244 = vmatprep.subr.mxu0 %v2924
        %3245 = vmatpush1.msra.mxu0 %v2923
        %3246 = vmatprep.subr.mxu0 %v2926
        %3247 = vmatpush1.msra.mxu0 %v2925
        %3248 = vmatprep.subr.mxu0 %v2928
        %3249 = vmatpush1.msra.mxu0 %v2927
        %3250 = vmatprep.subr.mxu0 %v2930
        %3251 = vmatpush1.msra.mxu0 %v2929
        %3252 = vmatprep.subr.mxu0 %v2932
        %3253 = vmatpush1.msra.mxu0 %v2931
        %3254 = vmatprep.subr.mxu0 %v2934
        %3255 = vmatpush1.msra.mxu0 %v2933
        %3256 = vmatprep.mubr.f32.mxu0 %v2618
        %3257 = vmatmul.mubr.f32.gmra.mrb[0].mxu0 %v2617
        %v3258 = vpop.f32.mrb[0].mxu0
        %v3259 = vadd.f32 %v3002, %v3258
        %v3260 = vpop.f32.mrb[0].mxu0
        %v3261 = vadd.f32 %v3004, %v3260
        %3262 = vmatprep.mubr.f32.mxu0 %v2622
        %3263 = vmatmul.mubr.f32.gmra.mrb[0].mxu0 %v2621
        %v3264 = vpop.f32.mrb[0].mxu0
        %v3265 = vadd.f32 %v3008, %v3264
        %v3266 = vpop.f32.mrb[0].mxu0
        %v3267 = vadd.f32 %v3010, %v3266
        %3268 = vmatprep.mubr.f32.mxu0 %v2626
        %3269 = vmatmul.mubr.f32.gmra.mrb[0].mxu0 %v2625
        %v3270 = vpop.f32.mrb[0].mxu0
        %v3271 = vadd.f32 %v3014, %v3270
        %v3272 = vpop.f32.mrb[0].mxu0
        %v3273 = vadd.f32 %v3016, %v3272
        %3274 = vmatprep.mubr.f32.mxu0 %v2630
        %3275 = vmatmul.mubr.f32.gmra.mrb[0].mxu0 %v2629
        %v3276 = vpop.f32.mrb[0].mxu0
        %v3277 = vadd.f32 %v3020, %v3276
        %v3278 = vpop.f32.mrb[0].mxu0
        %v3279 = vadd.f32 %v3022, %v3278
        %3280 = vmatprep.mubr.f32.mxu0 %v2634
        %3281 = vmatmul.mubr.f32.gmra.mrb[0].mxu0 %v2633
        %v3282 = vpop.f32.mrb[0].mxu0
        %v3283 = vadd.f32 %v3026, %v3282
        %v3284 = vpop.f32.mrb[0].mxu0
        %v3285 = vadd.f32 %v3028, %v3284
        %3286 = vmatprep.mubr.f32.mxu0 %v2638
        %3287 = vmatmul.mubr.f32.gmra.mrb[0].mxu0 %v2637
        %v3288 = vpop.f32.mrb[0].mxu0
        %v3289 = vadd.f32 %v3032, %v3288
        %v3290 = vpop.f32.mrb[0].mxu0
        %v3291 = vadd.f32 %v3034, %v3290
        %3292 = vmatprep.mubr.f32.mxu0 %v2642
        %3293 = vmatmul.mubr.f32.gmra.mrb[0].mxu0 %v2641
        %v3294 = vpop.f32.mrb[0].mxu0
        %v3295 = vadd.f32 %v3038, %v3294
        %v3296 = vpop.f32.mrb[0].mxu0
        %v3297 = vadd.f32 %v3040, %v3296
        %3298 = vmatprep.mubr.f32.mxu0 %v2646
        %3299 = vmatmul.mubr.f32.gmra.mrb[0].mxu0 %v2645
        %v3300 = vpop.f32.mrb[0].mxu0
        %v3301 = vadd.f32 %v3044, %v3300
        %v3302 = vpop.f32.mrb[0].mxu0
        %v3303 = vadd.f32 %v3046, %v3302
        %3304 = vmatprep.mubr.f32.mxu0 %v2650
        %3305 = vmatmul.mubr.f32.gmra.mrb[0].mxu0 %v2649
        %v3306 = vpop.f32.mrb[0].mxu0
        %v3307 = vadd.f32 %v3050, %v3306
        %v3308 = vpop.f32.mrb[0].mxu0
        %v3309 = vadd.f32 %v3052, %v3308
        %3310 = vmatprep.mubr.f32.mxu0 %v2654
        %3311 = vmatmul.mubr.f32.gmra.mrb[0].mxu0 %v2653
        %v3312 = vpop.f32.mrb[0].mxu0
        %v3313 = vadd.f32 %v3056, %v3312
        %v3314 = vpop.f32.mrb[0].mxu0
        %v3315 = vadd.f32 %v3058, %v3314
        %3316 = vmatprep.mubr.f32.mxu0 %v2658
        %3317 = vmatmul.mubr.f32.gmra.mrb[0].mxu0 %v2657
        %v3318 = vpop.f32.mrb[0].mxu0
        %v3319 = vadd.f32 %v3062, %v3318
        %v3320 = vpop.f32.mrb[0].mxu0
        %v3321 = vadd.f32 %v3064, %v3320
        %3322 = vmatprep.mubr.f32.mxu0 %v2662
        %3323 = vmatmul.mubr.f32.gmra.mrb[0].mxu0 %v2661
        %v3324 = vpop.f32.mrb[0].mxu0
        %v3325 = vadd.f32 %v3068, %v3324
        %v3326 = vpop.f32.mrb[0].mxu0
        %v3327 = vadd.f32 %v3070, %v3326
        %3328 = vmatprep.mubr.f32.mxu0 %v2666
        %3329 = vmatmul.mubr.f32.gmra.mrb[0].mxu0 %v2665
        %v3330 = vpop.f32.mrb[0].mxu0
        %v3331 = vadd.f32 %v3074, %v3330
        %v3332 = vpop.f32.mrb[0].mxu0
        %v3333 = vadd.f32 %v3076, %v3332
        %3334 = vmatprep.mubr.f32.mxu0 %v2670
        %3335 = vmatmul.mubr.f32.gmra.mrb[0].mxu0 %v2669
        %v3336 = vpop.f32.mrb[0].mxu0
        %v3337 = vadd.f32 %v3080, %v3336
        %v3338 = vpop.f32.mrb[0].mxu0
        %v3339 = vadd.f32 %v3082, %v3338
        %3340 = vmatprep.mubr.f32.mxu0 %v2674
        %3341 = vmatmul.mubr.f32.gmra.mrb[0].mxu0 %v2673
        %v3342 = vpop.f32.mrb[0].mxu0
        %v3343 = vadd.f32 %v3086, %v3342
        %v3344 = vpop.f32.mrb[0].mxu0
        %v3345 = vadd.f32 %v3088, %v3344
        %3346 = vmatprep.mubr.f32.mxu0 %v2678
        %3347 = vmatmul.mubr.f32.gmra.mrb[0].mxu0 %v2677
        %v3348 = vpop.f32.mrb[0].mxu0
        %v3349 = vadd.f32 %v3092, %v3348
        %v3350 = vpop.f32.mrb[0].mxu0
        %v3351 = vadd.f32 %v3094, %v3350
        %3352 = vmatprep.mubr.f32.mxu0 %v2682
        %3353 = vmatmul.mubr.f32.gmra.mrb[0].mxu0 %v2681
        %v3354 = vpop.f32.mrb[0].mxu0
        %v3355 = vadd.f32 %v3098, %v3354
        %v3356 = vpop.f32.mrb[0].mxu0
        %v3357 = vadd.f32 %v3100, %v3356
        %3358 = vmatprep.mubr.f32.mxu0 %v2686
        %3359 = vmatmul.mubr.f32.gmra.mrb[0].mxu0 %v2685
        %v3360 = vpop.f32.mrb[0].mxu0
        %v3361 = vadd.f32 %v3104, %v3360
        %v3362 = vpop.f32.mrb[0].mxu0
        %v3363 = vadd.f32 %v3106, %v3362
        %3364 = vmatprep.mubr.f32.mxu0 %v2690
        %3365 = vmatmul.mubr.f32.gmra.mrb[0].mxu0 %v2689
        %v3366 = vpop.f32.mrb[0].mxu0
        %v3367 = vadd.f32 %v3110, %v3366
        %v3368 = vpop.f32.mrb[0].mxu0
        %v3369 = vadd.f32 %v3112, %v3368
        %3370 = vmatprep.mubr.f32.mxu0 %v2694
        %3371 = vmatmul.mubr.f32.gmra.mrb[0].mxu0 %v2693
        %v3372 = vpop.f32.mrb[0].mxu0
        %v3373 = vadd.f32 %v3116, %v3372
        %v3374 = vpop.f32.mrb[0].mxu0
        %v3375 = vadd.f32 %v3118, %v3374
        %3376 = vmatprep.mubr.f32.mxu0 %v2698
        %3377 = vmatmul.mubr.f32.gmra.mrb[0].mxu0 %v2697
        %v3378 = vpop.f32.mrb[0].mxu0
        %v3379 = vadd.f32 %v3122, %v3378
        %v3380 = vpop.f32.mrb[0].mxu0
        %v3381 = vadd.f32 %v3124, %v3380
        %3382 = vmatprep.mubr.f32.mxu0 %v2702
        %3383 = vmatmul.mubr.f32.gmra.mrb[0].mxu0 %v2701
        %v3384 = vpop.f32.mrb[0].mxu0
        %v3385 = vadd.f32 %v3128, %v3384
        %v3386 = vpop.f32.mrb[0].mxu0
        %v3387 = vadd.f32 %v3130, %v3386
        %3388 = vmatprep.mubr.f32.mxu0 %v2706
        %3389 = vmatmul.mubr.f32.gmra.mrb[0].mxu0 %v2705
        %v3390 = vpop.f32.mrb[0].mxu0
        %v3391 = vadd.f32 %v3134, %v3390
        %v3392 = vpop.f32.mrb[0].mxu0
        %v3393 = vadd.f32 %v3136, %v3392
        %3394 = vmatprep.mubr.f32.mxu0 %v2710
        %3395 = vmatmul.mubr.f32.gmra.mrb[0].mxu0 %v2709
        %v3396 = vpop.f32.mrb[0].mxu0
        %v3397 = vadd.f32 %v3140, %v3396
        %v3398 = vpop.f32.mrb[0].mxu0
        %v3399 = vadd.f32 %v3142, %v3398
        %3400 = vmatprep.mubr.f32.mxu0 %v2714
        %3401 = vmatmul.mubr.f32.gmra.mrb[0].mxu0 %v2713
        %v3402 = vpop.f32.mrb[0].mxu0
        %v3403 = vadd.f32 %v3146, %v3402
        %v3404 = vpop.f32.mrb[0].mxu0
        %v3405 = vadd.f32 %v3148, %v3404
        %3406 = vmatprep.mubr.f32.mxu0 %v2718
        %3407 = vmatmul.mubr.f32.gmra.mrb[0].mxu0 %v2717
        %v3408 = vpop.f32.mrb[0].mxu0
        %v3409 = vadd.f32 %v3152, %v3408
        %v3410 = vpop.f32.mrb[0].mxu0
        %v3411 = vadd.f32 %v3154, %v3410
        %3412 = vmatprep.mubr.f32.mxu0 %v2722
        %3413 = vmatmul.mubr.f32.gmra.mrb[0].mxu0 %v2721
        %v3414 = vpop.f32.mrb[0].mxu0
        %v3415 = vadd.f32 %v3158, %v3414
        %v3416 = vpop.f32.mrb[0].mxu0
        %v3417 = vadd.f32 %v3160, %v3416
        %3418 = vmatprep.mubr.f32.mxu0 %v2726
        %3419 = vmatmul.mubr.f32.gmra.mrb[0].mxu0 %v2725
        %v3420 = vpop.f32.mrb[0].mxu0
        %v3421 = vadd.f32 %v3164, %v3420
        %v3422 = vpop.f32.mrb[0].mxu0
        %v3423 = vadd.f32 %v3166, %v3422
        %3424 = vmatprep.mubr.f32.mxu0 %v2730
        %3425 = vmatmul.mubr.f32.gmra.mrb[0].mxu0 %v2729
        %v3426 = vpop.f32.mrb[0].mxu0
        %v3427 = vadd.f32 %v3170, %v3426
        %v3428 = vpop.f32.mrb[0].mxu0
        %v3429 = vadd.f32 %v3172, %v3428
        %3430 = vmatprep.mubr.f32.mxu0 %v2734
        %3431 = vmatmul.mubr.f32.gmra.mrb[0].mxu0 %v2733
        %v3432 = vpop.f32.mrb[0].mxu0
        %v3433 = vadd.f32 %v3176, %v3432
        %v3434 = vpop.f32.mrb[0].mxu0
        %v3435 = vadd.f32 %v3178, %v3434
        %3436 = vmatprep.mubr.f32.mxu0 %v2738
        %3437 = vmatmul.mubr.f32.gmra.mrb[0].mxu0 %v2737
        %v3438 = vpop.f32.mrb[0].mxu0
        %v3439 = vadd.f32 %v3182, %v3438
        %v3440 = vpop.f32.mrb[0].mxu0
        %v3441 = vadd.f32 %v3184, %v3440
        %3442 = vmatprep.mubr.f32.mxu0 %v2742
        %3443 = vmatmul.mubr.f32.gmra.mrb[0].mxu0 %v2741
        %v3444 = vpop.f32.mrb[0].mxu0
        %v3445 = vadd.f32 %v3188, %v3444
        %v3446 = vpop.f32.mrb[0].mxu0
        %v3447 = vadd.f32 %v3190, %v3446
        %3448 = vdwg.mxu0
        %v3449 = vadd.f32 %v2743, %v3259
        %v3450 = vadd.f32 %v2744, %v3261
        %v3451 = vadd.f32 %v2745, %v3265
        %v3452 = vadd.f32 %v2746, %v3267
        %v3453 = vadd.f32 %v2747, %v3271
        %v3454 = vadd.f32 %v2748, %v3273
        %v3455 = vadd.f32 %v2749, %v3277
        %v3456 = vadd.f32 %v2750, %v3279
        %v3457 = vadd.f32 %v2751, %v3283
        %v3458 = vadd.f32 %v2752, %v3285
        %v3459 = vadd.f32 %v2753, %v3289
        %v3460 = vadd.f32 %v2754, %v3291
        %v3461 = vadd.f32 %v2755, %v3295
        %v3462 = vadd.f32 %v2756, %v3297
        %v3463 = vadd.f32 %v2757, %v3301
        %v3464 = vadd.f32 %v2758, %v3303
        %v3465 = vadd.f32 %v2759, %v3307
        %v3466 = vadd.f32 %v2760, %v3309
        %v3467 = vadd.f32 %v2761, %v3313
        %v3468 = vadd.f32 %v2762, %v3315
        %v3469 = vadd.f32 %v2763, %v3319
        %v3470 = vadd.f32 %v2764, %v3321
        %v3471 = vadd.f32 %v2765, %v3325
        %v3472 = vadd.f32 %v2766, %v3327
        %v3473 = vadd.f32 %v2767, %v3331
        %v3474 = vadd.f32 %v2768, %v3333
        %v3475 = vadd.f32 %v2769, %v3337
        %v3476 = vadd.f32 %v2770, %v3339
        %v3477 = vadd.f32 %v2771, %v3343
        %v3478 = vadd.f32 %v2772, %v3345
        %v3479 = vadd.f32 %v2773, %v3349
        %v3480 = vadd.f32 %v2774, %v3351
        %v3481 = vadd.f32 %v2775, %v3355
        %v3482 = vadd.f32 %v2776, %v3357
        %v3483 = vadd.f32 %v2777, %v3361
        %v3484 = vadd.f32 %v2778, %v3363
        %v3485 = vadd.f32 %v2779, %v3367
        %v3486 = vadd.f32 %v2780, %v3369
        %v3487 = vadd.f32 %v2781, %v3373
        %v3488 = vadd.f32 %v2782, %v3375
        %v3489 = vadd.f32 %v2783, %v3379
        %v3490 = vadd.f32 %v2784, %v3381
        %v3491 = vadd.f32 %v2785, %v3385
        %v3492 = vadd.f32 %v2786, %v3387
        %v3493 = vadd.f32 %v2787, %v3391
        %v3494 = vadd.f32 %v2788, %v3393
        %v3495 = vadd.f32 %v2789, %v3397
        %v3496 = vadd.f32 %v2790, %v3399
        %v3497 = vadd.f32 %v2791, %v3403
        %v3498 = vadd.f32 %v2792, %v3405
        %v3499 = vadd.f32 %v2793, %v3409
        %v3500 = vadd.f32 %v2794, %v3411
        %v3501 = vadd.f32 %v2795, %v3415
        %v3502 = vadd.f32 %v2796, %v3417
        %v3503 = vadd.f32 %v2797, %v3421
        %v3504 = vadd.f32 %v2798, %v3423
        %v3505 = vadd.f32 %v2799, %v3427
        %v3506 = vadd.f32 %v2800, %v3429
        %v3507 = vadd.f32 %v2801, %v3433
        %v3508 = vadd.f32 %v2802, %v3435
        %v3509 = vadd.f32 %v2803, %v3439
        %v3510 = vadd.f32 %v2804, %v3441
        %v3511 = vadd.f32 %v2805, %v3445
        %v3512 = vadd.f32 %v2806, %v3447
        %3513 = vst [vmem:[#allocation2] sm:$0xff] %v3449
        %3514 = vst [vmem:[#allocation2 + $0x8] sm:$0xff] %v3450
        %3515 = vst [vmem:[#allocation2 + $0x10] sm:$0xff] %v3451
        %3516 = vst [vmem:[#allocation2 + $0x18] sm:$0xff] %v3452
        %3517 = vst [vmem:[#allocation2 + $0x20] sm:$0xff] %v3453
        %3518 = vst [vmem:[#allocation2 + $0x28] sm:$0xff] %v3454
        %3519 = vst [vmem:[#allocation2 + $0x30] sm:$0xff] %v3455
        %3520 = vst [vmem:[#allocation2 + $0x38] sm:$0xff] %v3456
        %3521 = vst [vmem:[#allocation2 + $0x40] sm:$0xff] %v3457
        %3522 = vst [vmem:[#allocation2 + $0x48] sm:$0xff] %v3458
        %3523 = vst [vmem:[#allocation2 + $0x50] sm:$0xff] %v3459
        %3524 = vst [vmem:[#allocation2 + $0x58] sm:$0xff] %v3460
        %3525 = vst [vmem:[#allocation2 + $0x60] sm:$0xff] %v3461
        %3526 = vst [vmem:[#allocation2 + $0x68] sm:$0xff] %v3462
        %3527 = vst [vmem:[#allocation2 + $0x70] sm:$0xff] %v3463
        %3528 = vst [vmem:[#allocation2 + $0x78] sm:$0xff] %v3464
        %3529 = vst [vmem:[#allocation2 + $0x80] sm:$0xff] %v3465
        %3530 = vst [vmem:[#allocation2 + $0x88] sm:$0xff] %v3466
        %3531 = vst [vmem:[#allocation2 + $0x90] sm:$0xff] %v3467
        %3532 = vst [vmem:[#allocation2 + $0x98] sm:$0xff] %v3468
        %3533 = vst [vmem:[#allocation2 + $0xa0] sm:$0xff] %v3469
        %3534 = vst [vmem:[#allocation2 + $0xa8] sm:$0xff] %v3470
        %3535 = vst [vmem:[#allocation2 + $0xb0] sm:$0xff] %v3471
        %3536 = vst [vmem:[#allocation2 + $0xb8] sm:$0xff] %v3472
        %3537 = vst [vmem:[#allocation2 + $0xc0] sm:$0xff] %v3473
        %3538 = vst [vmem:[#allocation2 + $0xc8] sm:$0xff] %v3474
        %3539 = vst [vmem:[#allocation2 + $0xd0] sm:$0xff] %v3475
        %3540 = vst [vmem:[#allocation2 + $0xd8] sm:$0xff] %v3476
        %3541 = vst [vmem:[#allocation2 + $0xe0] sm:$0xff] %v3477
        %3542 = vst [vmem:[#allocation2 + $0xe8] sm:$0xff] %v3478
        %3543 = vst [vmem:[#allocation2 + $0xf0] sm:$0xff] %v3479
        %3544 = vst [vmem:[#allocation2 + $0xf8] sm:$0xff] %v3480
        %3545 = vst [vmem:[#allocation2 + $0x100] sm:$0xff] %v3481
        %3546 = vst [vmem:[#allocation2 + $0x108] sm:$0xff] %v3482
        %3547 = vst [vmem:[#allocation2 + $0x110] sm:$0xff] %v3483
        %3548 = vst [vmem:[#allocation2 + $0x118] sm:$0xff] %v3484
        %3549 = vst [vmem:[#allocation2 + $0x120] sm:$0xff] %v3485
        %3550 = vst [vmem:[#allocation2 + $0x128] sm:$0xff] %v3486
        %3551 = vst [vmem:[#allocation2 + $0x130] sm:$0xff] %v3487
        %3552 = vst [vmem:[#allocation2 + $0x138] sm:$0xff] %v3488
        %3553 = vst [vmem:[#allocation2 + $0x140] sm:$0xff] %v3489
        %3554 = vst [vmem:[#allocation2 + $0x148] sm:$0xff] %v3490
        %3555 = vst [vmem:[#allocation2 + $0x150] sm:$0xff] %v3491
        %3556 = vst [vmem:[#allocation2 + $0x158] sm:$0xff] %v3492
        %3557 = vst [vmem:[#allocation2 + $0x160] sm:$0xff] %v3493
        %3558 = vst [vmem:[#allocation2 + $0x168] sm:$0xff] %v3494
        %3559 = vst [vmem:[#allocation2 + $0x170] sm:$0xff] %v3495
        %3560 = vst [vmem:[#allocation2 + $0x178] sm:$0xff] %v3496
        %3561 = vst [vmem:[#allocation2 + $0x180] sm:$0xff] %v3497
        %3562 = vst [vmem:[#allocation2 + $0x188] sm:$0xff] %v3498
        %3563 = vst [vmem:[#allocation2 + $0x190] sm:$0xff] %v3499
        %3564 = vst [vmem:[#allocation2 + $0x198] sm:$0xff] %v3500
        %3565 = vst [vmem:[#allocation2 + $0x1a0] sm:$0xff] %v3501
        %3566 = vst [vmem:[#allocation2 + $0x1a8] sm:$0xff] %v3502
        %3567 = vst [vmem:[#allocation2 + $0x1b0] sm:$0xff] %v3503
        %3568 = vst [vmem:[#allocation2 + $0x1b8] sm:$0xff] %v3504
        %3569 = vst [vmem:[#allocation2 + $0x1c0] sm:$0xff] %v3505
        %3570 = vst [vmem:[#allocation2 + $0x1c8] sm:$0xff] %v3506
        %3571 = vst [vmem:[#allocation2 + $0x1d0] sm:$0xff] %v3507
        %3572 = vst [vmem:[#allocation2 + $0x1d8] sm:$0xff] %v3508
        %3573 = vst [vmem:[#allocation2 + $0x1e0] sm:$0xff] %v3509
        %3574 = vst [vmem:[#allocation2 + $0x1e8] sm:$0xff] %v3510
        %3575 = vst [vmem:[#allocation2 + $0x1f0] sm:$0xff] %v3511
        %3576 = vst [vmem:[#allocation2 + $0x1f8] sm:$0xff] %v3512
        // Predicated region
        $region57: #{qwen2_5_vl_mlp.1} parent=35 // pred_check
          %p3577 = pneg %p303
        $region58: #{qwen2_5_vl_mlp.1} parent=35 // pred_check_branch
          %3579 = sbr.rel (%p3577) target = $region60
        $region59: #{qwen2_5_vl_mlp.1} parent=35 // pred_region
          %v3580 = vld [vmem:[#allocation2] sm:$0xff]
          %v3581 = vld [vmem:[#allocation2 + $0x8] sm:$0xff]
          %v3582 = vld [vmem:[#allocation2 + $0x10] sm:$0xff]
          %v3583 = vld [vmem:[#allocation2 + $0x18] sm:$0xff]
          %v3584 = vld [vmem:[#allocation2 + $0x20] sm:$0xff]
          %v3585 = vld [vmem:[#allocation2 + $0x28] sm:$0xff]
          %v3586 = vld [vmem:[#allocation2 + $0x30] sm:$0xff]
          %v3587 = vld [vmem:[#allocation2 + $0x38] sm:$0xff]
          %v3588 = vld [vmem:[#allocation2 + $0x40] sm:$0xff]
          %v3589 = vld [vmem:[#allocation2 + $0x48] sm:$0xff]
          %v3590 = vld [vmem:[#allocation2 + $0x50] sm:$0xff]
          %v3591 = vld [vmem:[#allocation2 + $0x58] sm:$0xff]
          %v3592 = vld [vmem:[#allocation2 + $0x60] sm:$0xff]
          %v3593 = vld [vmem:[#allocation2 + $0x68] sm:$0xff]
          %v3594 = vld [vmem:[#allocation2 + $0x70] sm:$0xff]
          %v3595 = vld [vmem:[#allocation2 + $0x78] sm:$0xff]
          %v3596 = vld [vmem:[#allocation2 + $0x80] sm:$0xff]
          %v3597 = vld [vmem:[#allocation2 + $0x88] sm:$0xff]
          %v3598 = vld [vmem:[#allocation2 + $0x90] sm:$0xff]
          %v3599 = vld [vmem:[#allocation2 + $0x98] sm:$0xff]
          %v3600 = vld [vmem:[#allocation2 + $0xa0] sm:$0xff]
          %v3601 = vld [vmem:[#allocation2 + $0xa8] sm:$0xff]
          %v3602 = vld [vmem:[#allocation2 + $0xb0] sm:$0xff]
          %v3603 = vld [vmem:[#allocation2 + $0xb8] sm:$0xff]
          %v3604 = vld [vmem:[#allocation2 + $0xc0] sm:$0xff]
          %v3605 = vld [vmem:[#allocation2 + $0xc8] sm:$0xff]
          %v3606 = vld [vmem:[#allocation2 + $0xd0] sm:$0xff]
          %v3607 = vld [vmem:[#allocation2 + $0xd8] sm:$0xff]
          %v3608 = vld [vmem:[#allocation2 + $0xe0] sm:$0xff]
          %v3609 = vld [vmem:[#allocation2 + $0xe8] sm:$0xff]
          %v3610 = vld [vmem:[#allocation2 + $0xf0] sm:$0xff]
          %v3611 = vld [vmem:[#allocation2 + $0xf8] sm:$0xff]
          %v3612 = vld [vmem:[#allocation2 + $0x100] sm:$0xff]
          %v3613 = vld [vmem:[#allocation2 + $0x108] sm:$0xff]
          %v3614 = vld [vmem:[#allocation2 + $0x110] sm:$0xff]
          %v3615 = vld [vmem:[#allocation2 + $0x118] sm:$0xff]
          %v3616 = vld [vmem:[#allocation2 + $0x120] sm:$0xff]
          %v3617 = vld [vmem:[#allocation2 + $0x128] sm:$0xff]
          %v3618 = vld [vmem:[#allocation2 + $0x130] sm:$0xff]
          %v3619 = vld [vmem:[#allocation2 + $0x138] sm:$0xff]
          %v3620 = vld [vmem:[#allocation2 + $0x140] sm:$0xff]
          %v3621 = vld [vmem:[#allocation2 + $0x148] sm:$0xff]
          %v3622 = vld [vmem:[#allocation2 + $0x150] sm:$0xff]
          %v3623 = vld [vmem:[#allocation2 + $0x158] sm:$0xff]
          %v3624 = vld [vmem:[#allocation2 + $0x160] sm:$0xff]
          %v3625 = vld [vmem:[#allocation2 + $0x168] sm:$0xff]
          %v3626 = vld [vmem:[#allocation2 + $0x170] sm:$0xff]
          %v3627 = vld [vmem:[#allocation2 + $0x178] sm:$0xff]
          %v3628 = vld [vmem:[#allocation2 + $0x180] sm:$0xff]
          %v3629 = vld [vmem:[#allocation2 + $0x188] sm:$0xff]
          %v3630 = vld [vmem:[#allocation2 + $0x190] sm:$0xff]
          %v3631 = vld [vmem:[#allocation2 + $0x198] sm:$0xff]
          %v3632 = vld [vmem:[#allocation2 + $0x1a0] sm:$0xff]
          %v3633 = vld [vmem:[#allocation2 + $0x1a8] sm:$0xff]
          %v3634 = vld [vmem:[#allocation2 + $0x1b0] sm:$0xff]
          %v3635 = vld [vmem:[#allocation2 + $0x1b8] sm:$0xff]
          %v3636 = vld [vmem:[#allocation2 + $0x1c0] sm:$0xff]
          %v3637 = vld [vmem:[#allocation2 + $0x1c8] sm:$0xff]
          %v3638 = vld [vmem:[#allocation2 + $0x1d0] sm:$0xff]
          %v3639 = vld [vmem:[#allocation2 + $0x1d8] sm:$0xff]
          %v3640 = vld [vmem:[#allocation2 + $0x1e0] sm:$0xff]
          %v3641 = vld [vmem:[#allocation2 + $0x1e8] sm:$0xff]
          %v3642 = vld [vmem:[#allocation2 + $0x1f0] sm:$0xff]
          %v3643 = vld [vmem:[#allocation2 + $0x1f8] sm:$0xff]
          %3644 = vst [vmem:[%s297] sm:$0xff] %v3580
          %3645 = vst [vmem:[%s297 + $0x8] sm:$0xff] %v3581
          %3646 = vst [vmem:[%s297 + $0x10] sm:$0xff] %v3582
          %3647 = vst [vmem:[%s297 + $0x18] sm:$0xff] %v3583
          %3648 = vst [vmem:[%s297 + $0x20] sm:$0xff] %v3584
          %3649 = vst [vmem:[%s297 + $0x28] sm:$0xff] %v3585
          %3650 = vst [vmem:[%s297 + $0x30] sm:$0xff] %v3586
          %3651 = vst [vmem:[%s297 + $0x38] sm:$0xff] %v3587
          %3652 = vst [vmem:[%s297 + $0x40] sm:$0xff] %v3588
          %3653 = vst [vmem:[%s297 + $0x48] sm:$0xff] %v3589
          %3654 = vst [vmem:[%s297 + $0x50] sm:$0xff] %v3590
          %3655 = vst [vmem:[%s297 + $0x58] sm:$0xff] %v3591
          %3656 = vst [vmem:[%s297 + $0x60] sm:$0xff] %v3592
          %3657 = vst [vmem:[%s297 + $0x68] sm:$0xff] %v3593
          %3658 = vst [vmem:[%s297 + $0x70] sm:$0xff] %v3594
          %3659 = vst [vmem:[%s297 + $0x78] sm:$0xff] %v3595
          %3660 = vst [vmem:[%s297 + $0x80] sm:$0xff] %v3596
          %3661 = vst [vmem:[%s297 + $0x88] sm:$0xff] %v3597
          %3662 = vst [vmem:[%s297 + $0x90] sm:$0xff] %v3598
          %3663 = vst [vmem:[%s297 + $0x98] sm:$0xff] %v3599
          %3664 = vst [vmem:[%s297 + $0xa0] sm:$0xff] %v3600
          %3665 = vst [vmem:[%s297 + $0xa8] sm:$0xff] %v3601
          %3666 = vst [vmem:[%s297 + $0xb0] sm:$0xff] %v3602
          %3667 = vst [vmem:[%s297 + $0xb8] sm:$0xff] %v3603
          %3668 = vst [vmem:[%s297 + $0xc0] sm:$0xff] %v3604
          %3669 = vst [vmem:[%s297 + $0xc8] sm:$0xff] %v3605
          %3670 = vst [vmem:[%s297 + $0xd0] sm:$0xff] %v3606
          %3671 = vst [vmem:[%s297 + $0xd8] sm:$0xff] %v3607
          %3672 = vst [vmem:[%s297 + $0xe0] sm:$0xff] %v3608
          %3673 = vst [vmem:[%s297 + $0xe8] sm:$0xff] %v3609
          %3674 = vst [vmem:[%s297 + $0xf0] sm:$0xff] %v3610
          %3675 = vst [vmem:[%s297 + $0xf8] sm:$0xff] %v3611
          %3676 = vst [vmem:[%s297 + $0x100] sm:$0xff] %v3612
          %3677 = vst [vmem:[%s297 + $0x108] sm:$0xff] %v3613
          %3678 = vst [vmem:[%s297 + $0x110] sm:$0xff] %v3614
          %3679 = vst [vmem:[%s297 + $0x118] sm:$0xff] %v3615
          %3680 = vst [vmem:[%s297 + $0x120] sm:$0xff] %v3616
          %3681 = vst [vmem:[%s297 + $0x128] sm:$0xff] %v3617
          %3682 = vst [vmem:[%s297 + $0x130] sm:$0xff] %v3618
          %3683 = vst [vmem:[%s297 + $0x138] sm:$0xff] %v3619
          %3684 = vst [vmem:[%s297 + $0x140] sm:$0xff] %v3620
          %3685 = vst [vmem:[%s297 + $0x148] sm:$0xff] %v3621
          %3686 = vst [vmem:[%s297 + $0x150] sm:$0xff] %v3622
          %3687 = vst [vmem:[%s297 + $0x158] sm:$0xff] %v3623
          %3688 = vst [vmem:[%s297 + $0x160] sm:$0xff] %v3624
          %3689 = vst [vmem:[%s297 + $0x168] sm:$0xff] %v3625
          %3690 = vst [vmem:[%s297 + $0x170] sm:$0xff] %v3626
          %3691 = vst [vmem:[%s297 + $0x178] sm:$0xff] %v3627
          %3692 = vst [vmem:[%s297 + $0x180] sm:$0xff] %v3628
          %3693 = vst [vmem:[%s297 + $0x188] sm:$0xff] %v3629
          %3694 = vst [vmem:[%s297 + $0x190] sm:$0xff] %v3630
          %3695 = vst [vmem:[%s297 + $0x198] sm:$0xff] %v3631
          %3696 = vst [vmem:[%s297 + $0x1a0] sm:$0xff] %v3632
          %3697 = vst [vmem:[%s297 + $0x1a8] sm:$0xff] %v3633
          %3698 = vst [vmem:[%s297 + $0x1b0] sm:$0xff] %v3634
          %3699 = vst [vmem:[%s297 + $0x1b8] sm:$0xff] %v3635
          %3700 = vst [vmem:[%s297 + $0x1c0] sm:$0xff] %v3636
          %3701 = vst [vmem:[%s297 + $0x1c8] sm:$0xff] %v3637
          %3702 = vst [vmem:[%s297 + $0x1d0] sm:$0xff] %v3638
          %3703 = vst [vmem:[%s297 + $0x1d8] sm:$0xff] %v3639
          %3704 = vst [vmem:[%s297 + $0x1e0] sm:$0xff] %v3640
          %3705 = vst [vmem:[%s297 + $0x1e8] sm:$0xff] %v3641
          %3706 = vst [vmem:[%s297 + $0x1f0] sm:$0xff] %v3642
          %3707 = vst [vmem:[%s297 + $0x1f8] sm:$0xff] %v3643
        $region60: #{qwen2_5_vl_mlp.1} parent=35 // pred_fallthru
          _
        %s3708 = sand.u32 %s147, 1
        %s3709 = scalar_lea.sflag [#allocation5], %s3708
        %s3710 = sand.u32 %s147, 1
        %s3711 = smul.addr %s3710, 512
        %s3712 = scalar_lea.vmem [#allocation11], %s3711
        // Predicated region
        $region61: #{qwen2_5_vl_mlp.1} parent=35 // pred_check
          %p3713 = pneg %p157
        $region62: #{qwen2_5_vl_mlp.1} parent=35 // pred_check_branch
          %3715 = sbr.rel (%p3713) target = $region64
        $region63: #{qwen2_5_vl_mlp.1} parent=35 // pred_region
          %s3716 = smul.u32 32, %s27
          %s3718 = ssub.s32 8192, 8192
          %3719 = vsyncadd %s3709, %s3718
          %s3720 = smul.addr %s3716, 2
          %s3721 = smul.addr %s3720, 128
          %s3722 = scalar_lea.hbm %s4, %s3721
          %s3723 = sshll.u32 %s3712, 4
          %s3724 = int_to_ptr.vmem [resolvable:$true] %s3723
          %3729 = dma.vmem_to_hbm [thread:$0]  %s3724, 8192, %s3722, %s3709, 256, 256, 16
        $region64: #{qwen2_5_vl_mlp.1} parent=35 // pred_fallthru
          _
      $region36: #{qwen2_5_vl_mlp.1} parent=5 // pred_fallthru
        _
      %p3730 = scmp.le.s32.totalorder 2, %s18
      // Predicated region
      $region65: #{qwen2_5_vl_mlp.1} parent=5 // pred_check
        %p3731 = pneg %p3730
      $region66: #{qwen2_5_vl_mlp.1} parent=5 // pred_check_branch
        %3733 = sbr.rel (%p3731) target = $region68
      $region67: #{qwen2_5_vl_mlp.1} parent=5 // pred_region
        %s3734 = ssub.s32 %s18, 2
        // Predicated region
        $region69: #{qwen2_5_vl_mlp.1} parent=67 // pred_check
          %p3735 = pneg %p163
        $region70: #{qwen2_5_vl_mlp.1} parent=67 // pred_check_branch
          %3737 = sbr.rel (%p3735) target = $region72
        $region71: #{qwen2_5_vl_mlp.1} parent=67 // pred_region
          %s3738 = sand.u32 %s148, 1
          %s3739 = scalar_lea.sflag [#allocation5], %s3738
          %s3740 = sand.u32 %s148, 1
          %s3741 = smul.addr %s3740, 512
          %s3742 = scalar_lea.vmem [#allocation11], %s3741
          %3743 = dma.done %s3739, 8192
        $region72: #{qwen2_5_vl_mlp.1} parent=67 // pred_fallthru
          _
      $region68: #{qwen2_5_vl_mlp.1} parent=5 // pred_fallthru
        _
    $region6: #{qwen2_5_vl_mlp.1} parent=1 // loop_footer
      %s22 = sadd.s32 1, %s18
    $region7: #{qwen2_5_vl_mlp.1} parent=1 // loop_footer_branch
      %17 = sbr.rel target = $region3
    $region8: #{qwen2_5_vl_mlp.1} parent=1 // loop_exit
      _
    %3744 = vsyncpa [#allocation4], 1
    %s3745 = scalar_lea.sflag [#allocation4], 1
    %3746 = vsyncpa %s3745, 1
    %3747 = vsyncpa [#allocation7], 1
    %3748 = vsyncpa [#allocation10], 1
    %3749 = vsyncpa [#allocation5], 1
    %s3750 = scalar_lea.sflag [#allocation5], 1
    %3751 = vsyncpa %s3750, 1

</llo_original>
